<compile_context>
chip_gen: v7x
topology: tpu7x:2x2x1
jax: 0.10.0
libtpu: 0.0.40
codegen_flags: <defaults>
</compile_context>

<pallas_src>
import math
from functools import partial

import numpy as np
import jax
import jax.numpy as jnp
from jax.experimental import pallas as pl
from jax.experimental.pallas import tpu as pltpu


def _block_kernel(x_ref, dww_ref, mask_ref, pvec_ref, w1_ref, w2_ref,
                  o_ref, xcm_ref, *, W, eps):
    C = x_ref.shape[1]
    N = x_ref.shape[2]                       # N = H * W (lane axis)

    # -------- packed per-channel parameters (single (4C, 8) operand) --------
    pv = pvec_ref[...]                       # (C4, 8)
    dwb = pv[:C, 0:1]                        # (C, 1)
    lnw = pv[:C, 1:2]
    lnb = pv[:C, 2:3]
    b1 = pv[:, 3:4]                          # (4C, 1)
    gg = pv[:, 4:5]
    gb = pv[:, 5:6]
    b2 = pv[:C, 6:7]

    masks = mask_ref[...]                    # (16, N): rows 0..6 col-masks, 8..14 row-masks

    # ---------------- depthwise 7x7 conv, padding=3 (separable rolls) -------
    # Stage 1: column-shifted + column-masked copies of x -> VMEM scratch.
    x = x_ref[0]                             # (C, N); live range ends after this loop
    for kw in range(7):
        dw = kw - 3
        xs = pltpu.roll(x, (-dw) % N, 1) if dw != 0 else x
        if dw != 0:
            xs = xs * masks[kw:kw + 1, :]    # column zero-padding mask
        xcm_ref[kw] = xs

    # Stage 2: per row-offset, 7-tap weighted sum from scratch, one row roll
    # + one row mask.
    wall = dww_ref[...]                      # (C, 49), tap index = kh*7 + kw
    acc = jnp.zeros((C, N), jnp.float32)
    for kh in range(7):
        dh = kh - 3
        tap0 = kh * 7
        part = xcm_ref[0] * wall[:, tap0:tap0 + 1]
        for kw in range(1, 7):
            tap = tap0 + kw
            part = part + xcm_ref[kw] * wall[:, tap:tap + 1]
        if dh != 0:
            part = pltpu.roll(part, (-(dh * W)) % N, 1)
            part = part * masks[8 + kh:8 + kh + 1, :]   # row zero-padding mask
        acc = acc + part
    xdw = acc + dwb                          # (C, N)

    # ----------------- LayerNorm over channels (eps = 1e-6) -----------------
    mu = jnp.mean(xdw, axis=0, keepdims=True)                  # (1, N)
    var = jnp.mean((xdw - mu) ** 2, axis=0, keepdims=True)
    xn = (xdw - mu) * jax.lax.rsqrt(var + eps)
    xn = xn * lnw + lnb

    # ----------------- pwconv1: Linear(C -> 4C) on the MXU ------------------
    h = jnp.dot(w1_ref[...], xn, preferred_element_type=jnp.float32) + b1

    # tanh-approx GELU (EUP); ~5e-4 max drift vs torch.nn.GELU's exact erf.
    c0 = 0.7978845608028654                  # sqrt(2/pi)
    h = 0.5 * h * (1.0 + jnp.tanh(c0 * (h + 0.044715 * (h * h * h))))

    # ----------------- GRN: global L2 over all pixels per channel -----------
    gx = jnp.sqrt(jnp.sum(h * h, axis=1, keepdims=True))       # (4C, 1)
    gmean = jnp.mean(gx, axis=0, keepdims=True)                # (1, 1)
    nx = gx / (gmean + 1e-6)
    h = gg * (h * nx) + gb + h

    # ----------------- pwconv2: Linear(4C -> C) + residual ------------------
    z = jnp.dot(w2_ref[...], h, preferred_element_type=jnp.float32) + b2
    o_ref[0] = x_ref[0] + z                  # residual re-loaded from VMEM ref


def block_forward(x_nchw, p):
    """ConvNeXt-V2 Block forward. x: (B, C, H, W) float32, params in PyTorch layouts."""
    B, C, H, W = x_nchw.shape
    N = H * W
    C4 = 4 * C

    x2 = x_nchw.reshape(B, C, N).astype(jnp.float32)            # free reshape (no transpose)
    dw_w = p['dw_w'].reshape(C, 49).astype(jnp.float32)         # (C,1,7,7) -> (C,49)

    # Host-precomputed zero-padding masks: rows 0..6 = column masks for
    # dw=-3..3, rows 8..14 = row masks for dh=-3..3 (rows 7, 15 unused).
    q = np.arange(N)
    row, col = q // W, q % W
    masks_np = np.zeros((16, N), np.float32)
    for k in range(7):
        d = k - 3
        masks_np[k] = ((col + d >= 0) & (col + d <= W - 1)).astype(np.float32)
        masks_np[8 + k] = ((row + d >= 0) & (row + d <= H - 1)).astype(np.float32)
    masks = jnp.asarray(masks_np)

    # Pack the 7 per-channel vectors into a single (4C, 8) operand.
    def padc4(v):
        v = jnp.asarray(v, jnp.float32).reshape(-1)
        return jnp.pad(v, (0, C4 - v.shape[0]))
    pvec = jnp.stack([padc4(p['dw_b']), padc4(p['ln_w']), padc4(p['ln_b']),
                      padc4(p['b1']), padc4(p['grn_g']), padc4(p['grn_b']),
                      padc4(p['b2']), jnp.zeros((C4,), jnp.float32)], axis=1)

    out2 = pl.pallas_call(
        partial(_block_kernel, W=W, eps=1e-6),
        out_shape=jax.ShapeDtypeStruct((B, C, N), jnp.float32),
        grid_spec=pltpu.PrefetchScalarGridSpec(
            num_scalar_prefetch=0,
            grid=(B,),
            in_specs=[
                pl.BlockSpec((1, C, N), lambda b: (b, 0, 0)),    # x (dwconv + residual)
                pl.BlockSpec((C, 49), lambda b: (0, 0)),         # depthwise weights
                pl.BlockSpec((16, N), lambda b: (0, 0)),         # padding masks (host)
                pl.BlockSpec((C4, 8), lambda b: (0, 0)),         # packed per-channel params
                pl.BlockSpec((C4, C), lambda b: (0, 0)),         # pwconv1 weight
                pl.BlockSpec((C, C4), lambda b: (0, 0)),         # pwconv2 weight
            ],
            out_specs=pl.BlockSpec((1, C, N), lambda b: (b, 0, 0)),
            scratch_shapes=[pltpu.VMEM((7, C, N), jnp.float32)]),  # column-masked copies
        compiler_params=pltpu.CompilerParams(
            dimension_semantics=("parallel",)),                  # v7x: shard batch over 2 TCs
    )(x2, dw_w, masks, pvec,
      p['w1'].astype(jnp.float32), p['w2'].astype(jnp.float32))

    return out2.reshape(B, C, H, W)


# ------------------------- pure-JAX reference (for checking) -----------------
def block_reference(x_nchw, p):
    hp = jax.lax.Precision.HIGHEST
    B, C, H, W = x_nchw.shape
    y = jax.lax.conv_general_dilated(
        x_nchw.astype(jnp.float32), p['dw_w'].astype(jnp.float32),
        window_strides=(1, 1), padding=((3, 3), (3, 3)),
        dimension_numbers=('NCHW', 'OIHW', 'NCHW'),
        feature_group_count=C, precision=hp)
    y = y + p['dw_b'][None, :, None, None]
    y = jnp.transpose(y, (0, 2, 3, 1))                           # NHWC
    mu = jnp.mean(y, -1, keepdims=True)
    var = jnp.mean((y - mu) ** 2, -1, keepdims=True)
    y = (y - mu) / jnp.sqrt(var + 1e-6) * p['ln_w'] + p['ln_b']
    h = jnp.einsum('bhwc,dc->bhwd', y, p['w1'], precision=hp) + p['b1']
    h = 0.5 * h * (1.0 + jax.lax.erf(h / math.sqrt(2.0)))        # exact-erf torch GELU
    gx = jnp.sqrt(jnp.sum(h * h, axis=(1, 2), keepdims=True))
    nx = gx / (jnp.mean(gx, -1, keepdims=True) + 1e-6)
    h = p['grn_g'] * (h * nx) + p['grn_b'] + h
    z = jnp.einsum('bhwd,cd->bhwc', h, p['w2'], precision=hp) + p['b2']
    return x_nchw + jnp.transpose(z, (0, 3, 1, 2))


if __name__ == "__main__":
    B, C, H, W = 2, 32, 16, 16          # ConvNeXtV2 Block(dim=32); H*W = 256 lanes
    C4 = 4 * C
    key = jax.random.PRNGKey(0)
    ks = jax.random.split(key, 11)
    params = {
        'dw_w': 0.1 * jax.random.normal(ks[0], (C, 1, 7, 7), jnp.float32),
        'dw_b': 0.05 * jax.random.normal(ks[1], (C,), jnp.float32),
        'ln_w': 1.0 + 0.05 * jax.random.normal(ks[2], (C,), jnp.float32),
        'ln_b': 0.05 * jax.random.normal(ks[3], (C,), jnp.float32),
        'w1': (1.0 / math.sqrt(C)) * jax.random.normal(ks[4], (C4, C), jnp.float32),
        'b1': 0.05 * jax.random.normal(ks[5], (C4,), jnp.float32),
        'grn_g': 0.1 * jax.random.normal(ks[6], (C4,), jnp.float32),
        'grn_b': 0.1 * jax.random.normal(ks[7], (C4,), jnp.float32),
        'w2': (1.0 / math.sqrt(C4)) * jax.random.normal(ks[8], (C, C4), jnp.float32),
        'b2': 0.05 * jax.random.normal(ks[9], (C,), jnp.float32),
    }
    x = jax.random.normal(ks[10], (B, C, H, W), jnp.float32)

    fwd = jax.jit(block_forward)
    out = fwd(x, params)
    jax.block_until_ready(out)
    assert out.shape == (B, C, H, W)

    ref = block_reference(x, params)
    err = float(jnp.max(jnp.abs(out - ref)))
    assert err < 2e-3, f"max abs error vs reference: {err}"
    print("KERNEL_OK")
</pallas_src>

<mosaic_0001>
module attributes {stable_mosaic.version = 11 : i64} {
  func.func @_block_kernel(%arg0: i32, %arg1: memref<1x32x256xf32, #tpu.memory_space<vmem>>, %arg2: memref<32x49xf32, #tpu.memory_space<vmem>>, %arg3: memref<16x256xf32, #tpu.memory_space<vmem>>, %arg4: memref<128x8xf32, #tpu.memory_space<vmem>>, %arg5: memref<128x32xf32, #tpu.memory_space<vmem>>, %arg6: memref<32x128xf32, #tpu.memory_space<vmem>>, %arg7: memref<1x32x256xf32, #tpu.memory_space<vmem>>, %arg8: memref<7x32x256xf32, #tpu.memory_space<vmem>>) attributes {dimension_semantics = [#tpu.dimension_semantics<parallel>], iteration_bounds = array<i64: 2>, scalar_prefetch = 0 : i64, scratch_operands = 1 : i64, tpu.core_type = #tpu.core_type<tc>, window_params = [{transform_indices = @transform_0, window_bounds = array<i64: 1, 32, 256>}, {pipeline_mode = #tpu.pipeline_mode<synchronous>, transform_indices = @transform_1, window_bounds = array<i64: 32, 49>}, {pipeline_mode = #tpu.pipeline_mode<synchronous>, transform_indices = @transform_2, window_bounds = array<i64: 16, 256>}, {pipeline_mode = #tpu.pipeline_mode<synchronous>, transform_indices = @transform_3, window_bounds = array<i64: 128, 8>}, {pipeline_mode = #tpu.pipeline_mode<synchronous>, transform_indices = @transform_4, window_bounds = array<i64: 128, 32>}, {pipeline_mode = #tpu.pipeline_mode<synchronous>, transform_indices = @transform_5, window_bounds = array<i64: 32, 128>}, {transform_indices = @transform_6, window_bounds = array<i64: 1, 32, 256>}]} {
    %c0 = arith.constant 0 : index
    %c0_0 = arith.constant 0 : index
    %0 = vector.load %arg4[%c0, %c0_0] : memref<128x8xf32, #tpu.memory_space<vmem>>, vector<128x8xf32>
    %1 = vector.extract_strided_slice %0 {offsets = [0, 0], sizes = [32, 1], strides = [1, 1]} : vector<128x8xf32> to vector<32x1xf32>
    %2 = vector.extract_strided_slice %0 {offsets = [0, 1], sizes = [32, 1], strides = [1, 1]} : vector<128x8xf32> to vector<32x1xf32>
    %3 = vector.extract_strided_slice %0 {offsets = [0, 2], sizes = [32, 1], strides = [1, 1]} : vector<128x8xf32> to vector<32x1xf32>
    %4 = vector.extract_strided_slice %0 {offsets = [0, 3], sizes = [128, 1], strides = [1, 1]} : vector<128x8xf32> to vector<128x1xf32>
    %5 = vector.extract_strided_slice %0 {offsets = [0, 4], sizes = [128, 1], strides = [1, 1]} : vector<128x8xf32> to vector<128x1xf32>
    %6 = vector.extract_strided_slice %0 {offsets = [0, 5], sizes = [128, 1], strides = [1, 1]} : vector<128x8xf32> to vector<128x1xf32>
    %7 = vector.extract_strided_slice %0 {offsets = [0, 6], sizes = [32, 1], strides = [1, 1]} : vector<128x8xf32> to vector<32x1xf32>
    %c0_1 = arith.constant 0 : index
    %c0_2 = arith.constant 0 : index
    %8 = vector.load %arg3[%c0_1, %c0_2] : memref<16x256xf32, #tpu.memory_space<vmem>>, vector<16x256xf32>
    %c0_3 = arith.constant 0 : index
    %c0_4 = arith.constant 0 : index
    %c0_5 = arith.constant 0 : index
    %9 = vector.load %arg1[%c0_3, %c0_4, %c0_5] : memref<1x32x256xf32, #tpu.memory_space<vmem>>, vector<1x32x256xf32>
    %10 = vector.shape_cast %9 : vector<1x32x256xf32> to vector<32x256xf32>
    %c3_i32 = arith.constant 3 : i32
    %11 = tpu.dynamic_rotate %10 by %c3_i32 dim 1 : vector<32x256xf32>, i32 -> vector<32x256xf32>
    %12 = vector.extract_strided_slice %8 {offsets = [0, 0], sizes = [1, 256], strides = [1, 1]} : vector<16x256xf32> to vector<1x256xf32>
    %13 = vector.broadcast %12 : vector<1x256xf32> to vector<32x256xf32>
    %14 = arith.mulf %11, %13 : vector<32x256xf32>
    %c0_6 = arith.constant 0 : index
    %c0_7 = arith.constant 0 : index
    %c0_8 = arith.constant 0 : index
    %15 = vector.load %arg8[%c0_6, %c0_7, %c0_8] : memref<7x32x256xf32, #tpu.memory_space<vmem>>, vector<1x32x256xf32>
    %16 = vector.shape_cast %15 : vector<1x32x256xf32> to vector<32x256xf32>
    %17 = vector.shape_cast %14 : vector<32x256xf32> to vector<1x32x256xf32>
    tpu.vector_store %arg8[%c0_6, %c0_7, %c0_8], %17 {strides = array<i32>} : memref<7x32x256xf32, #tpu.memory_space<vmem>>, vector<1x32x256xf32>,
    %c2_i32 = arith.constant 2 : i32
    %18 = tpu.dynamic_rotate %10 by %c2_i32 dim 1 : vector<32x256xf32>, i32 -> vector<32x256xf32>
    %19 = vector.extract_strided_slice %8 {offsets = [1, 0], sizes = [1, 256], strides = [1, 1]} : vector<16x256xf32> to vector<1x256xf32>
    %20 = vector.broadcast %19 : vector<1x256xf32> to vector<32x256xf32>
    %21 = arith.mulf %18, %20 : vector<32x256xf32>
    %c1 = arith.constant 1 : index
    %c0_9 = arith.constant 0 : index
    %c0_10 = arith.constant 0 : index
    %22 = vector.load %arg8[%c1, %c0_9, %c0_10] : memref<7x32x256xf32, #tpu.memory_space<vmem>>, vector<1x32x256xf32>
    %23 = vector.shape_cast %22 : vector<1x32x256xf32> to vector<32x256xf32>
    %24 = vector.shape_cast %21 : vector<32x256xf32> to vector<1x32x256xf32>
    tpu.vector_store %arg8[%c1, %c0_9, %c0_10], %24 {strides = array<i32>} : memref<7x32x256xf32, #tpu.memory_space<vmem>>, vector<1x32x256xf32>,
    %c1_i32 = arith.constant 1 : i32
    %25 = tpu.dynamic_rotate %10 by %c1_i32 dim 1 : vector<32x256xf32>, i32 -> vector<32x256xf32>
    %26 = vector.extract_strided_slice %8 {offsets = [2, 0], sizes = [1, 256], strides = [1, 1]} : vector<16x256xf32> to vector<1x256xf32>
    %27 = vector.broadcast %26 : vector<1x256xf32> to vector<32x256xf32>
    %28 = arith.mulf %25, %27 : vector<32x256xf32>
    %c2 = arith.constant 2 : index
    %c0_11 = arith.constant 0 : index
    %c0_12 = arith.constant 0 : index
    %29 = vector.load %arg8[%c2, %c0_11, %c0_12] : memref<7x32x256xf32, #tpu.memory_space<vmem>>, vector<1x32x256xf32>
    %30 = vector.shape_cast %29 : vector<1x32x256xf32> to vector<32x256xf32>
    %31 = vector.shape_cast %28 : vector<32x256xf32> to vector<1x32x256xf32>
    tpu.vector_store %arg8[%c2, %c0_11, %c0_12], %31 {strides = array<i32>} : memref<7x32x256xf32, #tpu.memory_space<vmem>>, vector<1x32x256xf32>,
    %c3 = arith.constant 3 : index
    %c0_13 = arith.constant 0 : index
    %c0_14 = arith.constant 0 : index
    %32 = vector.load %arg8[%c3, %c0_13, %c0_14] : memref<7x32x256xf32, #tpu.memory_space<vmem>>, vector<1x32x256xf32>
    %33 = vector.shape_cast %32 : vector<1x32x256xf32> to vector<32x256xf32>
    %34 = vector.shape_cast %10 : vector<32x256xf32> to vector<1x32x256xf32>
    tpu.vector_store %arg8[%c3, %c0_13, %c0_14], %34 {strides = array<i32>} : memref<7x32x256xf32, #tpu.memory_space<vmem>>, vector<1x32x256xf32>,
    %c255_i32 = arith.constant 255 : i32
    %35 = tpu.dynamic_rotate %10 by %c255_i32 dim 1 : vector<32x256xf32>, i32 -> vector<32x256xf32>
    %36 = vector.extract_strided_slice %8 {offsets = [4, 0], sizes = [1, 256], strides = [1, 1]} : vector<16x256xf32> to vector<1x256xf32>
    %37 = vector.broadcast %36 : vector<1x256xf32> to vector<32x256xf32>
    %38 = arith.mulf %35, %37 : vector<32x256xf32>
    %c4 = arith.constant 4 : index
    %c0_15 = arith.constant 0 : index
    %c0_16 = arith.constant 0 : index
    %39 = vector.load %arg8[%c4, %c0_15, %c0_16] : memref<7x32x256xf32, #tpu.memory_space<vmem>>, vector<1x32x256xf32>
    %40 = vector.shape_cast %39 : vector<1x32x256xf32> to vector<32x256xf32>
    %41 = vector.shape_cast %38 : vector<32x256xf32> to vector<1x32x256xf32>
    tpu.vector_store %arg8[%c4, %c0_15, %c0_16], %41 {strides = array<i32>} : memref<7x32x256xf32, #tpu.memory_space<vmem>>, vector<1x32x256xf32>,
    %c254_i32 = arith.constant 254 : i32
    %42 = tpu.dynamic_rotate %10 by %c254_i32 dim 1 : vector<32x256xf32>, i32 -> vector<32x256xf32>
    %43 = vector.extract_strided_slice %8 {offsets = [5, 0], sizes = [1, 256], strides = [1, 1]} : vector<16x256xf32> to vector<1x256xf32>
    %44 = vector.broadcast %43 : vector<1x256xf32> to vector<32x256xf32>
    %45 = arith.mulf %42, %44 : vector<32x256xf32>
    %c5 = arith.constant 5 : index
    %c0_17 = arith.constant 0 : index
    %c0_18 = arith.constant 0 : index
    %46 = vector.load %arg8[%c5, %c0_17, %c0_18] : memref<7x32x256xf32, #tpu.memory_space<vmem>>, vector<1x32x256xf32>
    %47 = vector.shape_cast %46 : vector<1x32x256xf32> to vector<32x256xf32>
    %48 = vector.shape_cast %45 : vector<32x256xf32> to vector<1x32x256xf32>
    tpu.vector_store %arg8[%c5, %c0_17, %c0_18], %48 {strides = array<i32>} : memref<7x32x256xf32, #tpu.memory_space<vmem>>, vector<1x32x256xf32>,
    %c253_i32 = arith.constant 253 : i32
    %49 = tpu.dynamic_rotate %10 by %c253_i32 dim 1 : vector<32x256xf32>, i32 -> vector<32x256xf32>
    %50 = vector.extract_strided_slice %8 {offsets = [6, 0], sizes = [1, 256], strides = [1, 1]} : vector<16x256xf32> to vector<1x256xf32>
    %51 = vector.broadcast %50 : vector<1x256xf32> to vector<32x256xf32>
    %52 = arith.mulf %49, %51 : vector<32x256xf32>
    %c6 = arith.constant 6 : index
    %c0_19 = arith.constant 0 : index
    %c0_20 = arith.constant 0 : index
    %53 = vector.load %arg8[%c6, %c0_19, %c0_20] : memref<7x32x256xf32, #tpu.memory_space<vmem>>, vector<1x32x256xf32>
    %54 = vector.shape_cast %53 : vector<1x32x256xf32> to vector<32x256xf32>
    %55 = vector.shape_cast %52 : vector<32x256xf32> to vector<1x32x256xf32>
    tpu.vector_store %arg8[%c6, %c0_19, %c0_20], %55 {strides = array<i32>} : memref<7x32x256xf32, #tpu.memory_space<vmem>>, vector<1x32x256xf32>,
    %c0_21 = arith.constant 0 : index
    %c0_22 = arith.constant 0 : index
    %56 = vector.load %arg2[%c0_21, %c0_22] : memref<32x49xf32, #tpu.memory_space<vmem>>, vector<32x49xf32>
    %cst = arith.constant 0.000000e+00 : f32
    %57 = vector.broadcast %cst : f32 to vector<32x256xf32>
    %c0_23 = arith.constant 0 : index
    %c0_24 = arith.constant 0 : index
    %c0_25 = arith.constant 0 : index
    %58 = vector.load %arg8[%c0_23, %c0_24, %c0_25] : memref<7x32x256xf32, #tpu.memory_space<vmem>>, vector<1x32x256xf32>
    %59 = vector.shape_cast %58 : vector<1x32x256xf32> to vector<32x256xf32>
    %60 = vector.extract_strided_slice %56 {offsets = [0, 0], sizes = [32, 1], strides = [1, 1]} : vector<32x49xf32> to vector<32x1xf32>
    %61 = vector.broadcast %60 : vector<32x1xf32> to vector<32x256xf32>
    %62 = arith.mulf %59, %61 : vector<32x256xf32>
    %c1_26 = arith.constant 1 : index
    %c0_27 = arith.constant 0 : index
    %c0_28 = arith.constant 0 : index
    %63 = vector.load %arg8[%c1_26, %c0_27, %c0_28] : memref<7x32x256xf32, #tpu.memory_space<vmem>>, vector<1x32x256xf32>
    %64 = vector.shape_cast %63 : vector<1x32x256xf32> to vector<32x256xf32>
    %65 = vector.extract_strided_slice %56 {offsets = [0, 1], sizes = [32, 1], strides = [1, 1]} : vector<32x49xf32> to vector<32x1xf32>
    %66 = vector.broadcast %65 : vector<32x1xf32> to vector<32x256xf32>
    %67 = arith.mulf %64, %66 : vector<32x256xf32>
    %68 = arith.addf %62, %67 : vector<32x256xf32>
    %c2_29 = arith.constant 2 : index
    %c0_30 = arith.constant 0 : index
    %c0_31 = arith.constant 0 : index
    %69 = vector.load %arg8[%c2_29, %c0_30, %c0_31] : memref<7x32x256xf32, #tpu.memory_space<vmem>>, vector<1x32x256xf32>
    %70 = vector.shape_cast %69 : vector<1x32x256xf32> to vector<32x256xf32>
    %71 = vector.extract_strided_slice %56 {offsets = [0, 2], sizes = [32, 1], strides = [1, 1]} : vector<32x49xf32> to vector<32x1xf32>
    %72 = vector.broadcast %71 : vector<32x1xf32> to vector<32x256xf32>
    %73 = arith.mulf %70, %72 : vector<32x256xf32>
    %74 = arith.addf %68, %73 : vector<32x256xf32>
    %c3_32 = arith.constant 3 : index
    %c0_33 = arith.constant 0 : index
    %c0_34 = arith.constant 0 : index
    %75 = vector.load %arg8[%c3_32, %c0_33, %c0_34] : memref<7x32x256xf32, #tpu.memory_space<vmem>>, vector<1x32x256xf32>
    %76 = vector.shape_cast %75 : vector<1x32x256xf32> to vector<32x256xf32>
    %77 = vector.extract_strided_slice %56 {offsets = [0, 3], sizes = [32, 1], strides = [1, 1]} : vector<32x49xf32> to vector<32x1xf32>
    %78 = vector.broadcast %77 : vector<32x1xf32> to vector<32x256xf32>
    %79 = arith.mulf %76, %78 : vector<32x256xf32>
    %80 = arith.addf %74, %79 : vector<32x256xf32>
    %c4_35 = arith.constant 4 : index
    %c0_36 = arith.constant 0 : index
    %c0_37 = arith.constant 0 : index
    %81 = vector.load %arg8[%c4_35, %c0_36, %c0_37] : memref<7x32x256xf32, #tpu.memory_space<vmem>>, vector<1x32x256xf32>
    %82 = vector.shape_cast %81 : vector<1x32x256xf32> to vector<32x256xf32>
    %83 = vector.extract_strided_slice %56 {offsets = [0, 4], sizes = [32, 1], strides = [1, 1]} : vector<32x49xf32> to vector<32x1xf32>
    %84 = vector.broadcast %83 : vector<32x1xf32> to vector<32x256xf32>
    %85 = arith.mulf %82, %84 : vector<32x256xf32>
    %86 = arith.addf %80, %85 : vector<32x256xf32>
    %c5_38 = arith.constant 5 : index
    %c0_39 = arith.constant 0 : index
    %c0_40 = arith.constant 0 : index
    %87 = vector.load %arg8[%c5_38, %c0_39, %c0_40] : memref<7x32x256xf32, #tpu.memory_space<vmem>>, vector<1x32x256xf32>
    %88 = vector.shape_cast %87 : vector<1x32x256xf32> to vector<32x256xf32>
    %89 = vector.extract_strided_slice %56 {offsets = [0, 5], sizes = [32, 1], strides = [1, 1]} : vector<32x49xf32> to vector<32x1xf32>
    %90 = vector.broadcast %89 : vector<32x1xf32> to vector<32x256xf32>
    %91 = arith.mulf %88, %90 : vector<32x256xf32>
    %92 = arith.addf %86, %91 : vector<32x256xf32>
    %c6_41 = arith.constant 6 : index
    %c0_42 = arith.constant 0 : index
    %c0_43 = arith.constant 0 : index
    %93 = vector.load %arg8[%c6_41, %c0_42, %c0_43] : memref<7x32x256xf32, #tpu.memory_space<vmem>>, vector<1x32x256xf32>
    %94 = vector.shape_cast %93 : vector<1x32x256xf32> to vector<32x256xf32>
    %95 = vector.extract_strided_slice %56 {offsets = [0, 6], sizes = [32, 1], strides = [1, 1]} : vector<32x49xf32> to vector<32x1xf32>
    %96 = vector.broadcast %95 : vector<32x1xf32> to vector<32x256xf32>
    %97 = arith.mulf %94, %96 : vector<32x256xf32>
    %98 = arith.addf %92, %97 : vector<32x256xf32>
    %c48_i32 = arith.constant 48 : i32
    %99 = tpu.dynamic_rotate %98 by %c48_i32 dim 1 : vector<32x256xf32>, i32 -> vector<32x256xf32>
    %100 = vector.extract_strided_slice %8 {offsets = [8, 0], sizes = [1, 256], strides = [1, 1]} : vector<16x256xf32> to vector<1x256xf32>
    %101 = vector.broadcast %100 : vector<1x256xf32> to vector<32x256xf32>
    %102 = arith.mulf %99, %101 : vector<32x256xf32>
    %103 = arith.addf %57, %102 : vector<32x256xf32>
    %c0_44 = arith.constant 0 : index
    %c0_45 = arith.constant 0 : index
    %c0_46 = arith.constant 0 : index
    %104 = vector.load %arg8[%c0_44, %c0_45, %c0_46] : memref<7x32x256xf32, #tpu.memory_space<vmem>>, vector<1x32x256xf32>
    %105 = vector.shape_cast %104 : vector<1x32x256xf32> to vector<32x256xf32>
    %106 = vector.extract_strided_slice %56 {offsets = [0, 7], sizes = [32, 1], strides = [1, 1]} : vector<32x49xf32> to vector<32x1xf32>
    %107 = vector.broadcast %106 : vector<32x1xf32> to vector<32x256xf32>
    %108 = arith.mulf %105, %107 : vector<32x256xf32>
    %c1_47 = arith.constant 1 : index
    %c0_48 = arith.constant 0 : index
    %c0_49 = arith.constant 0 : index
    %109 = vector.load %arg8[%c1_47, %c0_48, %c0_49] : memref<7x32x256xf32, #tpu.memory_space<vmem>>, vector<1x32x256xf32>
    %110 = vector.shape_cast %109 : vector<1x32x256xf32> to vector<32x256xf32>
    %111 = vector.extract_strided_slice %56 {offsets = [0, 8], sizes = [32, 1], strides = [1, 1]} : vector<32x49xf32> to vector<32x1xf32>
    %112 = vector.broadcast %111 : vector<32x1xf32> to vector<32x256xf32>
    %113 = arith.mulf %110, %112 : vector<32x256xf32>
    %114 = arith.addf %108, %113 : vector<32x256xf32>
    %c2_50 = arith.constant 2 : index
    %c0_51 = arith.constant 0 : index
    %c0_52 = arith.constant 0 : index
    %115 = vector.load %arg8[%c2_50, %c0_51, %c0_52] : memref<7x32x256xf32, #tpu.memory_space<vmem>>, vector<1x32x256xf32>
    %116 = vector.shape_cast %115 : vector<1x32x256xf32> to vector<32x256xf32>
    %117 = vector.extract_strided_slice %56 {offsets = [0, 9], sizes = [32, 1], strides = [1, 1]} : vector<32x49xf32> to vector<32x1xf32>
    %118 = vector.broadcast %117 : vector<32x1xf32> to vector<32x256xf32>
    %119 = arith.mulf %116, %118 : vector<32x256xf32>
    %120 = arith.addf %114, %119 : vector<32x256xf32>
    %c3_53 = arith.constant 3 : index
    %c0_54 = arith.constant 0 : index
    %c0_55 = arith.constant 0 : index
    %121 = vector.load %arg8[%c3_53, %c0_54, %c0_55] : memref<7x32x256xf32, #tpu.memory_space<vmem>>, vector<1x32x256xf32>
    %122 = vector.shape_cast %121 : vector<1x32x256xf32> to vector<32x256xf32>
    %123 = vector.extract_strided_slice %56 {offsets = [0, 10], sizes = [32, 1], strides = [1, 1]} : vector<32x49xf32> to vector<32x1xf32>
    %124 = vector.broadcast %123 : vector<32x1xf32> to vector<32x256xf32>
    %125 = arith.mulf %122, %124 : vector<32x256xf32>
    %126 = arith.addf %120, %125 : vector<32x256xf32>
    %c4_56 = arith.constant 4 : index
    %c0_57 = arith.constant 0 : index
    %c0_58 = arith.constant 0 : index
    %127 = vector.load %arg8[%c4_56, %c0_57, %c0_58] : memref<7x32x256xf32, #tpu.memory_space<vmem>>, vector<1x32x256xf32>
    %128 = vector.shape_cast %127 : vector<1x32x256xf32> to vector<32x256xf32>
    %129 = vector.extract_strided_slice %56 {offsets = [0, 11], sizes = [32, 1], strides = [1, 1]} : vector<32x49xf32> to vector<32x1xf32>
    %130 = vector.broadcast %129 : vector<32x1xf32> to vector<32x256xf32>
    %131 = arith.mulf %128, %130 : vector<32x256xf32>
    %132 = arith.addf %126, %131 : vector<32x256xf32>
    %c5_59 = arith.constant 5 : index
    %c0_60 = arith.constant 0 : index
    %c0_61 = arith.constant 0 : index
    %133 = vector.load %arg8[%c5_59, %c0_60, %c0_61] : memref<7x32x256xf32, #tpu.memory_space<vmem>>, vector<1x32x256xf32>
    %134 = vector.shape_cast %133 : vector<1x32x256xf32> to vector<32x256xf32>
    %135 = vector.extract_strided_slice %56 {offsets = [0, 12], sizes = [32, 1], strides = [1, 1]} : vector<32x49xf32> to vector<32x1xf32>
    %136 = vector.broadcast %135 : vector<32x1xf32> to vector<32x256xf32>
    %137 = arith.mulf %134, %136 : vector<32x256xf32>
    %138 = arith.addf %132, %137 : vector<32x256xf32>
    %c6_62 = arith.constant 6 : index
    %c0_63 = arith.constant 0 : index
    %c0_64 = arith.constant 0 : index
    %139 = vector.load %arg8[%c6_62, %c0_63, %c0_64] : memref<7x32x256xf32, #tpu.memory_space<vmem>>, vector<1x32x256xf32>
    %140 = vector.shape_cast %139 : vector<1x32x256xf32> to vector<32x256xf32>
    %141 = vector.extract_strided_slice %56 {offsets = [0, 13], sizes = [32, 1], strides = [1, 1]} : vector<32x49xf32> to vector<32x1xf32>
    %142 = vector.broadcast %141 : vector<32x1xf32> to vector<32x256xf32>
    %143 = arith.mulf %140, %142 : vector<32x256xf32>
    %144 = arith.addf %138, %143 : vector<32x256xf32>
    %c32_i32 = arith.constant 32 : i32
    %145 = tpu.dynamic_rotate %144 by %c32_i32 dim 1 : vector<32x256xf32>, i32 -> vector<32x256xf32>
    %146 = vector.extract_strided_slice %8 {offsets = [9, 0], sizes = [1, 256], strides = [1, 1]} : vector<16x256xf32> to vector<1x256xf32>
    %147 = vector.broadcast %146 : vector<1x256xf32> to vector<32x256xf32>
    %148 = arith.mulf %145, %147 : vector<32x256xf32>
    %149 = arith.addf %103, %148 : vector<32x256xf32>
    %c0_65 = arith.constant 0 : index
    %c0_66 = arith.constant 0 : index
    %c0_67 = arith.constant 0 : index
    %150 = vector.load %arg8[%c0_65, %c0_66, %c0_67] : memref<7x32x256xf32, #tpu.memory_space<vmem>>, vector<1x32x256xf32>
    %151 = vector.shape_cast %150 : vector<1x32x256xf32> to vector<32x256xf32>
    %152 = vector.extract_strided_slice %56 {offsets = [0, 14], sizes = [32, 1], strides = [1, 1]} : vector<32x49xf32> to vector<32x1xf32>
    %153 = vector.broadcast %152 : vector<32x1xf32> to vector<32x256xf32>
    %154 = arith.mulf %151, %153 : vector<32x256xf32>
    %c1_68 = arith.constant 1 : index
    %c0_69 = arith.constant 0 : index
    %c0_70 = arith.constant 0 : index
    %155 = vector.load %arg8[%c1_68, %c0_69, %c0_70] : memref<7x32x256xf32, #tpu.memory_space<vmem>>, vector<1x32x256xf32>
    %156 = vector.shape_cast %155 : vector<1x32x256xf32> to vector<32x256xf32>
    %157 = vector.extract_strided_slice %56 {offsets = [0, 15], sizes = [32, 1], strides = [1, 1]} : vector<32x49xf32> to vector<32x1xf32>
    %158 = vector.broadcast %157 : vector<32x1xf32> to vector<32x256xf32>
    %159 = arith.mulf %156, %158 : vector<32x256xf32>
    %160 = arith.addf %154, %159 : vector<32x256xf32>
    %c2_71 = arith.constant 2 : index
    %c0_72 = arith.constant 0 : index
    %c0_73 = arith.constant 0 : index
    %161 = vector.load %arg8[%c2_71, %c0_72, %c0_73] : memref<7x32x256xf32, #tpu.memory_space<vmem>>, vector<1x32x256xf32>
    %162 = vector.shape_cast %161 : vector<1x32x256xf32> to vector<32x256xf32>
    %163 = vector.extract_strided_slice %56 {offsets = [0, 16], sizes = [32, 1], strides = [1, 1]} : vector<32x49xf32> to vector<32x1xf32>
    %164 = vector.broadcast %163 : vector<32x1xf32> to vector<32x256xf32>
    %165 = arith.mulf %162, %164 : vector<32x256xf32>
    %166 = arith.addf %160, %165 : vector<32x256xf32>
    %c3_74 = arith.constant 3 : index
    %c0_75 = arith.constant 0 : index
    %c0_76 = arith.constant 0 : index
    %167 = vector.load %arg8[%c3_74, %c0_75, %c0_76] : memref<7x32x256xf32, #tpu.memory_space<vmem>>, vector<1x32x256xf32>
    %168 = vector.shape_cast %167 : vector<1x32x256xf32> to vector<32x256xf32>
    %169 = vector.extract_strided_slice %56 {offsets = [0, 17], sizes = [32, 1], strides = [1, 1]} : vector<32x49xf32> to vector<32x1xf32>
    %170 = vector.broadcast %169 : vector<32x1xf32> to vector<32x256xf32>
    %171 = arith.mulf %168, %170 : vector<32x256xf32>
    %172 = arith.addf %166, %171 : vector<32x256xf32>
    %c4_77 = arith.constant 4 : index
    %c0_78 = arith.constant 0 : index
    %c0_79 = arith.constant 0 : index
    %173 = vector.load %arg8[%c4_77, %c0_78, %c0_79] : memref<7x32x256xf32, #tpu.memory_space<vmem>>, vector<1x32x256xf32>
    %174 = vector.shape_cast %173 : vector<1x32x256xf32> to vector<32x256xf32>
    %175 = vector.extract_strided_slice %56 {offsets = [0, 18], sizes = [32, 1], strides = [1, 1]} : vector<32x49xf32> to vector<32x1xf32>
    %176 = vector.broadcast %175 : vector<32x1xf32> to vector<32x256xf32>
    %177 = arith.mulf %174, %176 : vector<32x256xf32>
    %178 = arith.addf %172, %177 : vector<32x256xf32>
    %c5_80 = arith.constant 5 : index
    %c0_81 = arith.constant 0 : index
    %c0_82 = arith.constant 0 : index
    %179 = vector.load %arg8[%c5_80, %c0_81, %c0_82] : memref<7x32x256xf32, #tpu.memory_space<vmem>>, vector<1x32x256xf32>
    %180 = vector.shape_cast %179 : vector<1x32x256xf32> to vector<32x256xf32>
    %181 = vector.extract_strided_slice %56 {offsets = [0, 19], sizes = [32, 1], strides = [1, 1]} : vector<32x49xf32> to vector<32x1xf32>
    %182 = vector.broadcast %181 : vector<32x1xf32> to vector<32x256xf32>
    %183 = arith.mulf %180, %182 : vector<32x256xf32>
    %184 = arith.addf %178, %183 : vector<32x256xf32>
    %c6_83 = arith.constant 6 : index
    %c0_84 = arith.constant 0 : index
    %c0_85 = arith.constant 0 : index
    %185 = vector.load %arg8[%c6_83, %c0_84, %c0_85] : memref<7x32x256xf32, #tpu.memory_space<vmem>>, vector<1x32x256xf32>
    %186 = vector.shape_cast %185 : vector<1x32x256xf32> to vector<32x256xf32>
    %187 = vector.extract_strided_slice %56 {offsets = [0, 20], sizes = [32, 1], strides = [1, 1]} : vector<32x49xf32> to vector<32x1xf32>
    %188 = vector.broadcast %187 : vector<32x1xf32> to vector<32x256xf32>
    %189 = arith.mulf %186, %188 : vector<32x256xf32>
    %190 = arith.addf %184, %189 : vector<32x256xf32>
    %c16_i32 = arith.constant 16 : i32
    %191 = tpu.dynamic_rotate %190 by %c16_i32 dim 1 : vector<32x256xf32>, i32 -> vector<32x256xf32>
    %192 = vector.extract_strided_slice %8 {offsets = [10, 0], sizes = [1, 256], strides = [1, 1]} : vector<16x256xf32> to vector<1x256xf32>
    %193 = vector.broadcast %192 : vector<1x256xf32> to vector<32x256xf32>
    %194 = arith.mulf %191, %193 : vector<32x256xf32>
    %195 = arith.addf %149, %194 : vector<32x256xf32>
    %c0_86 = arith.constant 0 : index
    %c0_87 = arith.constant 0 : index
    %c0_88 = arith.constant 0 : index
    %196 = vector.load %arg8[%c0_86, %c0_87, %c0_88] : memref<7x32x256xf32, #tpu.memory_space<vmem>>, vector<1x32x256xf32>
    %197 = vector.shape_cast %196 : vector<1x32x256xf32> to vector<32x256xf32>
    %198 = vector.extract_strided_slice %56 {offsets = [0, 21], sizes = [32, 1], strides = [1, 1]} : vector<32x49xf32> to vector<32x1xf32>
    %199 = vector.broadcast %198 : vector<32x1xf32> to vector<32x256xf32>
    %200 = arith.mulf %197, %199 : vector<32x256xf32>
    %c1_89 = arith.constant 1 : index
    %c0_90 = arith.constant 0 : index
    %c0_91 = arith.constant 0 : index
    %201 = vector.load %arg8[%c1_89, %c0_90, %c0_91] : memref<7x32x256xf32, #tpu.memory_space<vmem>>, vector<1x32x256xf32>
    %202 = vector.shape_cast %201 : vector<1x32x256xf32> to vector<32x256xf32>
    %203 = vector.extract_strided_slice %56 {offsets = [0, 22], sizes = [32, 1], strides = [1, 1]} : vector<32x49xf32> to vector<32x1xf32>
    %204 = vector.broadcast %203 : vector<32x1xf32> to vector<32x256xf32>
    %205 = arith.mulf %202, %204 : vector<32x256xf32>
    %206 = arith.addf %200, %205 : vector<32x256xf32>
    %c2_92 = arith.constant 2 : index
    %c0_93 = arith.constant 0 : index
    %c0_94 = arith.constant 0 : index
    %207 = vector.load %arg8[%c2_92, %c0_93, %c0_94] : memref<7x32x256xf32, #tpu.memory_space<vmem>>, vector<1x32x256xf32>
    %208 = vector.shape_cast %207 : vector<1x32x256xf32> to vector<32x256xf32>
    %209 = vector.extract_strided_slice %56 {offsets = [0, 23], sizes = [32, 1], strides = [1, 1]} : vector<32x49xf32> to vector<32x1xf32>
    %210 = vector.broadcast %209 : vector<32x1xf32> to vector<32x256xf32>
    %211 = arith.mulf %208, %210 : vector<32x256xf32>
    %212 = arith.addf %206, %211 : vector<32x256xf32>
    %c3_95 = arith.constant 3 : index
    %c0_96 = arith.constant 0 : index
    %c0_97 = arith.constant 0 : index
    %213 = vector.load %arg8[%c3_95, %c0_96, %c0_97] : memref<7x32x256xf32, #tpu.memory_space<vmem>>, vector<1x32x256xf32>
    %214 = vector.shape_cast %213 : vector<1x32x256xf32> to vector<32x256xf32>
    %215 = vector.extract_strided_slice %56 {offsets = [0, 24], sizes = [32, 1], strides = [1, 1]} : vector<32x49xf32> to vector<32x1xf32>
    %216 = vector.broadcast %215 : vector<32x1xf32> to vector<32x256xf32>
    %217 = arith.mulf %214, %216 : vector<32x256xf32>
    %218 = arith.addf %212, %217 : vector<32x256xf32>
    %c4_98 = arith.constant 4 : index
    %c0_99 = arith.constant 0 : index
    %c0_100 = arith.constant 0 : index
    %219 = vector.load %arg8[%c4_98, %c0_99, %c0_100] : memref<7x32x256xf32, #tpu.memory_space<vmem>>, vector<1x32x256xf32>
    %220 = vector.shape_cast %219 : vector<1x32x256xf32> to vector<32x256xf32>
    %221 = vector.extract_strided_slice %56 {offsets = [0, 25], sizes = [32, 1], strides = [1, 1]} : vector<32x49xf32> to vector<32x1xf32>
    %222 = vector.broadcast %221 : vector<32x1xf32> to vector<32x256xf32>
    %223 = arith.mulf %220, %222 : vector<32x256xf32>
    %224 = arith.addf %218, %223 : vector<32x256xf32>
    %c5_101 = arith.constant 5 : index
    %c0_102 = arith.constant 0 : index
    %c0_103 = arith.constant 0 : index
    %225 = vector.load %arg8[%c5_101, %c0_102, %c0_103] : memref<7x32x256xf32, #tpu.memory_space<vmem>>, vector<1x32x256xf32>
    %226 = vector.shape_cast %225 : vector<1x32x256xf32> to vector<32x256xf32>
    %227 = vector.extract_strided_slice %56 {offsets = [0, 26], sizes = [32, 1], strides = [1, 1]} : vector<32x49xf32> to vector<32x1xf32>
    %228 = vector.broadcast %227 : vector<32x1xf32> to vector<32x256xf32>
    %229 = arith.mulf %226, %228 : vector<32x256xf32>
    %230 = arith.addf %224, %229 : vector<32x256xf32>
    %c6_104 = arith.constant 6 : index
    %c0_105 = arith.constant 0 : index
    %c0_106 = arith.constant 0 : index
    %231 = vector.load %arg8[%c6_104, %c0_105, %c0_106] : memref<7x32x256xf32, #tpu.memory_space<vmem>>, vector<1x32x256xf32>
    %232 = vector.shape_cast %231 : vector<1x32x256xf32> to vector<32x256xf32>
    %233 = vector.extract_strided_slice %56 {offsets = [0, 27], sizes = [32, 1], strides = [1, 1]} : vector<32x49xf32> to vector<32x1xf32>
    %234 = vector.broadcast %233 : vector<32x1xf32> to vector<32x256xf32>
    %235 = arith.mulf %232, %234 : vector<32x256xf32>
    %236 = arith.addf %230, %235 : vector<32x256xf32>
    %237 = arith.addf %195, %236 : vector<32x256xf32>
    %c0_107 = arith.constant 0 : index
    %c0_108 = arith.constant 0 : index
    %c0_109 = arith.constant 0 : index
    %238 = vector.load %arg8[%c0_107, %c0_108, %c0_109] : memref<7x32x256xf32, #tpu.memory_space<vmem>>, vector<1x32x256xf32>
    %239 = vector.shape_cast %238 : vector<1x32x256xf32> to vector<32x256xf32>
    %240 = vector.extract_strided_slice %56 {offsets = [0, 28], sizes = [32, 1], strides = [1, 1]} : vector<32x49xf32> to vector<32x1xf32>
    %241 = vector.broadcast %240 : vector<32x1xf32> to vector<32x256xf32>
    %242 = arith.mulf %239, %241 : vector<32x256xf32>
    %c1_110 = arith.constant 1 : index
    %c0_111 = arith.constant 0 : index
    %c0_112 = arith.constant 0 : index
    %243 = vector.load %arg8[%c1_110, %c0_111, %c0_112] : memref<7x32x256xf32, #tpu.memory_space<vmem>>, vector<1x32x256xf32>
    %244 = vector.shape_cast %243 : vector<1x32x256xf32> to vector<32x256xf32>
    %245 = vector.extract_strided_slice %56 {offsets = [0, 29], sizes = [32, 1], strides = [1, 1]} : vector<32x49xf32> to vector<32x1xf32>
    %246 = vector.broadcast %245 : vector<32x1xf32> to vector<32x256xf32>
    %247 = arith.mulf %244, %246 : vector<32x256xf32>
    %248 = arith.addf %242, %247 : vector<32x256xf32>
    %c2_113 = arith.constant 2 : index
    %c0_114 = arith.constant 0 : index
    %c0_115 = arith.constant 0 : index
    %249 = vector.load %arg8[%c2_113, %c0_114, %c0_115] : memref<7x32x256xf32, #tpu.memory_space<vmem>>, vector<1x32x256xf32>
    %250 = vector.shape_cast %249 : vector<1x32x256xf32> to vector<32x256xf32>
    %251 = vector.extract_strided_slice %56 {offsets = [0, 30], sizes = [32, 1], strides = [1, 1]} : vector<32x49xf32> to vector<32x1xf32>
    %252 = vector.broadcast %251 : vector<32x1xf32> to vector<32x256xf32>
    %253 = arith.mulf %250, %252 : vector<32x256xf32>
    %254 = arith.addf %248, %253 : vector<32x256xf32>
    %c3_116 = arith.constant 3 : index
    %c0_117 = arith.constant 0 : index
    %c0_118 = arith.constant 0 : index
    %255 = vector.load %arg8[%c3_116, %c0_117, %c0_118] : memref<7x32x256xf32, #tpu.memory_space<vmem>>, vector<1x32x256xf32>
    %256 = vector.shape_cast %255 : vector<1x32x256xf32> to vector<32x256xf32>
    %257 = vector.extract_strided_slice %56 {offsets = [0, 31], sizes = [32, 1], strides = [1, 1]} : vector<32x49xf32> to vector<32x1xf32>
    %258 = vector.broadcast %257 : vector<32x1xf32> to vector<32x256xf32>
    %259 = arith.mulf %256, %258 : vector<32x256xf32>
    %260 = arith.addf %254, %259 : vector<32x256xf32>
    %c4_119 = arith.constant 4 : index
    %c0_120 = arith.constant 0 : index
    %c0_121 = arith.constant 0 : index
    %261 = vector.load %arg8[%c4_119, %c0_120, %c0_121] : memref<7x32x256xf32, #tpu.memory_space<vmem>>, vector<1x32x256xf32>
    %262 = vector.shape_cast %261 : vector<1x32x256xf32> to vector<32x256xf32>
    %263 = vector.extract_strided_slice %56 {offsets = [0, 32], sizes = [32, 1], strides = [1, 1]} : vector<32x49xf32> to vector<32x1xf32>
    %264 = vector.broadcast %263 : vector<32x1xf32> to vector<32x256xf32>
    %265 = arith.mulf %262, %264 : vector<32x256xf32>
    %266 = arith.addf %260, %265 : vector<32x256xf32>
    %c5_122 = arith.constant 5 : index
    %c0_123 = arith.constant 0 : index
    %c0_124 = arith.constant 0 : index
    %267 = vector.load %arg8[%c5_122, %c0_123, %c0_124] : memref<7x32x256xf32, #tpu.memory_space<vmem>>, vector<1x32x256xf32>
    %268 = vector.shape_cast %267 : vector<1x32x256xf32> to vector<32x256xf32>
    %269 = vector.extract_strided_slice %56 {offsets = [0, 33], sizes = [32, 1], strides = [1, 1]} : vector<32x49xf32> to vector<32x1xf32>
    %270 = vector.broadcast %269 : vector<32x1xf32> to vector<32x256xf32>
    %271 = arith.mulf %268, %270 : vector<32x256xf32>
    %272 = arith.addf %266, %271 : vector<32x256xf32>
    %c6_125 = arith.constant 6 : index
    %c0_126 = arith.constant 0 : index
    %c0_127 = arith.constant 0 : index
    %273 = vector.load %arg8[%c6_125, %c0_126, %c0_127] : memref<7x32x256xf32, #tpu.memory_space<vmem>>, vector<1x32x256xf32>
    %274 = vector.shape_cast %273 : vector<1x32x256xf32> to vector<32x256xf32>
    %275 = vector.extract_strided_slice %56 {offsets = [0, 34], sizes = [32, 1], strides = [1, 1]} : vector<32x49xf32> to vector<32x1xf32>
    %276 = vector.broadcast %275 : vector<32x1xf32> to vector<32x256xf32>
    %277 = arith.mulf %274, %276 : vector<32x256xf32>
    %278 = arith.addf %272, %277 : vector<32x256xf32>
    %c240_i32 = arith.constant 240 : i32
    %279 = tpu.dynamic_rotate %278 by %c240_i32 dim 1 : vector<32x256xf32>, i32 -> vector<32x256xf32>
    %280 = vector.extract_strided_slice %8 {offsets = [12, 0], sizes = [1, 256], strides = [1, 1]} : vector<16x256xf32> to vector<1x256xf32>
    %281 = vector.broadcast %280 : vector<1x256xf32> to vector<32x256xf32>
    %282 = arith.mulf %279, %281 : vector<32x256xf32>
    %283 = arith.addf %237, %282 : vector<32x256xf32>
    %c0_128 = arith.constant 0 : index
    %c0_129 = arith.constant 0 : index
    %c0_130 = arith.constant 0 : index
    %284 = vector.load %arg8[%c0_128, %c0_129, %c0_130] : memref<7x32x256xf32, #tpu.memory_space<vmem>>, vector<1x32x256xf32>
    %285 = vector.shape_cast %284 : vector<1x32x256xf32> to vector<32x256xf32>
    %286 = vector.extract_strided_slice %56 {offsets = [0, 35], sizes = [32, 1], strides = [1, 1]} : vector<32x49xf32> to vector<32x1xf32>
    %287 = vector.broadcast %286 : vector<32x1xf32> to vector<32x256xf32>
    %288 = arith.mulf %285, %287 : vector<32x256xf32>
    %c1_131 = arith.constant 1 : index
    %c0_132 = arith.constant 0 : index
    %c0_133 = arith.constant 0 : index
    %289 = vector.load %arg8[%c1_131, %c0_132, %c0_133] : memref<7x32x256xf32, #tpu.memory_space<vmem>>, vector<1x32x256xf32>
    %290 = vector.shape_cast %289 : vector<1x32x256xf32> to vector<32x256xf32>
    %291 = vector.extract_strided_slice %56 {offsets = [0, 36], sizes = [32, 1], strides = [1, 1]} : vector<32x49xf32> to vector<32x1xf32>
    %292 = vector.broadcast %291 : vector<32x1xf32> to vector<32x256xf32>
    %293 = arith.mulf %290, %292 : vector<32x256xf32>
    %294 = arith.addf %288, %293 : vector<32x256xf32>
    %c2_134 = arith.constant 2 : index
    %c0_135 = arith.constant 0 : index
    %c0_136 = arith.constant 0 : index
    %295 = vector.load %arg8[%c2_134, %c0_135, %c0_136] : memref<7x32x256xf32, #tpu.memory_space<vmem>>, vector<1x32x256xf32>
    %296 = vector.shape_cast %295 : vector<1x32x256xf32> to vector<32x256xf32>
    %297 = vector.extract_strided_slice %56 {offsets = [0, 37], sizes = [32, 1], strides = [1, 1]} : vector<32x49xf32> to vector<32x1xf32>
    %298 = vector.broadcast %297 : vector<32x1xf32> to vector<32x256xf32>
    %299 = arith.mulf %296, %298 : vector<32x256xf32>
    %300 = arith.addf %294, %299 : vector<32x256xf32>
    %c3_137 = arith.constant 3 : index
    %c0_138 = arith.constant 0 : index
    %c0_139 = arith.constant 0 : index
    %301 = vector.load %arg8[%c3_137, %c0_138, %c0_139] : memref<7x32x256xf32, #tpu.memory_space<vmem>>, vector<1x32x256xf32>
    %302 = vector.shape_cast %301 : vector<1x32x256xf32> to vector<32x256xf32>
    %303 = vector.extract_strided_slice %56 {offsets = [0, 38], sizes = [32, 1], strides = [1, 1]} : vector<32x49xf32> to vector<32x1xf32>
    %304 = vector.broadcast %303 : vector<32x1xf32> to vector<32x256xf32>
    %305 = arith.mulf %302, %304 : vector<32x256xf32>
    %306 = arith.addf %300, %305 : vector<32x256xf32>
    %c4_140 = arith.constant 4 : index
    %c0_141 = arith.constant 0 : index
    %c0_142 = arith.constant 0 : index
    %307 = vector.load %arg8[%c4_140, %c0_141, %c0_142] : memref<7x32x256xf32, #tpu.memory_space<vmem>>, vector<1x32x256xf32>
    %308 = vector.shape_cast %307 : vector<1x32x256xf32> to vector<32x256xf32>
    %309 = vector.extract_strided_slice %56 {offsets = [0, 39], sizes = [32, 1], strides = [1, 1]} : vector<32x49xf32> to vector<32x1xf32>
    %310 = vector.broadcast %309 : vector<32x1xf32> to vector<32x256xf32>
    %311 = arith.mulf %308, %310 : vector<32x256xf32>
    %312 = arith.addf %306, %311 : vector<32x256xf32>
    %c5_143 = arith.constant 5 : index
    %c0_144 = arith.constant 0 : index
    %c0_145 = arith.constant 0 : index
    %313 = vector.load %arg8[%c5_143, %c0_144, %c0_145] : memref<7x32x256xf32, #tpu.memory_space<vmem>>, vector<1x32x256xf32>
    %314 = vector.shape_cast %313 : vector<1x32x256xf32> to vector<32x256xf32>
    %315 = vector.extract_strided_slice %56 {offsets = [0, 40], sizes = [32, 1], strides = [1, 1]} : vector<32x49xf32> to vector<32x1xf32>
    %316 = vector.broadcast %315 : vector<32x1xf32> to vector<32x256xf32>
    %317 = arith.mulf %314, %316 : vector<32x256xf32>
    %318 = arith.addf %312, %317 : vector<32x256xf32>
    %c6_146 = arith.constant 6 : index
    %c0_147 = arith.constant 0 : index
    %c0_148 = arith.constant 0 : index
    %319 = vector.load %arg8[%c6_146, %c0_147, %c0_148] : memref<7x32x256xf32, #tpu.memory_space<vmem>>, vector<1x32x256xf32>
    %320 = vector.shape_cast %319 : vector<1x32x256xf32> to vector<32x256xf32>
    %321 = vector.extract_strided_slice %56 {offsets = [0, 41], sizes = [32, 1], strides = [1, 1]} : vector<32x49xf32> to vector<32x1xf32>
    %322 = vector.broadcast %321 : vector<32x1xf32> to vector<32x256xf32>
    %323 = arith.mulf %320, %322 : vector<32x256xf32>
    %324 = arith.addf %318, %323 : vector<32x256xf32>
    %c224_i32 = arith.constant 224 : i32
    %325 = tpu.dynamic_rotate %324 by %c224_i32 dim 1 : vector<32x256xf32>, i32 -> vector<32x256xf32>
    %326 = vector.extract_strided_slice %8 {offsets = [13, 0], sizes = [1, 256], strides = [1, 1]} : vector<16x256xf32> to vector<1x256xf32>
    %327 = vector.broadcast %326 : vector<1x256xf32> to vector<32x256xf32>
    %328 = arith.mulf %325, %327 : vector<32x256xf32>
    %329 = arith.addf %283, %328 : vector<32x256xf32>
    %c0_149 = arith.constant 0 : index
    %c0_150 = arith.constant 0 : index
    %c0_151 = arith.constant 0 : index
    %330 = vector.load %arg8[%c0_149, %c0_150, %c0_151] : memref<7x32x256xf32, #tpu.memory_space<vmem>>, vector<1x32x256xf32>
    %331 = vector.shape_cast %330 : vector<1x32x256xf32> to vector<32x256xf32>
    %332 = vector.extract_strided_slice %56 {offsets = [0, 42], sizes = [32, 1], strides = [1, 1]} : vector<32x49xf32> to vector<32x1xf32>
    %333 = vector.broadcast %332 : vector<32x1xf32> to vector<32x256xf32>
    %334 = arith.mulf %331, %333 : vector<32x256xf32>
    %c1_152 = arith.constant 1 : index
    %c0_153 = arith.constant 0 : index
    %c0_154 = arith.constant 0 : index
    %335 = vector.load %arg8[%c1_152, %c0_153, %c0_154] : memref<7x32x256xf32, #tpu.memory_space<vmem>>, vector<1x32x256xf32>
    %336 = vector.shape_cast %335 : vector<1x32x256xf32> to vector<32x256xf32>
    %337 = vector.extract_strided_slice %56 {offsets = [0, 43], sizes = [32, 1], strides = [1, 1]} : vector<32x49xf32> to vector<32x1xf32>
    %338 = vector.broadcast %337 : vector<32x1xf32> to vector<32x256xf32>
    %339 = arith.mulf %336, %338 : vector<32x256xf32>
    %340 = arith.addf %334, %339 : vector<32x256xf32>
    %c2_155 = arith.constant 2 : index
    %c0_156 = arith.constant 0 : index
    %c0_157 = arith.constant 0 : index
    %341 = vector.load %arg8[%c2_155, %c0_156, %c0_157] : memref<7x32x256xf32, #tpu.memory_space<vmem>>, vector<1x32x256xf32>
    %342 = vector.shape_cast %341 : vector<1x32x256xf32> to vector<32x256xf32>
    %343 = vector.extract_strided_slice %56 {offsets = [0, 44], sizes = [32, 1], strides = [1, 1]} : vector<32x49xf32> to vector<32x1xf32>
    %344 = vector.broadcast %343 : vector<32x1xf32> to vector<32x256xf32>
    %345 = arith.mulf %342, %344 : vector<32x256xf32>
    %346 = arith.addf %340, %345 : vector<32x256xf32>
    %c3_158 = arith.constant 3 : index
    %c0_159 = arith.constant 0 : index
    %c0_160 = arith.constant 0 : index
    %347 = vector.load %arg8[%c3_158, %c0_159, %c0_160] : memref<7x32x256xf32, #tpu.memory_space<vmem>>, vector<1x32x256xf32>
    %348 = vector.shape_cast %347 : vector<1x32x256xf32> to vector<32x256xf32>
    %349 = vector.extract_strided_slice %56 {offsets = [0, 45], sizes = [32, 1], strides = [1, 1]} : vector<32x49xf32> to vector<32x1xf32>
    %350 = vector.broadcast %349 : vector<32x1xf32> to vector<32x256xf32>
    %351 = arith.mulf %348, %350 : vector<32x256xf32>
    %352 = arith.addf %346, %351 : vector<32x256xf32>
    %c4_161 = arith.constant 4 : index
    %c0_162 = arith.constant 0 : index
    %c0_163 = arith.constant 0 : index
    %353 = vector.load %arg8[%c4_161, %c0_162, %c0_163] : memref<7x32x256xf32, #tpu.memory_space<vmem>>, vector<1x32x256xf32>
    %354 = vector.shape_cast %353 : vector<1x32x256xf32> to vector<32x256xf32>
    %355 = vector.extract_strided_slice %56 {offsets = [0, 46], sizes = [32, 1], strides = [1, 1]} : vector<32x49xf32> to vector<32x1xf32>
    %356 = vector.broadcast %355 : vector<32x1xf32> to vector<32x256xf32>
    %357 = arith.mulf %354, %356 : vector<32x256xf32>
    %358 = arith.addf %352, %357 : vector<32x256xf32>
    %c5_164 = arith.constant 5 : index
    %c0_165 = arith.constant 0 : index
    %c0_166 = arith.constant 0 : index
    %359 = vector.load %arg8[%c5_164, %c0_165, %c0_166] : memref<7x32x256xf32, #tpu.memory_space<vmem>>, vector<1x32x256xf32>
    %360 = vector.shape_cast %359 : vector<1x32x256xf32> to vector<32x256xf32>
    %361 = vector.extract_strided_slice %56 {offsets = [0, 47], sizes = [32, 1], strides = [1, 1]} : vector<32x49xf32> to vector<32x1xf32>
    %362 = vector.broadcast %361 : vector<32x1xf32> to vector<32x256xf32>
    %363 = arith.mulf %360, %362 : vector<32x256xf32>
    %364 = arith.addf %358, %363 : vector<32x256xf32>
    %c6_167 = arith.constant 6 : index
    %c0_168 = arith.constant 0 : index
    %c0_169 = arith.constant 0 : index
    %365 = vector.load %arg8[%c6_167, %c0_168, %c0_169] : memref<7x32x256xf32, #tpu.memory_space<vmem>>, vector<1x32x256xf32>
    %366 = vector.shape_cast %365 : vector<1x32x256xf32> to vector<32x256xf32>
    %367 = vector.extract_strided_slice %56 {offsets = [0, 48], sizes = [32, 1], strides = [1, 1]} : vector<32x49xf32> to vector<32x1xf32>
    %368 = vector.broadcast %367 : vector<32x1xf32> to vector<32x256xf32>
    %369 = arith.mulf %366, %368 : vector<32x256xf32>
    %370 = arith.addf %364, %369 : vector<32x256xf32>
    %c208_i32 = arith.constant 208 : i32
    %371 = tpu.dynamic_rotate %370 by %c208_i32 dim 1 : vector<32x256xf32>, i32 -> vector<32x256xf32>
    %372 = vector.extract_strided_slice %8 {offsets = [14, 0], sizes = [1, 256], strides = [1, 1]} : vector<16x256xf32> to vector<1x256xf32>
    %373 = vector.broadcast %372 : vector<1x256xf32> to vector<32x256xf32>
    %374 = arith.mulf %371, %373 : vector<32x256xf32>
    %375 = arith.addf %329, %374 : vector<32x256xf32>
    %376 = vector.broadcast %1 : vector<32x1xf32> to vector<32x256xf32>
    %377 = arith.addf %375, %376 : vector<32x256xf32>
    %cst_170 = arith.constant dense<0.000000e+00> : vector<256xf32>
    %378 = vector.multi_reduction <add>, %377, %cst_170 [0] : vector<32x256xf32> to vector<256xf32>
    %379 = vector.shape_cast %378 : vector<256xf32> to vector<1x256xf32>
    %cst_171 = arith.constant 3.200000e+01 : f32
    %380 = vector.broadcast %cst_171 : f32 to vector<1x256xf32>
    %381 = arith.divf %379, %380 : vector<1x256xf32>
    %382 = vector.broadcast %381 : vector<1x256xf32> to vector<32x256xf32>
    %383 = arith.subf %377, %382 : vector<32x256xf32>
    %384 = arith.mulf %383, %383 : vector<32x256xf32>
    %cst_172 = arith.constant dense<0.000000e+00> : vector<256xf32>
    %385 = vector.multi_reduction <add>, %384, %cst_172 [0] : vector<32x256xf32> to vector<256xf32>
    %386 = vector.shape_cast %385 : vector<256xf32> to vector<1x256xf32>
    %cst_173 = arith.constant 3.200000e+01 : f32
    %387 = vector.broadcast %cst_173 : f32 to vector<1x256xf32>
    %388 = arith.divf %386, %387 : vector<1x256xf32>
    %389 = vector.broadcast %381 : vector<1x256xf32> to vector<32x256xf32>
    %390 = arith.subf %377, %389 : vector<32x256xf32>
    %cst_174 = arith.constant 9.99999997E-7 : f32
    %391 = vector.broadcast %cst_174 : f32 to vector<1x256xf32>
    %392 = arith.addf %388, %391 : vector<1x256xf32>
    %393 = math.rsqrt %392 : vector<1x256xf32>
    %394 = vector.broadcast %393 : vector<1x256xf32> to vector<32x256xf32>
    %395 = arith.mulf %390, %394 : vector<32x256xf32>
    %396 = vector.broadcast %2 : vector<32x1xf32> to vector<32x256xf32>
    %397 = arith.mulf %395, %396 : vector<32x256xf32>
    %398 = vector.broadcast %3 : vector<32x1xf32> to vector<32x256xf32>
    %399 = arith.addf %397, %398 : vector<32x256xf32>
    %c0_175 = arith.constant 0 : index
    %c0_176 = arith.constant 0 : index
    %400 = vector.load %arg5[%c0_175, %c0_176] : memref<128x32xf32, #tpu.memory_space<vmem>>, vector<128x32xf32>
    %cst_177 = arith.constant dense<0.000000e+00> : vector<128x256xf32>
    %401 = tpu.matmul %400, %399, %cst_177 {dimension_numbers = #tpu.dot_dimension_numbers<[1], [0], [0], [1], [0, 0, 1, 1], [], []>} : vector<128x32xf32>, vector<32x256xf32>, vector<128x256xf32> -> vector<128x256xf32>
    %402 = vector.broadcast %4 : vector<128x1xf32> to vector<128x256xf32>
    %403 = arith.addf %401, %402 : vector<128x256xf32>
    %cst_178 = arith.constant 5.000000e-01 : f32
    %404 = vector.broadcast %cst_178 : f32 to vector<128x256xf32>
    %405 = arith.mulf %404, %403 : vector<128x256xf32>
    %406 = arith.mulf %403, %403 : vector<128x256xf32>
    %407 = arith.mulf %406, %403 : vector<128x256xf32>
    %cst_179 = arith.constant 4.471500e-02 : f32
    %408 = vector.broadcast %cst_179 : f32 to vector<128x256xf32>
    %409 = arith.mulf %408, %407 : vector<128x256xf32>
    %410 = arith.addf %403, %409 : vector<128x256xf32>
    %cst_180 = arith.constant 0.797884583 : f32
    %411 = vector.broadcast %cst_180 : f32 to vector<128x256xf32>
    %412 = arith.mulf %411, %410 : vector<128x256xf32>
    %413 = math.tanh %412 : vector<128x256xf32>
    %cst_181 = arith.constant 1.000000e+00 : f32
    %414 = vector.broadcast %cst_181 : f32 to vector<128x256xf32>
    %415 = arith.addf %414, %413 : vector<128x256xf32>
    %416 = arith.mulf %405, %415 : vector<128x256xf32>
    %417 = arith.mulf %416, %416 : vector<128x256xf32>
    %cst_182 = arith.constant dense<0.000000e+00> : vector<128xf32>
    %418 = vector.multi_reduction <add>, %417, %cst_182 [1] : vector<128x256xf32> to vector<128xf32>
    %419 = vector.shape_cast %418 : vector<128xf32> to vector<128x1xf32>
    %420 = math.sqrt %419 : vector<128x1xf32>
    %cst_183 = arith.constant dense<0.000000e+00> : vector<1xf32>
    %421 = vector.multi_reduction <add>, %420, %cst_183 [0] : vector<128x1xf32> to vector<1xf32>
    %422 = vector.shape_cast %421 : vector<1xf32> to vector<1x1xf32>
    %cst_184 = arith.constant 1.280000e+02 : f32
    %423 = vector.broadcast %cst_184 : f32 to vector<1x1xf32>
    %424 = arith.divf %422, %423 : vector<1x1xf32>
    %cst_185 = arith.constant 9.99999997E-7 : f32
    %425 = vector.broadcast %cst_185 : f32 to vector<1x1xf32>
    %426 = arith.addf %424, %425 : vector<1x1xf32>
    %427 = vector.broadcast %426 : vector<1x1xf32> to vector<128x1xf32>
    %428 = arith.divf %420, %427 : vector<128x1xf32>
    %429 = vector.broadcast %428 : vector<128x1xf32> to vector<128x256xf32>
    %430 = arith.mulf %416, %429 : vector<128x256xf32>
    %431 = vector.broadcast %5 : vector<128x1xf32> to vector<128x256xf32>
    %432 = arith.mulf %431, %430 : vector<128x256xf32>
    %433 = vector.broadcast %6 : vector<128x1xf32> to vector<128x256xf32>
    %434 = arith.addf %432, %433 : vector<128x256xf32>
    %435 = arith.addf %434, %416 : vector<128x256xf32>
    %c0_186 = arith.constant 0 : index
    %c0_187 = arith.constant 0 : index
    %436 = vector.load %arg6[%c0_186, %c0_187] : memref<32x128xf32, #tpu.memory_space<vmem>>, vector<32x128xf32>
    %cst_188 = arith.constant dense<0.000000e+00> : vector<32x256xf32>
    %437 = tpu.matmul %436, %435, %cst_188 {dimension_numbers = #tpu.dot_dimension_numbers<[1], [0], [0], [1], [0, 0, 1, 1], [], []>} : vector<32x128xf32>, vector<128x256xf32>, vector<32x256xf32> -> vector<32x256xf32>
    %438 = vector.broadcast %7 : vector<32x1xf32> to vector<32x256xf32>
    %439 = arith.addf %437, %438 : vector<32x256xf32>
    %c0_189 = arith.constant 0 : index
    %c0_190 = arith.constant 0 : index
    %c0_191 = arith.constant 0 : index
    %440 = vector.load %arg1[%c0_189, %c0_190, %c0_191] : memref<1x32x256xf32, #tpu.memory_space<vmem>>, vector<1x32x256xf32>
    %441 = vector.shape_cast %440 : vector<1x32x256xf32> to vector<32x256xf32>
    %442 = arith.addf %441, %439 : vector<32x256xf32>
    %c0_192 = arith.constant 0 : index
    %c0_193 = arith.constant 0 : index
    %c0_194 = arith.constant 0 : index
    %443 = vector.load %arg7[%c0_192, %c0_193, %c0_194] : memref<1x32x256xf32, #tpu.memory_space<vmem>>, vector<1x32x256xf32>
    %444 = vector.shape_cast %443 : vector<1x32x256xf32> to vector<32x256xf32>
    %445 = vector.shape_cast %442 : vector<32x256xf32> to vector<1x32x256xf32>
    tpu.vector_store %arg7[%c0_192, %c0_193, %c0_194], %445 {strides = array<i32>} : memref<1x32x256xf32, #tpu.memory_space<vmem>>, vector<1x32x256xf32>,
    return
  }
  func.func @transform_0(%arg0: i32) -> (i32, i32, i32) {
    %c0_i32 = arith.constant 0 : i32
    %c0_i32_0 = arith.constant 0 : i32
    %c0_i32_1 = arith.constant 0 : i32
    return %arg0, %c0_i32, %c0_i32_0 : i32, i32, i32
  }
  func.func @transform_1(%arg0: i32) -> (i32, i32) {
    %c0_i32 = arith.constant 0 : i32
    %c0_i32_0 = arith.constant 0 : i32
    %c0_i32_1 = arith.constant 0 : i32
    return %c0_i32, %c0_i32_0 : i32, i32
  }
  func.func @transform_2(%arg0: i32) -> (i32, i32) {
    %c0_i32 = arith.constant 0 : i32
    %c0_i32_0 = arith.constant 0 : i32
    %c0_i32_1 = arith.constant 0 : i32
    return %c0_i32, %c0_i32_0 : i32, i32
  }
  func.func @transform_3(%arg0: i32) -> (i32, i32) {
    %c0_i32 = arith.constant 0 : i32
    %c0_i32_0 = arith.constant 0 : i32
    %c0_i32_1 = arith.constant 0 : i32
    return %c0_i32, %c0_i32_0 : i32, i32
  }
  func.func @transform_4(%arg0: i32) -> (i32, i32) {
    %c0_i32 = arith.constant 0 : i32
    %c0_i32_0 = arith.constant 0 : i32
    %c0_i32_1 = arith.constant 0 : i32
    return %c0_i32, %c0_i32_0 : i32, i32
  }
  func.func @transform_5(%arg0: i32) -> (i32, i32) {
    %c0_i32 = arith.constant 0 : i32
    %c0_i32_0 = arith.constant 0 : i32
    %c0_i32_1 = arith.constant 0 : i32
    return %c0_i32, %c0_i32_0 : i32, i32
  }
  func.func @transform_6(%arg0: i32) -> (i32, i32, i32) {
    %c0_i32 = arith.constant 0 : i32
    %c0_i32_0 = arith.constant 0 : i32
    %c0_i32_1 = arith.constant 0 : i32
    return %arg0, %c0_i32, %c0_i32_0 : i32, i32, i32
  }
}

</mosaic_0001>

<llo_original>
// kernel: block_forward.1
$region0: #{block_forward.1}
  #allocation0 [shape = 'u32[]', space=smem, size = 0x4, offset = 0x4, fixed_abs, tag = 'smem constant byte address 0x4 - core index']
  #allocation1 [shape = 'u32[144,128]{1,0:T(1,128)}', space=vmem, size = 0x12000, scoped, tag = 'internal scratch']
  #allocation2 [shape = 'f32[7,32,256]{2,1,0:T(8,128)}', space=vmem, size = 0x38000, scoped, tag = 'scratch operand']
  %s0 = inlined_call_operand.vmem [shape: f32[2,32,256], index: 0, kind: input, shape index: {}]
  %s1 = inlined_call_operand.vmem [shape: f32[32,49], index: 1, kind: input, shape index: {}]
  %s2 = inlined_call_operand.vmem [shape: f32[16,256], index: 2, kind: input, shape index: {}]
  %s3 = inlined_call_operand.vmem [shape: f32[128,8], index: 3, kind: input, shape index: {}]
  %s4 = inlined_call_operand.vmem [shape: f32[128,32], index: 4, kind: input, shape index: {}]
  %s5 = inlined_call_operand.vmem [shape: f32[32,128], index: 5, kind: input, shape index: {}]
  %s6 = inlined_call_operand.vmem [shape: f32[2,32,256], index: 6, kind: output, shape index: {}]
  %s7 = sld [smem:[#allocation0]]
  $region57: #{block_forward.1} parent=0
    _
  %s9 = ssub.s32 1, %s7
  %s10 = scalar_select 0, %s9, %s7
  loop: start=0, step=1, limit=4
  $region2: #{block_forward.1} parent=0 // loop_pre_header
    _
  $region3: #{block_forward.1} parent=0 // loop_header
    %s12 = sphi 0, %s16
    %p13 = scmp.ge.s32.totalorder %s12, 4
    %s22 = sphi 0, %s24
    %s25 = sphi 0, %s22
    %s26 = sphi 0, %s25
    %s42 = sphi 0, %s26
    %s46 = sphi 0, %s46
    %s48 = sphi 0, %s46
    %s49 = sphi 0, %s48
    %s63 = sphi 0, %s49
    %s67 = sphi 0, %s67
    %s69 = sphi 0, %s67
    %s70 = sphi 0, %s69
    %s84 = sphi 0, %s70
    %s88 = sphi 0, %s88
    %s90 = sphi 0, %s88
    %s91 = sphi 0, %s90
    %s105 = sphi 0, %s91
    %s109 = sphi 0, %s109
    %s111 = sphi 0, %s109
    %s112 = sphi 0, %s111
    %s126 = sphi 0, %s112
    %s130 = sphi 0, %s130
    %s132 = sphi 0, %s130
    %s133 = sphi 0, %s132
    %s147 = sphi 0, %s133
    %s153 = sphi 0, %s155
    %s156 = sphi 0, %s153
    %s157 = sphi 0, %s156
    %s173 = sphi 0, %s157
  $region4: #{block_forward.1} parent=0 // loop_header_branch
    %15 = sbr.rel (%p13) target = $region8
  $region5: #{block_forward.1} parent=0 // loop_body
    %s17 = ssub.s32 %s12, 1
    %s18 = ssub.s32 %s12, 2
    %s19 = sadd.s32 %s12, 1
    %s20 = ssub.s32 %s12, %s19
    %p21 = scmp.eq.s32.totalorder %s20, 0
    %s23 = sadd.s32 %s22, 1
    %s24 = scalar_select %p21, %s22, %s23
    %p27 = pneg %p21
    %p28 = scmp.eq.s32.totalorder %s12, 1
    %p29 = por %p27, %p28
    %p30 = scmp.ne.s32.totalorder %s22, %s25
    %p31 = scmp.eq.s32.totalorder %s12, 0
    %p32 = por %p30, %p31
    %p33 = scmp.ne.s32.totalorder %s22, %s25
    %p34 = scmp.eq.s32.totalorder %s17, 1
    %p35 = por %p33, %p34
    %p36 = scmp.ne.s32.totalorder %s25, %s26
    %p37 = scmp.eq.s32.totalorder %s17, 0
    %p38 = por %p36, %p37
    %p39 = scmp.ne.s32.totalorder %s25, %s26
    %p40 = scmp.eq.s32.totalorder %s18, 1
    %p41 = por %p39, %p40
    %p43 = scmp.ne.s32.totalorder %s26, %s42
    %p44 = scmp.eq.s32.totalorder %s18, 0
    %p45 = por %p43, %p44
    %s47 = sadd.s32 %s46, 1
    %p50 = scmp.eq.s32.totalorder %s12, 1
    %p51 = scmp.ne.s32.totalorder %s46, %s48
    %p52 = scmp.eq.s32.totalorder %s12, 0
    %p53 = por %p51, %p52
    %p54 = scmp.ne.s32.totalorder %s46, %s48
    %p55 = scmp.eq.s32.totalorder %s17, 1
    %p56 = por %p54, %p55
    %p57 = scmp.ne.s32.totalorder %s48, %s49
    %p58 = scmp.eq.s32.totalorder %s17, 0
    %p59 = por %p57, %p58
    %p60 = scmp.ne.s32.totalorder %s48, %s49
    %p61 = scmp.eq.s32.totalorder %s18, 1
    %p62 = por %p60, %p61
    %p64 = scmp.ne.s32.totalorder %s49, %s63
    %p65 = scmp.eq.s32.totalorder %s18, 0
    %p66 = por %p64, %p65
    %s68 = sadd.s32 %s67, 1
    %p71 = scmp.eq.s32.totalorder %s12, 1
    %p72 = scmp.ne.s32.totalorder %s67, %s69
    %p73 = scmp.eq.s32.totalorder %s12, 0
    %p74 = por %p72, %p73
    %p75 = scmp.ne.s32.totalorder %s67, %s69
    %p76 = scmp.eq.s32.totalorder %s17, 1
    %p77 = por %p75, %p76
    %p78 = scmp.ne.s32.totalorder %s69, %s70
    %p79 = scmp.eq.s32.totalorder %s17, 0
    %p80 = por %p78, %p79
    %p81 = scmp.ne.s32.totalorder %s69, %s70
    %p82 = scmp.eq.s32.totalorder %s18, 1
    %p83 = por %p81, %p82
    %p85 = scmp.ne.s32.totalorder %s70, %s84
    %p86 = scmp.eq.s32.totalorder %s18, 0
    %p87 = por %p85, %p86
    %s89 = sadd.s32 %s88, 1
    %p92 = scmp.eq.s32.totalorder %s12, 1
    %p93 = scmp.ne.s32.totalorder %s88, %s90
    %p94 = scmp.eq.s32.totalorder %s12, 0
    %p95 = por %p93, %p94
    %p96 = scmp.ne.s32.totalorder %s88, %s90
    %p97 = scmp.eq.s32.totalorder %s17, 1
    %p98 = por %p96, %p97
    %p99 = scmp.ne.s32.totalorder %s90, %s91
    %p100 = scmp.eq.s32.totalorder %s17, 0
    %p101 = por %p99, %p100
    %p102 = scmp.ne.s32.totalorder %s90, %s91
    %p103 = scmp.eq.s32.totalorder %s18, 1
    %p104 = por %p102, %p103
    %p106 = scmp.ne.s32.totalorder %s91, %s105
    %p107 = scmp.eq.s32.totalorder %s18, 0
    %p108 = por %p106, %p107
    %s110 = sadd.s32 %s109, 1
    %p113 = scmp.eq.s32.totalorder %s12, 1
    %p114 = scmp.ne.s32.totalorder %s109, %s111
    %p115 = scmp.eq.s32.totalorder %s12, 0
    %p116 = por %p114, %p115
    %p117 = scmp.ne.s32.totalorder %s109, %s111
    %p118 = scmp.eq.s32.totalorder %s17, 1
    %p119 = por %p117, %p118
    %p120 = scmp.ne.s32.totalorder %s111, %s112
    %p121 = scmp.eq.s32.totalorder %s17, 0
    %p122 = por %p120, %p121
    %p123 = scmp.ne.s32.totalorder %s111, %s112
    %p124 = scmp.eq.s32.totalorder %s18, 1
    %p125 = por %p123, %p124
    %p127 = scmp.ne.s32.totalorder %s112, %s126
    %p128 = scmp.eq.s32.totalorder %s18, 0
    %p129 = por %p127, %p128
    %s131 = sadd.s32 %s130, 1
    %p134 = scmp.eq.s32.totalorder %s12, 1
    %p135 = scmp.ne.s32.totalorder %s130, %s132
    %p136 = scmp.eq.s32.totalorder %s12, 0
    %p137 = por %p135, %p136
    %p138 = scmp.ne.s32.totalorder %s130, %s132
    %p139 = scmp.eq.s32.totalorder %s17, 1
    %p140 = por %p138, %p139
    %p141 = scmp.ne.s32.totalorder %s132, %s133
    %p142 = scmp.eq.s32.totalorder %s17, 0
    %p143 = por %p141, %p142
    %p144 = scmp.ne.s32.totalorder %s132, %s133
    %p145 = scmp.eq.s32.totalorder %s18, 1
    %p146 = por %p144, %p145
    %p148 = scmp.ne.s32.totalorder %s133, %s147
    %p149 = scmp.eq.s32.totalorder %s18, 0
    %p150 = por %p148, %p149
    %s151 = ssub.s32 %s12, %s19
    %p152 = scmp.eq.s32.totalorder %s151, 0
    %s154 = sadd.s32 %s153, 1
    %s155 = scalar_select %p152, %s153, %s154
    %p158 = pneg %p152
    %p159 = scmp.eq.s32.totalorder %s12, 1
    %p160 = por %p158, %p159
    %p161 = scmp.ne.s32.totalorder %s153, %s156
    %p162 = scmp.eq.s32.totalorder %s12, 0
    %p163 = por %p161, %p162
    %p164 = scmp.ne.s32.totalorder %s153, %s156
    %p165 = scmp.eq.s32.totalorder %s17, 1
    %p166 = por %p164, %p165
    %p167 = scmp.ne.s32.totalorder %s156, %s157
    %p168 = scmp.eq.s32.totalorder %s17, 0
    %p169 = por %p167, %p168
    %p170 = scmp.ne.s32.totalorder %s156, %s157
    %p171 = scmp.eq.s32.totalorder %s18, 1
    %p172 = por %p170, %p171
    %p174 = scmp.ne.s32.totalorder %s157, %s173
    %p175 = scmp.eq.s32.totalorder %s18, 0
    %p176 = por %p174, %p175
    %p177 = scmp.le.s32.totalorder 1, %s12
    %p178 = scmp.lt.s32.totalorder %s12, 3
    %p179 = pnand %p177, %p178
    %p180 = pneg %p179
    // Predicated region
    $region9: #{block_forward.1} parent=5 // pred_check
      _
    $region10: #{block_forward.1} parent=5 // pred_check_branch
      %182 = sbr.rel (%p179) target = $region12
    $region11: #{block_forward.1} parent=5 // pred_region
      %s183 = ssub.s32 %s12, 1
      // Predicated region
      $region13: #{block_forward.1} parent=11 // pred_check
        %p184 = pneg %p59
      $region14: #{block_forward.1} parent=11 // pred_check_branch
        %186 = sbr.rel (%p184) target = $region16
      $region15: #{block_forward.1} parent=11 // pred_region
        _
      $region16: #{block_forward.1} parent=11 // pred_fallthru
        _
      // Predicated region
      $region17: #{block_forward.1} parent=11 // pred_check
        %p187 = pneg %p80
      $region18: #{block_forward.1} parent=11 // pred_check_branch
        %189 = sbr.rel (%p187) target = $region20
      $region19: #{block_forward.1} parent=11 // pred_region
        _
      $region20: #{block_forward.1} parent=11 // pred_fallthru
        _
      // Predicated region
      $region21: #{block_forward.1} parent=11 // pred_check
        %p190 = pneg %p101
      $region22: #{block_forward.1} parent=11 // pred_check_branch
        %192 = sbr.rel (%p190) target = $region24
      $region23: #{block_forward.1} parent=11 // pred_region
        _
      $region24: #{block_forward.1} parent=11 // pred_fallthru
        _
      // Predicated region
      $region25: #{block_forward.1} parent=11 // pred_check
        %p193 = pneg %p122
      $region26: #{block_forward.1} parent=11 // pred_check_branch
        %195 = sbr.rel (%p193) target = $region28
      $region27: #{block_forward.1} parent=11 // pred_region
        _
      $region28: #{block_forward.1} parent=11 // pred_fallthru
        _
      // Predicated region
      $region29: #{block_forward.1} parent=11 // pred_check
        %p196 = pneg %p143
      $region30: #{block_forward.1} parent=11 // pred_check_branch
        %198 = sbr.rel (%p196) target = $region32
      $region31: #{block_forward.1} parent=11 // pred_region
        _
      $region32: #{block_forward.1} parent=11 // pred_fallthru
        _
    $region12: #{block_forward.1} parent=5 // pred_fallthru
      _
    %p199 = scmp.lt.s32.totalorder %s12, 2
    // Predicated region
    $region33: #{block_forward.1} parent=5 // pred_check
      %p200 = pneg %p199
    $region34: #{block_forward.1} parent=5 // pred_check_branch
      %202 = sbr.rel (%p200) target = $region36
    $region35: #{block_forward.1} parent=5 // pred_region
      // Predicated region
      $region37: #{block_forward.1} parent=35 // pred_check
        %p203 = pneg %p32
      $region38: #{block_forward.1} parent=35 // pred_check_branch
        %205 = sbr.rel (%p203) target = $region40
      $region39: #{block_forward.1} parent=35 // pred_region
        %p206 = scmp.lt.s32.totalorder %s12, 1
        %s207 = scalar_select %p206, %s12, 1
        %s208 = smul.addr %s207, 8
        %s209 = smul.addr %s208, 8
        %s210 = scalar_lea.vmem %s0, %s209
      $region40: #{block_forward.1} parent=35 // pred_fallthru
        _
    $region36: #{block_forward.1} parent=5 // pred_fallthru
      _
    %p211 = scmp.le.s32.totalorder 1, %s12
    %p212 = scmp.lt.s32.totalorder %s12, 3
    %p213 = pnand %p211, %p212
    %p214 = pneg %p213
    // Predicated region
    $region41: #{block_forward.1} parent=5 // pred_check
      _
    $region42: #{block_forward.1} parent=5 // pred_check_branch
      %216 = sbr.rel (%p213) target = $region44
    $region43: #{block_forward.1} parent=5 // pred_region
      %s217 = ssub.s32 %s12, 1
      %p218 = scmp.lt.s32.totalorder %s17, 1
      %s219 = scalar_select %p218, %s17, 1
      %s220 = smul.addr %s219, 8
      %s221 = smul.addr %s220, 8
      %s222 = scalar_lea.vmem %s0, %s221
      %p223 = pneg %p38
      %p224 = pneg %p35
      %p225 = pneg %p59
      %p226 = pneg %p56
      %p227 = pneg %p80
      %p228 = pneg %p77
      %p229 = pneg %p101
      %p230 = pneg %p98
      %p231 = pneg %p122
      %p232 = pneg %p119
      %p233 = pneg %p143
      %p234 = pneg %p140
      %p235 = pneg %p169
      %p236 = pneg %p166
      %p237 = scmp.lt.s32.totalorder %s17, 1
      %s238 = scalar_select %p237, %s17, 1
      %s239 = smul.addr %s238, 8
      %s240 = smul.addr %s239, 8
      %s241 = scalar_lea.vmem %s6, %s240
      %p242 = scmp.lt.s32.totalorder %s17, 1
      %s243 = scalar_select %p242, %s17, 1
      %s244 = smul.addr %s243, 8
      %s245 = smul.addr %s244, 8
      %s246 = scalar_lea.vmem %s0, %s245
      %p247 = scmp.lt.s32.totalorder %s17, 1
      %s248 = scalar_select %p247, %s17, 1
      %s249 = smul.addr %s248, 8
      %s250 = smul.addr %s249, 8
      %s251 = scalar_lea.vmem %s6, %s250
      %v252 = vld [vmem:[%s3] sm:$0xff]
      %v253 = vld [vmem:[%s3 + $0x8] sm:$0xff]
      %v254 = vld [vmem:[%s3 + $0x10] sm:$0xff]
      %v255 = vld [vmem:[%s3 + $0x18] sm:$0xff]
      %v256 = vld [vmem:[%s3 + $0x20] sm:$0xff]
      %v257 = vld [vmem:[%s3 + $0x28] sm:$0xff]
      %v258 = vld [vmem:[%s3 + $0x30] sm:$0xff]
      %v259 = vld [vmem:[%s3 + $0x38] sm:$0xff]
      %v260 = vld [vmem:[%s3 + $0x40] sm:$0xff]
      %v261 = vld [vmem:[%s3 + $0x48] sm:$0xff]
      %v262 = vld [vmem:[%s3 + $0x50] sm:$0xff]
      %v263 = vld [vmem:[%s3 + $0x58] sm:$0xff]
      %v264 = vld [vmem:[%s3 + $0x60] sm:$0xff]
      %v265 = vld [vmem:[%s3 + $0x68] sm:$0xff]
      %v266 = vld [vmem:[%s3 + $0x70] sm:$0xff]
      %v267 = vld [vmem:[%s3 + $0x78] sm:$0xff]
      %v268 = vld [vmem:[%s2] sm:$0xff]
      %v269 = vld [vmem:[%s2 + $0x8] sm:$0xff]
      %v270 = vld [vmem:[%s2 + $0x10] sm:$0xff]
      %v271 = vld [vmem:[%s2 + $0x18] sm:$0xff]
      %v272 = vld [vmem:[%s246] sm:$0xff]
      %v273 = vld [vmem:[%s246 + $0x8] sm:$0xff]
      %v274 = vld [vmem:[%s246 + $0x10] sm:$0xff]
      %v275 = vld [vmem:[%s246 + $0x18] sm:$0xff]
      %v276 = vld [vmem:[%s246 + $0x20] sm:$0xff]
      %v277 = vld [vmem:[%s246 + $0x28] sm:$0xff]
      %v278 = vld [vmem:[%s246 + $0x30] sm:$0xff]
      %v279 = vld [vmem:[%s246 + $0x38] sm:$0xff]
      %280 = vrot.lane.b32.xlu0 %v272, 3
      %v281 = vpop.permute.xlu0 %280
      %282 = vrot.lane.b32.xlu0 %v274, 3
      %v283 = vpop.permute.xlu0 %282
      %284 = vrot.lane.b32.xlu0 %v276, 3
      %v285 = vpop.permute.xlu0 %284
      %286 = vrot.lane.b32.xlu0 %v278, 3
      %v287 = vpop.permute.xlu0 %286
      %288 = vrot.lane.b32.xlu0 %v273, 3
      %v289 = vpop.permute.xlu0 %288
      %290 = vrot.lane.b32.xlu0 %v275, 3
      %v291 = vpop.permute.xlu0 %290
      %292 = vrot.lane.b32.xlu0 %v277, 3
      %v293 = vpop.permute.xlu0 %292
      %294 = vrot.lane.b32.xlu0 %v279, 3
      %v295 = vpop.permute.xlu0 %294
      %v296 = vlaneseq
      %v297 = vand.u32 %v296, 127
      %vm298 = vcmp.lt.s32.totalorder %v297, 3
      %v299 = vsel %vm298, %v281, %v289
      %v300 = vsel %vm298, %v283, %v291
      %v301 = vsel %vm298, %v285, %v293
      %v302 = vsel %vm298, %v287, %v295
      %v303 = vsel %vm298, %v289, %v281
      %v304 = vsel %vm298, %v291, %v283
      %v305 = vsel %vm298, %v293, %v285
      %v306 = vsel %vm298, %v295, %v287
      %v307 = vlaneseq
      %v308 = vshrl.u32 %v307, 7
      %v309 = vsub.s32 0, %v308
      %v310 = vrot.slane %v268, %v309
      %v311 = vlaneseq
      %v312 = vshrl.u32 %v311, 7
      %v313 = vsub.s32 0, %v312
      %v314 = vrot.slane %v269, %v313
      %v315 = vmul.f32 %v303, %v310
      %v316 = vmul.f32 %v299, %v314
      %v317 = vmul.f32 %v304, %v310
      %v318 = vmul.f32 %v300, %v314
      %v319 = vmul.f32 %v305, %v310
      %v320 = vmul.f32 %v301, %v314
      %v321 = vmul.f32 %v306, %v310
      %v322 = vmul.f32 %v302, %v314
      %323 = vst [vmem:[#allocation2] sm:$0xff] %v315
      %324 = vst [vmem:[#allocation2 + $0x8] sm:$0xff] %v316
      %325 = vst [vmem:[#allocation2 + $0x10] sm:$0xff] %v317
      %326 = vst [vmem:[#allocation2 + $0x18] sm:$0xff] %v318
      %327 = vst [vmem:[#allocation2 + $0x20] sm:$0xff] %v319
      %328 = vst [vmem:[#allocation2 + $0x28] sm:$0xff] %v320
      %329 = vst [vmem:[#allocation2 + $0x30] sm:$0xff] %v321
      %330 = vst [vmem:[#allocation2 + $0x38] sm:$0xff] %v322
      %331 = vrot.lane.b32.xlu0 %v272, 2
      %v332 = vpop.permute.xlu0 %331
      %333 = vrot.lane.b32.xlu0 %v274, 2
      %v334 = vpop.permute.xlu0 %333
      %335 = vrot.lane.b32.xlu0 %v276, 2
      %v336 = vpop.permute.xlu0 %335
      %337 = vrot.lane.b32.xlu0 %v278, 2
      %v338 = vpop.permute.xlu0 %337
      %339 = vrot.lane.b32.xlu0 %v273, 2
      %v340 = vpop.permute.xlu0 %339
      %341 = vrot.lane.b32.xlu0 %v275, 2
      %v342 = vpop.permute.xlu0 %341
      %343 = vrot.lane.b32.xlu0 %v277, 2
      %v344 = vpop.permute.xlu0 %343
      %345 = vrot.lane.b32.xlu0 %v279, 2
      %v346 = vpop.permute.xlu0 %345
      %vm347 = vcmp.lt.s32.totalorder %v297, 2
      %v348 = vsel %vm347, %v332, %v340
      %v349 = vsel %vm347, %v334, %v342
      %v350 = vsel %vm347, %v336, %v344
      %v351 = vsel %vm347, %v338, %v346
      %v352 = vsel %vm347, %v340, %v332
      %v353 = vsel %vm347, %v342, %v334
      %v354 = vsel %vm347, %v344, %v336
      %v355 = vsel %vm347, %v346, %v338
      %v356 = vlaneseq
      %v357 = vshrl.u32 %v356, 7
      %v358 = vsub.s32 1, %v357
      %v359 = vrot.slane %v268, %v358
      %v360 = vlaneseq
      %v361 = vshrl.u32 %v360, 7
      %v362 = vsub.s32 1, %v361
      %v363 = vrot.slane %v269, %v362
      %v364 = vmul.f32 %v352, %v359
      %v365 = vmul.f32 %v348, %v363
      %v366 = vmul.f32 %v353, %v359
      %v367 = vmul.f32 %v349, %v363
      %v368 = vmul.f32 %v354, %v359
      %v369 = vmul.f32 %v350, %v363
      %v370 = vmul.f32 %v355, %v359
      %v371 = vmul.f32 %v351, %v363
      %s372 = scalar_lea.vmem [#allocation2], 64
      %373 = vst [vmem:[%s372] sm:$0xff] %v364
      %374 = vst [vmem:[%s372 + $0x8] sm:$0xff] %v365
      %375 = vst [vmem:[%s372 + $0x10] sm:$0xff] %v366
      %376 = vst [vmem:[%s372 + $0x18] sm:$0xff] %v367
      %377 = vst [vmem:[%s372 + $0x20] sm:$0xff] %v368
      %378 = vst [vmem:[%s372 + $0x28] sm:$0xff] %v369
      %379 = vst [vmem:[%s372 + $0x30] sm:$0xff] %v370
      %380 = vst [vmem:[%s372 + $0x38] sm:$0xff] %v371
      %381 = vrot.lane.b32.xlu0 %v272, 1
      %v382 = vpop.permute.xlu0 %381
      %383 = vrot.lane.b32.xlu0 %v274, 1
      %v384 = vpop.permute.xlu0 %383
      %385 = vrot.lane.b32.xlu0 %v276, 1
      %v386 = vpop.permute.xlu0 %385
      %387 = vrot.lane.b32.xlu0 %v278, 1
      %v388 = vpop.permute.xlu0 %387
      %389 = vrot.lane.b32.xlu0 %v273, 1
      %v390 = vpop.permute.xlu0 %389
      %391 = vrot.lane.b32.xlu0 %v275, 1
      %v392 = vpop.permute.xlu0 %391
      %393 = vrot.lane.b32.xlu0 %v277, 1
      %v394 = vpop.permute.xlu0 %393
      %395 = vrot.lane.b32.xlu0 %v279, 1
      %v396 = vpop.permute.xlu0 %395
      %vm397 = vcmp.lt.s32.totalorder %v297, 1
      %v398 = vsel %vm397, %v382, %v390
      %v399 = vsel %vm397, %v384, %v392
      %v400 = vsel %vm397, %v386, %v394
      %v401 = vsel %vm397, %v388, %v396
      %v402 = vsel %vm397, %v390, %v382
      %v403 = vsel %vm397, %v392, %v384
      %v404 = vsel %vm397, %v394, %v386
      %v405 = vsel %vm397, %v396, %v388
      %v406 = vlaneseq
      %v407 = vshrl.u32 %v406, 7
      %v408 = vsub.s32 2, %v407
      %v409 = vrot.slane %v268, %v408
      %v410 = vlaneseq
      %v411 = vshrl.u32 %v410, 7
      %v412 = vsub.s32 2, %v411
      %v413 = vrot.slane %v269, %v412
      %v414 = vmul.f32 %v402, %v409
      %v415 = vmul.f32 %v398, %v413
      %v416 = vmul.f32 %v403, %v409
      %v417 = vmul.f32 %v399, %v413
      %v418 = vmul.f32 %v404, %v409
      %v419 = vmul.f32 %v400, %v413
      %v420 = vmul.f32 %v405, %v409
      %v421 = vmul.f32 %v401, %v413
      %s422 = scalar_lea.vmem [#allocation2], 128
      %423 = vst [vmem:[%s422] sm:$0xff] %v414
      %424 = vst [vmem:[%s422 + $0x8] sm:$0xff] %v415
      %425 = vst [vmem:[%s422 + $0x10] sm:$0xff] %v416
      %426 = vst [vmem:[%s422 + $0x18] sm:$0xff] %v417
      %427 = vst [vmem:[%s422 + $0x20] sm:$0xff] %v418
      %428 = vst [vmem:[%s422 + $0x28] sm:$0xff] %v419
      %429 = vst [vmem:[%s422 + $0x30] sm:$0xff] %v420
      %430 = vst [vmem:[%s422 + $0x38] sm:$0xff] %v421
      %s431 = scalar_lea.vmem [#allocation2], 192
      %432 = vst [vmem:[%s431] sm:$0xff] %v272
      %433 = vst [vmem:[%s431 + $0x8] sm:$0xff] %v273
      %434 = vst [vmem:[%s431 + $0x10] sm:$0xff] %v274
      %435 = vst [vmem:[%s431 + $0x18] sm:$0xff] %v275
      %436 = vst [vmem:[%s431 + $0x20] sm:$0xff] %v276
      %437 = vst [vmem:[%s431 + $0x28] sm:$0xff] %v277
      %438 = vst [vmem:[%s431 + $0x30] sm:$0xff] %v278
      %439 = vst [vmem:[%s431 + $0x38] sm:$0xff] %v279
      %440 = vrot.lane.b32.xlu0 %v272, 127
      %v441 = vpop.permute.xlu0 %440
      %442 = vrot.lane.b32.xlu0 %v274, 127
      %v443 = vpop.permute.xlu0 %442
      %444 = vrot.lane.b32.xlu0 %v276, 127
      %v445 = vpop.permute.xlu0 %444
      %446 = vrot.lane.b32.xlu0 %v278, 127
      %v447 = vpop.permute.xlu0 %446
      %448 = vrot.lane.b32.xlu0 %v273, 127
      %v449 = vpop.permute.xlu0 %448
      %450 = vrot.lane.b32.xlu0 %v275, 127
      %v451 = vpop.permute.xlu0 %450
      %452 = vrot.lane.b32.xlu0 %v277, 127
      %v453 = vpop.permute.xlu0 %452
      %454 = vrot.lane.b32.xlu0 %v279, 127
      %v455 = vpop.permute.xlu0 %454
      %vm456 = vcmp.lt.s32.totalorder %v297, 127
      %v457 = vsel %vm456, %v441, %v449
      %v458 = vsel %vm456, %v443, %v451
      %v459 = vsel %vm456, %v445, %v453
      %v460 = vsel %vm456, %v447, %v455
      %v461 = vsel %vm456, %v449, %v441
      %v462 = vsel %vm456, %v451, %v443
      %v463 = vsel %vm456, %v453, %v445
      %v464 = vsel %vm456, %v455, %v447
      %v465 = vlaneseq
      %v466 = vshrl.u32 %v465, 7
      %v467 = vsub.s32 4, %v466
      %v468 = vrot.slane %v268, %v467
      %v469 = vlaneseq
      %v470 = vshrl.u32 %v469, 7
      %v471 = vsub.s32 4, %v470
      %v472 = vrot.slane %v269, %v471
      %v473 = vmul.f32 %v457, %v468
      %v474 = vmul.f32 %v461, %v472
      %v475 = vmul.f32 %v458, %v468
      %v476 = vmul.f32 %v462, %v472
      %v477 = vmul.f32 %v459, %v468
      %v478 = vmul.f32 %v463, %v472
      %v479 = vmul.f32 %v460, %v468
      %v480 = vmul.f32 %v464, %v472
      %s481 = scalar_lea.vmem [#allocation2], 256
      %482 = vst [vmem:[%s481] sm:$0xff] %v473
      %483 = vst [vmem:[%s481 + $0x8] sm:$0xff] %v474
      %484 = vst [vmem:[%s481 + $0x10] sm:$0xff] %v475
      %485 = vst [vmem:[%s481 + $0x18] sm:$0xff] %v476
      %486 = vst [vmem:[%s481 + $0x20] sm:$0xff] %v477
      %487 = vst [vmem:[%s481 + $0x28] sm:$0xff] %v478
      %488 = vst [vmem:[%s481 + $0x30] sm:$0xff] %v479
      %489 = vst [vmem:[%s481 + $0x38] sm:$0xff] %v480
      %490 = vrot.lane.b32.xlu0 %v272, 126
      %v491 = vpop.permute.xlu0 %490
      %492 = vrot.lane.b32.xlu0 %v274, 126
      %v493 = vpop.permute.xlu0 %492
      %494 = vrot.lane.b32.xlu0 %v276, 126
      %v495 = vpop.permute.xlu0 %494
      %496 = vrot.lane.b32.xlu0 %v278, 126
      %v497 = vpop.permute.xlu0 %496
      %498 = vrot.lane.b32.xlu0 %v273, 126
      %v499 = vpop.permute.xlu0 %498
      %500 = vrot.lane.b32.xlu0 %v275, 126
      %v501 = vpop.permute.xlu0 %500
      %502 = vrot.lane.b32.xlu0 %v277, 126
      %v503 = vpop.permute.xlu0 %502
      %504 = vrot.lane.b32.xlu0 %v279, 126
      %v505 = vpop.permute.xlu0 %504
      %vm506 = vcmp.lt.s32.totalorder %v297, 126
      %v507 = vsel %vm506, %v491, %v499
      %v508 = vsel %vm506, %v493, %v501
      %v509 = vsel %vm506, %v495, %v503
      %v510 = vsel %vm506, %v497, %v505
      %v511 = vsel %vm506, %v499, %v491
      %v512 = vsel %vm506, %v501, %v493
      %v513 = vsel %vm506, %v503, %v495
      %v514 = vsel %vm506, %v505, %v497
      %v515 = vlaneseq
      %v516 = vshrl.u32 %v515, 7
      %v517 = vsub.s32 5, %v516
      %v518 = vrot.slane %v268, %v517
      %v519 = vlaneseq
      %v520 = vshrl.u32 %v519, 7
      %v521 = vsub.s32 5, %v520
      %v522 = vrot.slane %v269, %v521
      %v523 = vmul.f32 %v507, %v518
      %v524 = vmul.f32 %v511, %v522
      %v525 = vmul.f32 %v508, %v518
      %v526 = vmul.f32 %v512, %v522
      %v527 = vmul.f32 %v509, %v518
      %v528 = vmul.f32 %v513, %v522
      %v529 = vmul.f32 %v510, %v518
      %v530 = vmul.f32 %v514, %v522
      %s531 = scalar_lea.vmem [#allocation2], 320
      %532 = vst [vmem:[%s531] sm:$0xff] %v523
      %533 = vst [vmem:[%s531 + $0x8] sm:$0xff] %v524
      %534 = vst [vmem:[%s531 + $0x10] sm:$0xff] %v525
      %535 = vst [vmem:[%s531 + $0x18] sm:$0xff] %v526
      %536 = vst [vmem:[%s531 + $0x20] sm:$0xff] %v527
      %537 = vst [vmem:[%s531 + $0x28] sm:$0xff] %v528
      %538 = vst [vmem:[%s531 + $0x30] sm:$0xff] %v529
      %539 = vst [vmem:[%s531 + $0x38] sm:$0xff] %v530
      %540 = vrot.lane.b32.xlu0 %v272, 125
      %v541 = vpop.permute.xlu0 %540
      %542 = vrot.lane.b32.xlu0 %v274, 125
      %v543 = vpop.permute.xlu0 %542
      %544 = vrot.lane.b32.xlu0 %v276, 125
      %v545 = vpop.permute.xlu0 %544
      %546 = vrot.lane.b32.xlu0 %v278, 125
      %v547 = vpop.permute.xlu0 %546
      %548 = vrot.lane.b32.xlu0 %v273, 125
      %v549 = vpop.permute.xlu0 %548
      %550 = vrot.lane.b32.xlu0 %v275, 125
      %v551 = vpop.permute.xlu0 %550
      %552 = vrot.lane.b32.xlu0 %v277, 125
      %v553 = vpop.permute.xlu0 %552
      %554 = vrot.lane.b32.xlu0 %v279, 125
      %v555 = vpop.permute.xlu0 %554
      %vm556 = vcmp.lt.s32.totalorder %v297, 125
      %v557 = vsel %vm556, %v541, %v549
      %v558 = vsel %vm556, %v543, %v551
      %v559 = vsel %vm556, %v545, %v553
      %v560 = vsel %vm556, %v547, %v555
      %v561 = vsel %vm556, %v549, %v541
      %v562 = vsel %vm556, %v551, %v543
      %v563 = vsel %vm556, %v553, %v545
      %v564 = vsel %vm556, %v555, %v547
      %v565 = vlaneseq
      %v566 = vshrl.u32 %v565, 7
      %v567 = vsub.s32 6, %v566
      %v568 = vrot.slane %v268, %v567
      %v569 = vlaneseq
      %v570 = vshrl.u32 %v569, 7
      %v571 = vsub.s32 6, %v570
      %v572 = vrot.slane %v269, %v571
      %v573 = vmul.f32 %v557, %v568
      %v574 = vmul.f32 %v561, %v572
      %v575 = vmul.f32 %v558, %v568
      %v576 = vmul.f32 %v562, %v572
      %v577 = vmul.f32 %v559, %v568
      %v578 = vmul.f32 %v563, %v572
      %v579 = vmul.f32 %v560, %v568
      %v580 = vmul.f32 %v564, %v572
      %s581 = scalar_lea.vmem [#allocation2], 384
      %582 = vst [vmem:[%s581] sm:$0xff] %v573
      %583 = vst [vmem:[%s581 + $0x8] sm:$0xff] %v574
      %584 = vst [vmem:[%s581 + $0x10] sm:$0xff] %v575
      %585 = vst [vmem:[%s581 + $0x18] sm:$0xff] %v576
      %586 = vst [vmem:[%s581 + $0x20] sm:$0xff] %v577
      %587 = vst [vmem:[%s581 + $0x28] sm:$0xff] %v578
      %588 = vst [vmem:[%s581 + $0x30] sm:$0xff] %v579
      %589 = vst [vmem:[%s581 + $0x38] sm:$0xff] %v580
      %v590 = vld [vmem:[%s1] sm:$0xff]
      %v591 = vld [vmem:[%s1 + $0x8] sm:$0xff]
      %v592 = vld [vmem:[%s1 + $0x10] sm:$0xff]
      %v593 = vld [vmem:[%s1 + $0x18] sm:$0xff]
      %v594 = vld [vmem:[#allocation2] sm:$0xff]
      %v595 = vld [vmem:[#allocation2 + $0x8] sm:$0xff]
      %v596 = vld [vmem:[#allocation2 + $0x10] sm:$0xff]
      %v597 = vld [vmem:[#allocation2 + $0x18] sm:$0xff]
      %v598 = vld [vmem:[#allocation2 + $0x20] sm:$0xff]
      %v599 = vld [vmem:[#allocation2 + $0x28] sm:$0xff]
      %v600 = vld [vmem:[#allocation2 + $0x30] sm:$0xff]
      %v601 = vld [vmem:[#allocation2 + $0x38] sm:$0xff]
      %603 = vset.pattern.permute.xlu0 0
      %604 = vperm.xlu0 %603, %v590
      %v605 = vpop.permute.xlu0 %604
      %608 = vset.pattern.permute.xlu0 0
      %609 = vperm.xlu0 %608, %v591
      %v610 = vpop.permute.xlu0 %609
      %613 = vset.pattern.permute.xlu0 0
      %614 = vperm.xlu0 %613, %v592
      %v615 = vpop.permute.xlu0 %614
      %618 = vset.pattern.permute.xlu0 0
      %619 = vperm.xlu0 %618, %v593
      %v620 = vpop.permute.xlu0 %619
      %v622 = vmul.f32 %v594, %v605
      %v623 = vmul.f32 %v595, %v605
      %v624 = vmul.f32 %v596, %v610
      %v625 = vmul.f32 %v597, %v610
      %v626 = vmul.f32 %v598, %v615
      %v627 = vmul.f32 %v599, %v615
      %v628 = vmul.f32 %v600, %v620
      %v629 = vmul.f32 %v601, %v620
      %v630 = vld [vmem:[%s372] sm:$0xff]
      %v631 = vld [vmem:[%s372 + $0x8] sm:$0xff]
      %v632 = vld [vmem:[%s372 + $0x10] sm:$0xff]
      %v633 = vld [vmem:[%s372 + $0x18] sm:$0xff]
      %v634 = vld [vmem:[%s372 + $0x20] sm:$0xff]
      %v635 = vld [vmem:[%s372 + $0x28] sm:$0xff]
      %v636 = vld [vmem:[%s372 + $0x30] sm:$0xff]
      %v637 = vld [vmem:[%s372 + $0x38] sm:$0xff]
      %638 = vset.pattern.permute.xlu0 1
      %639 = vperm.xlu0 %638, %v590
      %v640 = vpop.permute.xlu0 %639
      %642 = vset.pattern.permute.xlu0 1
      %643 = vperm.xlu0 %642, %v591
      %v644 = vpop.permute.xlu0 %643
      %646 = vset.pattern.permute.xlu0 1
      %647 = vperm.xlu0 %646, %v592
      %v648 = vpop.permute.xlu0 %647
      %650 = vset.pattern.permute.xlu0 1
      %651 = vperm.xlu0 %650, %v593
      %v652 = vpop.permute.xlu0 %651
      %v654 = vmul.f32 %v630, %v640
      %v655 = vmul.f32 %v631, %v640
      %v656 = vmul.f32 %v632, %v644
      %v657 = vmul.f32 %v633, %v644
      %v658 = vmul.f32 %v634, %v648
      %v659 = vmul.f32 %v635, %v648
      %v660 = vmul.f32 %v636, %v652
      %v661 = vmul.f32 %v637, %v652
      %v662 = vadd.f32 %v622, %v654
      %v663 = vadd.f32 %v623, %v655
      %v664 = vadd.f32 %v624, %v656
      %v665 = vadd.f32 %v625, %v657
      %v666 = vadd.f32 %v626, %v658
      %v667 = vadd.f32 %v627, %v659
      %v668 = vadd.f32 %v628, %v660
      %v669 = vadd.f32 %v629, %v661
      %v670 = vld [vmem:[%s422] sm:$0xff]
      %v671 = vld [vmem:[%s422 + $0x8] sm:$0xff]
      %v672 = vld [vmem:[%s422 + $0x10] sm:$0xff]
      %v673 = vld [vmem:[%s422 + $0x18] sm:$0xff]
      %v674 = vld [vmem:[%s422 + $0x20] sm:$0xff]
      %v675 = vld [vmem:[%s422 + $0x28] sm:$0xff]
      %v676 = vld [vmem:[%s422 + $0x30] sm:$0xff]
      %v677 = vld [vmem:[%s422 + $0x38] sm:$0xff]
      %678 = vset.pattern.permute.xlu0 2
      %679 = vperm.xlu0 %678, %v590
      %v680 = vpop.permute.xlu0 %679
      %682 = vset.pattern.permute.xlu0 2
      %683 = vperm.xlu0 %682, %v591
      %v684 = vpop.permute.xlu0 %683
      %686 = vset.pattern.permute.xlu0 2
      %687 = vperm.xlu0 %686, %v592
      %v688 = vpop.permute.xlu0 %687
      %690 = vset.pattern.permute.xlu0 2
      %691 = vperm.xlu0 %690, %v593
      %v692 = vpop.permute.xlu0 %691
      %v694 = vmul.f32 %v670, %v680
      %v695 = vmul.f32 %v671, %v680
      %v696 = vmul.f32 %v672, %v684
      %v697 = vmul.f32 %v673, %v684
      %v698 = vmul.f32 %v674, %v688
      %v699 = vmul.f32 %v675, %v688
      %v700 = vmul.f32 %v676, %v692
      %v701 = vmul.f32 %v677, %v692
      %v702 = vadd.f32 %v662, %v694
      %v703 = vadd.f32 %v663, %v695
      %v704 = vadd.f32 %v664, %v696
      %v705 = vadd.f32 %v665, %v697
      %v706 = vadd.f32 %v666, %v698
      %v707 = vadd.f32 %v667, %v699
      %v708 = vadd.f32 %v668, %v700
      %v709 = vadd.f32 %v669, %v701
      %v710 = vld [vmem:[%s431] sm:$0xff]
      %v711 = vld [vmem:[%s431 + $0x8] sm:$0xff]
      %v712 = vld [vmem:[%s431 + $0x10] sm:$0xff]
      %v713 = vld [vmem:[%s431 + $0x18] sm:$0xff]
      %v714 = vld [vmem:[%s431 + $0x20] sm:$0xff]
      %v715 = vld [vmem:[%s431 + $0x28] sm:$0xff]
      %v716 = vld [vmem:[%s431 + $0x30] sm:$0xff]
      %v717 = vld [vmem:[%s431 + $0x38] sm:$0xff]
      %718 = vset.pattern.permute.xlu0 3
      %719 = vperm.xlu0 %718, %v590
      %v720 = vpop.permute.xlu0 %719
      %722 = vset.pattern.permute.xlu0 3
      %723 = vperm.xlu0 %722, %v591
      %v724 = vpop.permute.xlu0 %723
      %726 = vset.pattern.permute.xlu0 3
      %727 = vperm.xlu0 %726, %v592
      %v728 = vpop.permute.xlu0 %727
      %730 = vset.pattern.permute.xlu0 3
      %731 = vperm.xlu0 %730, %v593
      %v732 = vpop.permute.xlu0 %731
      %v734 = vmul.f32 %v710, %v720
      %v735 = vmul.f32 %v711, %v720
      %v736 = vmul.f32 %v712, %v724
      %v737 = vmul.f32 %v713, %v724
      %v738 = vmul.f32 %v714, %v728
      %v739 = vmul.f32 %v715, %v728
      %v740 = vmul.f32 %v716, %v732
      %v741 = vmul.f32 %v717, %v732
      %v742 = vadd.f32 %v702, %v734
      %v743 = vadd.f32 %v703, %v735
      %v744 = vadd.f32 %v704, %v736
      %v745 = vadd.f32 %v705, %v737
      %v746 = vadd.f32 %v706, %v738
      %v747 = vadd.f32 %v707, %v739
      %v748 = vadd.f32 %v708, %v740
      %v749 = vadd.f32 %v709, %v741
      %v750 = vld [vmem:[%s481] sm:$0xff]
      %v751 = vld [vmem:[%s481 + $0x8] sm:$0xff]
      %v752 = vld [vmem:[%s481 + $0x10] sm:$0xff]
      %v753 = vld [vmem:[%s481 + $0x18] sm:$0xff]
      %v754 = vld [vmem:[%s481 + $0x20] sm:$0xff]
      %v755 = vld [vmem:[%s481 + $0x28] sm:$0xff]
      %v756 = vld [vmem:[%s481 + $0x30] sm:$0xff]
      %v757 = vld [vmem:[%s481 + $0x38] sm:$0xff]
      %758 = vset.pattern.permute.xlu0 4
      %759 = vperm.xlu0 %758, %v590
      %v760 = vpop.permute.xlu0 %759
      %762 = vset.pattern.permute.xlu0 4
      %763 = vperm.xlu0 %762, %v591
      %v764 = vpop.permute.xlu0 %763
      %766 = vset.pattern.permute.xlu0 4
      %767 = vperm.xlu0 %766, %v592
      %v768 = vpop.permute.xlu0 %767
      %770 = vset.pattern.permute.xlu0 4
      %771 = vperm.xlu0 %770, %v593
      %v772 = vpop.permute.xlu0 %771
      %v774 = vmul.f32 %v750, %v760
      %v775 = vmul.f32 %v751, %v760
      %v776 = vmul.f32 %v752, %v764
      %v777 = vmul.f32 %v753, %v764
      %v778 = vmul.f32 %v754, %v768
      %v779 = vmul.f32 %v755, %v768
      %v780 = vmul.f32 %v756, %v772
      %v781 = vmul.f32 %v757, %v772
      %v782 = vadd.f32 %v742, %v774
      %v783 = vadd.f32 %v743, %v775
      %v784 = vadd.f32 %v744, %v776
      %v785 = vadd.f32 %v745, %v777
      %v786 = vadd.f32 %v746, %v778
      %v787 = vadd.f32 %v747, %v779
      %v788 = vadd.f32 %v748, %v780
      %v789 = vadd.f32 %v749, %v781
      %v790 = vld [vmem:[%s531] sm:$0xff]
      %v791 = vld [vmem:[%s531 + $0x8] sm:$0xff]
      %v792 = vld [vmem:[%s531 + $0x10] sm:$0xff]
      %v793 = vld [vmem:[%s531 + $0x18] sm:$0xff]
      %v794 = vld [vmem:[%s531 + $0x20] sm:$0xff]
      %v795 = vld [vmem:[%s531 + $0x28] sm:$0xff]
      %v796 = vld [vmem:[%s531 + $0x30] sm:$0xff]
      %v797 = vld [vmem:[%s531 + $0x38] sm:$0xff]
      %798 = vset.pattern.permute.xlu0 5
      %799 = vperm.xlu0 %798, %v590
      %v800 = vpop.permute.xlu0 %799
      %802 = vset.pattern.permute.xlu0 5
      %803 = vperm.xlu0 %802, %v591
      %v804 = vpop.permute.xlu0 %803
      %806 = vset.pattern.permute.xlu0 5
      %807 = vperm.xlu0 %806, %v592
      %v808 = vpop.permute.xlu0 %807
      %810 = vset.pattern.permute.xlu0 5
      %811 = vperm.xlu0 %810, %v593
      %v812 = vpop.permute.xlu0 %811
      %v814 = vmul.f32 %v790, %v800
      %v815 = vmul.f32 %v791, %v800
      %v816 = vmul.f32 %v792, %v804
      %v817 = vmul.f32 %v793, %v804
      %v818 = vmul.f32 %v794, %v808
      %v819 = vmul.f32 %v795, %v808
      %v820 = vmul.f32 %v796, %v812
      %v821 = vmul.f32 %v797, %v812
      %v822 = vadd.f32 %v782, %v814
      %v823 = vadd.f32 %v783, %v815
      %v824 = vadd.f32 %v784, %v816
      %v825 = vadd.f32 %v785, %v817
      %v826 = vadd.f32 %v786, %v818
      %v827 = vadd.f32 %v787, %v819
      %v828 = vadd.f32 %v788, %v820
      %v829 = vadd.f32 %v789, %v821
      %v830 = vld [vmem:[%s581] sm:$0xff]
      %v831 = vld [vmem:[%s581 + $0x8] sm:$0xff]
      %v832 = vld [vmem:[%s581 + $0x10] sm:$0xff]
      %v833 = vld [vmem:[%s581 + $0x18] sm:$0xff]
      %v834 = vld [vmem:[%s581 + $0x20] sm:$0xff]
      %v835 = vld [vmem:[%s581 + $0x28] sm:$0xff]
      %v836 = vld [vmem:[%s581 + $0x30] sm:$0xff]
      %v837 = vld [vmem:[%s581 + $0x38] sm:$0xff]
      %838 = vset.pattern.permute.xlu0 6
      %839 = vperm.xlu0 %838, %v590
      %v840 = vpop.permute.xlu0 %839
      %842 = vset.pattern.permute.xlu0 6
      %843 = vperm.xlu0 %842, %v591
      %v844 = vpop.permute.xlu0 %843
      %846 = vset.pattern.permute.xlu0 6
      %847 = vperm.xlu0 %846, %v592
      %v848 = vpop.permute.xlu0 %847
      %850 = vset.pattern.permute.xlu0 6
      %851 = vperm.xlu0 %850, %v593
      %v852 = vpop.permute.xlu0 %851
      %v854 = vmul.f32 %v830, %v840
      %v855 = vmul.f32 %v831, %v840
      %v856 = vmul.f32 %v832, %v844
      %v857 = vmul.f32 %v833, %v844
      %v858 = vmul.f32 %v834, %v848
      %v859 = vmul.f32 %v835, %v848
      %v860 = vmul.f32 %v836, %v852
      %v861 = vmul.f32 %v837, %v852
      %v862 = vadd.f32 %v822, %v854
      %v863 = vadd.f32 %v823, %v855
      %v864 = vadd.f32 %v824, %v856
      %v865 = vadd.f32 %v825, %v857
      %v866 = vadd.f32 %v826, %v858
      %v867 = vadd.f32 %v827, %v859
      %v868 = vadd.f32 %v828, %v860
      %v869 = vadd.f32 %v829, %v861
      %870 = vrot.lane.b32.xlu0 %v862, 48
      %v871 = vpop.permute.xlu0 %870
      %872 = vrot.lane.b32.xlu0 %v864, 48
      %v873 = vpop.permute.xlu0 %872
      %874 = vrot.lane.b32.xlu0 %v866, 48
      %v875 = vpop.permute.xlu0 %874
      %876 = vrot.lane.b32.xlu0 %v868, 48
      %v877 = vpop.permute.xlu0 %876
      %878 = vrot.lane.b32.xlu0 %v863, 48
      %v879 = vpop.permute.xlu0 %878
      %880 = vrot.lane.b32.xlu0 %v865, 48
      %v881 = vpop.permute.xlu0 %880
      %882 = vrot.lane.b32.xlu0 %v867, 48
      %v883 = vpop.permute.xlu0 %882
      %884 = vrot.lane.b32.xlu0 %v869, 48
      %v885 = vpop.permute.xlu0 %884
      %vm886 = vcmp.lt.s32.totalorder %v297, 48
      %v887 = vsel %vm886, %v871, %v879
      %v888 = vsel %vm886, %v873, %v881
      %v889 = vsel %vm886, %v875, %v883
      %v890 = vsel %vm886, %v877, %v885
      %v891 = vsel %vm886, %v879, %v871
      %v892 = vsel %vm886, %v881, %v873
      %v893 = vsel %vm886, %v883, %v875
      %v894 = vsel %vm886, %v885, %v877
      %v895 = vlaneseq
      %v896 = vshrl.u32 %v895, 7
      %v897 = vsub.s32 0, %v896
      %v898 = vrot.slane %v270, %v897
      %v899 = vlaneseq
      %v900 = vshrl.u32 %v899, 7
      %v901 = vsub.s32 0, %v900
      %v902 = vrot.slane %v271, %v901
      %v903 = vmul.f32 %v891, %v898
      %v904 = vmul.f32 %v887, %v902
      %v905 = vmul.f32 %v892, %v898
      %v906 = vmul.f32 %v888, %v902
      %v907 = vmul.f32 %v893, %v898
      %v908 = vmul.f32 %v889, %v902
      %v909 = vmul.f32 %v894, %v898
      %v910 = vmul.f32 %v890, %v902
      %v911 = vadd.f32 %v903, 0.0
      %v912 = vadd.f32 %v904, 0.0
      %v913 = vadd.f32 %v905, 0.0
      %v914 = vadd.f32 %v906, 0.0
      %v915 = vadd.f32 %v907, 0.0
      %v916 = vadd.f32 %v908, 0.0
      %v917 = vadd.f32 %v909, 0.0
      %v918 = vadd.f32 %v910, 0.0
      %919 = vset.pattern.permute.xlu0 7
      %920 = vperm.xlu0 %919, %v590
      %v921 = vpop.permute.xlu0 %920
      %923 = vset.pattern.permute.xlu0 7
      %924 = vperm.xlu0 %923, %v591
      %v925 = vpop.permute.xlu0 %924
      %927 = vset.pattern.permute.xlu0 7
      %928 = vperm.xlu0 %927, %v592
      %v929 = vpop.permute.xlu0 %928
      %931 = vset.pattern.permute.xlu0 7
      %932 = vperm.xlu0 %931, %v593
      %v933 = vpop.permute.xlu0 %932
      %v935 = vmul.f32 %v594, %v921
      %v936 = vmul.f32 %v595, %v921
      %v937 = vmul.f32 %v596, %v925
      %v938 = vmul.f32 %v597, %v925
      %v939 = vmul.f32 %v598, %v929
      %v940 = vmul.f32 %v599, %v929
      %v941 = vmul.f32 %v600, %v933
      %v942 = vmul.f32 %v601, %v933
      %943 = vset.pattern.permute.xlu0 8
      %944 = vperm.xlu0 %943, %v590
      %v945 = vpop.permute.xlu0 %944
      %947 = vset.pattern.permute.xlu0 8
      %948 = vperm.xlu0 %947, %v591
      %v949 = vpop.permute.xlu0 %948
      %951 = vset.pattern.permute.xlu0 8
      %952 = vperm.xlu0 %951, %v592
      %v953 = vpop.permute.xlu0 %952
      %955 = vset.pattern.permute.xlu0 8
      %956 = vperm.xlu0 %955, %v593
      %v957 = vpop.permute.xlu0 %956
      %v959 = vmul.f32 %v630, %v945
      %v960 = vmul.f32 %v631, %v945
      %v961 = vmul.f32 %v632, %v949
      %v962 = vmul.f32 %v633, %v949
      %v963 = vmul.f32 %v634, %v953
      %v964 = vmul.f32 %v635, %v953
      %v965 = vmul.f32 %v636, %v957
      %v966 = vmul.f32 %v637, %v957
      %v967 = vadd.f32 %v935, %v959
      %v968 = vadd.f32 %v936, %v960
      %v969 = vadd.f32 %v937, %v961
      %v970 = vadd.f32 %v938, %v962
      %v971 = vadd.f32 %v939, %v963
      %v972 = vadd.f32 %v940, %v964
      %v973 = vadd.f32 %v941, %v965
      %v974 = vadd.f32 %v942, %v966
      %975 = vset.pattern.permute.xlu0 9
      %976 = vperm.xlu0 %975, %v590
      %v977 = vpop.permute.xlu0 %976
      %979 = vset.pattern.permute.xlu0 9
      %980 = vperm.xlu0 %979, %v591
      %v981 = vpop.permute.xlu0 %980
      %983 = vset.pattern.permute.xlu0 9
      %984 = vperm.xlu0 %983, %v592
      %v985 = vpop.permute.xlu0 %984
      %987 = vset.pattern.permute.xlu0 9
      %988 = vperm.xlu0 %987, %v593
      %v989 = vpop.permute.xlu0 %988
      %v991 = vmul.f32 %v670, %v977
      %v992 = vmul.f32 %v671, %v977
      %v993 = vmul.f32 %v672, %v981
      %v994 = vmul.f32 %v673, %v981
      %v995 = vmul.f32 %v674, %v985
      %v996 = vmul.f32 %v675, %v985
      %v997 = vmul.f32 %v676, %v989
      %v998 = vmul.f32 %v677, %v989
      %v999 = vadd.f32 %v967, %v991
      %v1000 = vadd.f32 %v968, %v992
      %v1001 = vadd.f32 %v969, %v993
      %v1002 = vadd.f32 %v970, %v994
      %v1003 = vadd.f32 %v971, %v995
      %v1004 = vadd.f32 %v972, %v996
      %v1005 = vadd.f32 %v973, %v997
      %v1006 = vadd.f32 %v974, %v998
      %1007 = vset.pattern.permute.xlu0 10
      %1008 = vperm.xlu0 %1007, %v590
      %v1009 = vpop.permute.xlu0 %1008
      %1011 = vset.pattern.permute.xlu0 10
      %1012 = vperm.xlu0 %1011, %v591
      %v1013 = vpop.permute.xlu0 %1012
      %1015 = vset.pattern.permute.xlu0 10
      %1016 = vperm.xlu0 %1015, %v592
      %v1017 = vpop.permute.xlu0 %1016
      %1019 = vset.pattern.permute.xlu0 10
      %1020 = vperm.xlu0 %1019, %v593
      %v1021 = vpop.permute.xlu0 %1020
      %v1023 = vmul.f32 %v710, %v1009
      %v1024 = vmul.f32 %v711, %v1009
      %v1025 = vmul.f32 %v712, %v1013
      %v1026 = vmul.f32 %v713, %v1013
      %v1027 = vmul.f32 %v714, %v1017
      %v1028 = vmul.f32 %v715, %v1017
      %v1029 = vmul.f32 %v716, %v1021
      %v1030 = vmul.f32 %v717, %v1021
      %v1031 = vadd.f32 %v999, %v1023
      %v1032 = vadd.f32 %v1000, %v1024
      %v1033 = vadd.f32 %v1001, %v1025
      %v1034 = vadd.f32 %v1002, %v1026
      %v1035 = vadd.f32 %v1003, %v1027
      %v1036 = vadd.f32 %v1004, %v1028
      %v1037 = vadd.f32 %v1005, %v1029
      %v1038 = vadd.f32 %v1006, %v1030
      %1039 = vset.pattern.permute.xlu0 11
      %1040 = vperm.xlu0 %1039, %v590
      %v1041 = vpop.permute.xlu0 %1040
      %1043 = vset.pattern.permute.xlu0 11
      %1044 = vperm.xlu0 %1043, %v591
      %v1045 = vpop.permute.xlu0 %1044
      %1047 = vset.pattern.permute.xlu0 11
      %1048 = vperm.xlu0 %1047, %v592
      %v1049 = vpop.permute.xlu0 %1048
      %1051 = vset.pattern.permute.xlu0 11
      %1052 = vperm.xlu0 %1051, %v593
      %v1053 = vpop.permute.xlu0 %1052
      %v1055 = vmul.f32 %v750, %v1041
      %v1056 = vmul.f32 %v751, %v1041
      %v1057 = vmul.f32 %v752, %v1045
      %v1058 = vmul.f32 %v753, %v1045
      %v1059 = vmul.f32 %v754, %v1049
      %v1060 = vmul.f32 %v755, %v1049
      %v1061 = vmul.f32 %v756, %v1053
      %v1062 = vmul.f32 %v757, %v1053
      %v1063 = vadd.f32 %v1031, %v1055
      %v1064 = vadd.f32 %v1032, %v1056
      %v1065 = vadd.f32 %v1033, %v1057
      %v1066 = vadd.f32 %v1034, %v1058
      %v1067 = vadd.f32 %v1035, %v1059
      %v1068 = vadd.f32 %v1036, %v1060
      %v1069 = vadd.f32 %v1037, %v1061
      %v1070 = vadd.f32 %v1038, %v1062
      %1071 = vset.pattern.permute.xlu0 12
      %1072 = vperm.xlu0 %1071, %v590
      %v1073 = vpop.permute.xlu0 %1072
      %1075 = vset.pattern.permute.xlu0 12
      %1076 = vperm.xlu0 %1075, %v591
      %v1077 = vpop.permute.xlu0 %1076
      %1079 = vset.pattern.permute.xlu0 12
      %1080 = vperm.xlu0 %1079, %v592
      %v1081 = vpop.permute.xlu0 %1080
      %1083 = vset.pattern.permute.xlu0 12
      %1084 = vperm.xlu0 %1083, %v593
      %v1085 = vpop.permute.xlu0 %1084
      %v1087 = vmul.f32 %v790, %v1073
      %v1088 = vmul.f32 %v791, %v1073
      %v1089 = vmul.f32 %v792, %v1077
      %v1090 = vmul.f32 %v793, %v1077
      %v1091 = vmul.f32 %v794, %v1081
      %v1092 = vmul.f32 %v795, %v1081
      %v1093 = vmul.f32 %v796, %v1085
      %v1094 = vmul.f32 %v797, %v1085
      %v1095 = vadd.f32 %v1063, %v1087
      %v1096 = vadd.f32 %v1064, %v1088
      %v1097 = vadd.f32 %v1065, %v1089
      %v1098 = vadd.f32 %v1066, %v1090
      %v1099 = vadd.f32 %v1067, %v1091
      %v1100 = vadd.f32 %v1068, %v1092
      %v1101 = vadd.f32 %v1069, %v1093
      %v1102 = vadd.f32 %v1070, %v1094
      %1103 = vset.pattern.permute.xlu0 13
      %1104 = vperm.xlu0 %1103, %v590
      %v1105 = vpop.permute.xlu0 %1104
      %1107 = vset.pattern.permute.xlu0 13
      %1108 = vperm.xlu0 %1107, %v591
      %v1109 = vpop.permute.xlu0 %1108
      %1111 = vset.pattern.permute.xlu0 13
      %1112 = vperm.xlu0 %1111, %v592
      %v1113 = vpop.permute.xlu0 %1112
      %1115 = vset.pattern.permute.xlu0 13
      %1116 = vperm.xlu0 %1115, %v593
      %v1117 = vpop.permute.xlu0 %1116
      %v1119 = vmul.f32 %v830, %v1105
      %v1120 = vmul.f32 %v831, %v1105
      %v1121 = vmul.f32 %v832, %v1109
      %v1122 = vmul.f32 %v833, %v1109
      %v1123 = vmul.f32 %v834, %v1113
      %v1124 = vmul.f32 %v835, %v1113
      %v1125 = vmul.f32 %v836, %v1117
      %v1126 = vmul.f32 %v837, %v1117
      %v1127 = vadd.f32 %v1095, %v1119
      %v1128 = vadd.f32 %v1096, %v1120
      %v1129 = vadd.f32 %v1097, %v1121
      %v1130 = vadd.f32 %v1098, %v1122
      %v1131 = vadd.f32 %v1099, %v1123
      %v1132 = vadd.f32 %v1100, %v1124
      %v1133 = vadd.f32 %v1101, %v1125
      %v1134 = vadd.f32 %v1102, %v1126
      %1135 = vrot.lane.b32.xlu0 %v1127, 32
      %v1136 = vpop.permute.xlu0 %1135
      %1137 = vrot.lane.b32.xlu0 %v1129, 32
      %v1138 = vpop.permute.xlu0 %1137
      %1139 = vrot.lane.b32.xlu0 %v1131, 32
      %v1140 = vpop.permute.xlu0 %1139
      %1141 = vrot.lane.b32.xlu0 %v1133, 32
      %v1142 = vpop.permute.xlu0 %1141
      %1143 = vrot.lane.b32.xlu0 %v1128, 32
      %v1144 = vpop.permute.xlu0 %1143
      %1145 = vrot.lane.b32.xlu0 %v1130, 32
      %v1146 = vpop.permute.xlu0 %1145
      %1147 = vrot.lane.b32.xlu0 %v1132, 32
      %v1148 = vpop.permute.xlu0 %1147
      %1149 = vrot.lane.b32.xlu0 %v1134, 32
      %v1150 = vpop.permute.xlu0 %1149
      %vm1151 = vcmp.lt.s32.totalorder %v297, 32
      %v1152 = vsel %vm1151, %v1136, %v1144
      %v1153 = vsel %vm1151, %v1138, %v1146
      %v1154 = vsel %vm1151, %v1140, %v1148
      %v1155 = vsel %vm1151, %v1142, %v1150
      %v1156 = vsel %vm1151, %v1144, %v1136
      %v1157 = vsel %vm1151, %v1146, %v1138
      %v1158 = vsel %vm1151, %v1148, %v1140
      %v1159 = vsel %vm1151, %v1150, %v1142
      %v1160 = vlaneseq
      %v1161 = vshrl.u32 %v1160, 7
      %v1162 = vsub.s32 1, %v1161
      %v1163 = vrot.slane %v270, %v1162
      %v1164 = vlaneseq
      %v1165 = vshrl.u32 %v1164, 7
      %v1166 = vsub.s32 1, %v1165
      %v1167 = vrot.slane %v271, %v1166
      %v1168 = vmul.f32 %v1156, %v1163
      %v1169 = vmul.f32 %v1152, %v1167
      %v1170 = vmul.f32 %v1157, %v1163
      %v1171 = vmul.f32 %v1153, %v1167
      %v1172 = vmul.f32 %v1158, %v1163
      %v1173 = vmul.f32 %v1154, %v1167
      %v1174 = vmul.f32 %v1159, %v1163
      %v1175 = vmul.f32 %v1155, %v1167
      %v1176 = vadd.f32 %v911, %v1168
      %v1177 = vadd.f32 %v912, %v1169
      %v1178 = vadd.f32 %v913, %v1170
      %v1179 = vadd.f32 %v914, %v1171
      %v1180 = vadd.f32 %v915, %v1172
      %v1181 = vadd.f32 %v916, %v1173
      %v1182 = vadd.f32 %v917, %v1174
      %v1183 = vadd.f32 %v918, %v1175
      %1184 = vset.pattern.permute.xlu0 14
      %1185 = vperm.xlu0 %1184, %v590
      %v1186 = vpop.permute.xlu0 %1185
      %1188 = vset.pattern.permute.xlu0 14
      %1189 = vperm.xlu0 %1188, %v591
      %v1190 = vpop.permute.xlu0 %1189
      %1192 = vset.pattern.permute.xlu0 14
      %1193 = vperm.xlu0 %1192, %v592
      %v1194 = vpop.permute.xlu0 %1193
      %1196 = vset.pattern.permute.xlu0 14
      %1197 = vperm.xlu0 %1196, %v593
      %v1198 = vpop.permute.xlu0 %1197
      %v1200 = vmul.f32 %v594, %v1186
      %v1201 = vmul.f32 %v595, %v1186
      %v1202 = vmul.f32 %v596, %v1190
      %v1203 = vmul.f32 %v597, %v1190
      %v1204 = vmul.f32 %v598, %v1194
      %v1205 = vmul.f32 %v599, %v1194
      %v1206 = vmul.f32 %v600, %v1198
      %v1207 = vmul.f32 %v601, %v1198
      %1208 = vset.pattern.permute.xlu0 15
      %1209 = vperm.xlu0 %1208, %v590
      %v1210 = vpop.permute.xlu0 %1209
      %1212 = vset.pattern.permute.xlu0 15
      %1213 = vperm.xlu0 %1212, %v591
      %v1214 = vpop.permute.xlu0 %1213
      %1216 = vset.pattern.permute.xlu0 15
      %1217 = vperm.xlu0 %1216, %v592
      %v1218 = vpop.permute.xlu0 %1217
      %1220 = vset.pattern.permute.xlu0 15
      %1221 = vperm.xlu0 %1220, %v593
      %v1222 = vpop.permute.xlu0 %1221
      %v1224 = vmul.f32 %v630, %v1210
      %v1225 = vmul.f32 %v631, %v1210
      %v1226 = vmul.f32 %v632, %v1214
      %v1227 = vmul.f32 %v633, %v1214
      %v1228 = vmul.f32 %v634, %v1218
      %v1229 = vmul.f32 %v635, %v1218
      %v1230 = vmul.f32 %v636, %v1222
      %v1231 = vmul.f32 %v637, %v1222
      %v1232 = vadd.f32 %v1200, %v1224
      %v1233 = vadd.f32 %v1201, %v1225
      %v1234 = vadd.f32 %v1202, %v1226
      %v1235 = vadd.f32 %v1203, %v1227
      %v1236 = vadd.f32 %v1204, %v1228
      %v1237 = vadd.f32 %v1205, %v1229
      %v1238 = vadd.f32 %v1206, %v1230
      %v1239 = vadd.f32 %v1207, %v1231
      %1240 = vset.pattern.permute.xlu0 16
      %1241 = vperm.xlu0 %1240, %v590
      %v1242 = vpop.permute.xlu0 %1241
      %1244 = vset.pattern.permute.xlu0 16
      %1245 = vperm.xlu0 %1244, %v591
      %v1246 = vpop.permute.xlu0 %1245
      %1248 = vset.pattern.permute.xlu0 16
      %1249 = vperm.xlu0 %1248, %v592
      %v1250 = vpop.permute.xlu0 %1249
      %1252 = vset.pattern.permute.xlu0 16
      %1253 = vperm.xlu0 %1252, %v593
      %v1254 = vpop.permute.xlu0 %1253
      %v1256 = vmul.f32 %v670, %v1242
      %v1257 = vmul.f32 %v671, %v1242
      %v1258 = vmul.f32 %v672, %v1246
      %v1259 = vmul.f32 %v673, %v1246
      %v1260 = vmul.f32 %v674, %v1250
      %v1261 = vmul.f32 %v675, %v1250
      %v1262 = vmul.f32 %v676, %v1254
      %v1263 = vmul.f32 %v677, %v1254
      %v1264 = vadd.f32 %v1232, %v1256
      %v1265 = vadd.f32 %v1233, %v1257
      %v1266 = vadd.f32 %v1234, %v1258
      %v1267 = vadd.f32 %v1235, %v1259
      %v1268 = vadd.f32 %v1236, %v1260
      %v1269 = vadd.f32 %v1237, %v1261
      %v1270 = vadd.f32 %v1238, %v1262
      %v1271 = vadd.f32 %v1239, %v1263
      %1272 = vset.pattern.permute.xlu0 17
      %1273 = vperm.xlu0 %1272, %v590
      %v1274 = vpop.permute.xlu0 %1273
      %1276 = vset.pattern.permute.xlu0 17
      %1277 = vperm.xlu0 %1276, %v591
      %v1278 = vpop.permute.xlu0 %1277
      %1280 = vset.pattern.permute.xlu0 17
      %1281 = vperm.xlu0 %1280, %v592
      %v1282 = vpop.permute.xlu0 %1281
      %1284 = vset.pattern.permute.xlu0 17
      %1285 = vperm.xlu0 %1284, %v593
      %v1286 = vpop.permute.xlu0 %1285
      %v1288 = vmul.f32 %v710, %v1274
      %v1289 = vmul.f32 %v711, %v1274
      %v1290 = vmul.f32 %v712, %v1278
      %v1291 = vmul.f32 %v713, %v1278
      %v1292 = vmul.f32 %v714, %v1282
      %v1293 = vmul.f32 %v715, %v1282
      %v1294 = vmul.f32 %v716, %v1286
      %v1295 = vmul.f32 %v717, %v1286
      %v1296 = vadd.f32 %v1264, %v1288
      %v1297 = vadd.f32 %v1265, %v1289
      %v1298 = vadd.f32 %v1266, %v1290
      %v1299 = vadd.f32 %v1267, %v1291
      %v1300 = vadd.f32 %v1268, %v1292
      %v1301 = vadd.f32 %v1269, %v1293
      %v1302 = vadd.f32 %v1270, %v1294
      %v1303 = vadd.f32 %v1271, %v1295
      %1304 = vset.pattern.permute.xlu0 18
      %1305 = vperm.xlu0 %1304, %v590
      %v1306 = vpop.permute.xlu0 %1305
      %1308 = vset.pattern.permute.xlu0 18
      %1309 = vperm.xlu0 %1308, %v591
      %v1310 = vpop.permute.xlu0 %1309
      %1312 = vset.pattern.permute.xlu0 18
      %1313 = vperm.xlu0 %1312, %v592
      %v1314 = vpop.permute.xlu0 %1313
      %1316 = vset.pattern.permute.xlu0 18
      %1317 = vperm.xlu0 %1316, %v593
      %v1318 = vpop.permute.xlu0 %1317
      %v1320 = vmul.f32 %v750, %v1306
      %v1321 = vmul.f32 %v751, %v1306
      %v1322 = vmul.f32 %v752, %v1310
      %v1323 = vmul.f32 %v753, %v1310
      %v1324 = vmul.f32 %v754, %v1314
      %v1325 = vmul.f32 %v755, %v1314
      %v1326 = vmul.f32 %v756, %v1318
      %v1327 = vmul.f32 %v757, %v1318
      %v1328 = vadd.f32 %v1296, %v1320
      %v1329 = vadd.f32 %v1297, %v1321
      %v1330 = vadd.f32 %v1298, %v1322
      %v1331 = vadd.f32 %v1299, %v1323
      %v1332 = vadd.f32 %v1300, %v1324
      %v1333 = vadd.f32 %v1301, %v1325
      %v1334 = vadd.f32 %v1302, %v1326
      %v1335 = vadd.f32 %v1303, %v1327
      %1336 = vset.pattern.permute.xlu0 19
      %1337 = vperm.xlu0 %1336, %v590
      %v1338 = vpop.permute.xlu0 %1337
      %1340 = vset.pattern.permute.xlu0 19
      %1341 = vperm.xlu0 %1340, %v591
      %v1342 = vpop.permute.xlu0 %1341
      %1344 = vset.pattern.permute.xlu0 19
      %1345 = vperm.xlu0 %1344, %v592
      %v1346 = vpop.permute.xlu0 %1345
      %1348 = vset.pattern.permute.xlu0 19
      %1349 = vperm.xlu0 %1348, %v593
      %v1350 = vpop.permute.xlu0 %1349
      %v1352 = vmul.f32 %v790, %v1338
      %v1353 = vmul.f32 %v791, %v1338
      %v1354 = vmul.f32 %v792, %v1342
      %v1355 = vmul.f32 %v793, %v1342
      %v1356 = vmul.f32 %v794, %v1346
      %v1357 = vmul.f32 %v795, %v1346
      %v1358 = vmul.f32 %v796, %v1350
      %v1359 = vmul.f32 %v797, %v1350
      %v1360 = vadd.f32 %v1328, %v1352
      %v1361 = vadd.f32 %v1329, %v1353
      %v1362 = vadd.f32 %v1330, %v1354
      %v1363 = vadd.f32 %v1331, %v1355
      %v1364 = vadd.f32 %v1332, %v1356
      %v1365 = vadd.f32 %v1333, %v1357
      %v1366 = vadd.f32 %v1334, %v1358
      %v1367 = vadd.f32 %v1335, %v1359
      %1368 = vset.pattern.permute.xlu0 20
      %1369 = vperm.xlu0 %1368, %v590
      %v1370 = vpop.permute.xlu0 %1369
      %1372 = vset.pattern.permute.xlu0 20
      %1373 = vperm.xlu0 %1372, %v591
      %v1374 = vpop.permute.xlu0 %1373
      %1376 = vset.pattern.permute.xlu0 20
      %1377 = vperm.xlu0 %1376, %v592
      %v1378 = vpop.permute.xlu0 %1377
      %1380 = vset.pattern.permute.xlu0 20
      %1381 = vperm.xlu0 %1380, %v593
      %v1382 = vpop.permute.xlu0 %1381
      %v1384 = vmul.f32 %v830, %v1370
      %v1385 = vmul.f32 %v831, %v1370
      %v1386 = vmul.f32 %v832, %v1374
      %v1387 = vmul.f32 %v833, %v1374
      %v1388 = vmul.f32 %v834, %v1378
      %v1389 = vmul.f32 %v835, %v1378
      %v1390 = vmul.f32 %v836, %v1382
      %v1391 = vmul.f32 %v837, %v1382
      %v1392 = vadd.f32 %v1360, %v1384
      %v1393 = vadd.f32 %v1361, %v1385
      %v1394 = vadd.f32 %v1362, %v1386
      %v1395 = vadd.f32 %v1363, %v1387
      %v1396 = vadd.f32 %v1364, %v1388
      %v1397 = vadd.f32 %v1365, %v1389
      %v1398 = vadd.f32 %v1366, %v1390
      %v1399 = vadd.f32 %v1367, %v1391
      %1400 = vrot.lane.b32.xlu0 %v1392, 16
      %v1401 = vpop.permute.xlu0 %1400
      %1402 = vrot.lane.b32.xlu0 %v1394, 16
      %v1403 = vpop.permute.xlu0 %1402
      %1404 = vrot.lane.b32.xlu0 %v1396, 16
      %v1405 = vpop.permute.xlu0 %1404
      %1406 = vrot.lane.b32.xlu0 %v1398, 16
      %v1407 = vpop.permute.xlu0 %1406
      %1408 = vrot.lane.b32.xlu0 %v1393, 16
      %v1409 = vpop.permute.xlu0 %1408
      %1410 = vrot.lane.b32.xlu0 %v1395, 16
      %v1411 = vpop.permute.xlu0 %1410
      %1412 = vrot.lane.b32.xlu0 %v1397, 16
      %v1413 = vpop.permute.xlu0 %1412
      %1414 = vrot.lane.b32.xlu0 %v1399, 16
      %v1415 = vpop.permute.xlu0 %1414
      %vm1416 = vcmp.lt.s32.totalorder %v297, 16
      %v1417 = vsel %vm1416, %v1401, %v1409
      %v1418 = vsel %vm1416, %v1403, %v1411
      %v1419 = vsel %vm1416, %v1405, %v1413
      %v1420 = vsel %vm1416, %v1407, %v1415
      %v1421 = vsel %vm1416, %v1409, %v1401
      %v1422 = vsel %vm1416, %v1411, %v1403
      %v1423 = vsel %vm1416, %v1413, %v1405
      %v1424 = vsel %vm1416, %v1415, %v1407
      %v1425 = vlaneseq
      %v1426 = vshrl.u32 %v1425, 7
      %v1427 = vsub.s32 2, %v1426
      %v1428 = vrot.slane %v270, %v1427
      %v1429 = vlaneseq
      %v1430 = vshrl.u32 %v1429, 7
      %v1431 = vsub.s32 2, %v1430
      %v1432 = vrot.slane %v271, %v1431
      %v1433 = vmul.f32 %v1421, %v1428
      %v1434 = vmul.f32 %v1417, %v1432
      %v1435 = vmul.f32 %v1422, %v1428
      %v1436 = vmul.f32 %v1418, %v1432
      %v1437 = vmul.f32 %v1423, %v1428
      %v1438 = vmul.f32 %v1419, %v1432
      %v1439 = vmul.f32 %v1424, %v1428
      %v1440 = vmul.f32 %v1420, %v1432
      %v1441 = vadd.f32 %v1176, %v1433
      %v1442 = vadd.f32 %v1177, %v1434
      %v1443 = vadd.f32 %v1178, %v1435
      %v1444 = vadd.f32 %v1179, %v1436
      %v1445 = vadd.f32 %v1180, %v1437
      %v1446 = vadd.f32 %v1181, %v1438
      %v1447 = vadd.f32 %v1182, %v1439
      %v1448 = vadd.f32 %v1183, %v1440
      %1449 = vset.pattern.permute.xlu0 21
      %1450 = vperm.xlu0 %1449, %v590
      %v1451 = vpop.permute.xlu0 %1450
      %1453 = vset.pattern.permute.xlu0 21
      %1454 = vperm.xlu0 %1453, %v591
      %v1455 = vpop.permute.xlu0 %1454
      %1457 = vset.pattern.permute.xlu0 21
      %1458 = vperm.xlu0 %1457, %v592
      %v1459 = vpop.permute.xlu0 %1458
      %1461 = vset.pattern.permute.xlu0 21
      %1462 = vperm.xlu0 %1461, %v593
      %v1463 = vpop.permute.xlu0 %1462
      %v1465 = vmul.f32 %v594, %v1451
      %v1466 = vmul.f32 %v595, %v1451
      %v1467 = vmul.f32 %v596, %v1455
      %v1468 = vmul.f32 %v597, %v1455
      %v1469 = vmul.f32 %v598, %v1459
      %v1470 = vmul.f32 %v599, %v1459
      %v1471 = vmul.f32 %v600, %v1463
      %v1472 = vmul.f32 %v601, %v1463
      %1473 = vset.pattern.permute.xlu0 22
      %1474 = vperm.xlu0 %1473, %v590
      %v1475 = vpop.permute.xlu0 %1474
      %1477 = vset.pattern.permute.xlu0 22
      %1478 = vperm.xlu0 %1477, %v591
      %v1479 = vpop.permute.xlu0 %1478
      %1481 = vset.pattern.permute.xlu0 22
      %1482 = vperm.xlu0 %1481, %v592
      %v1483 = vpop.permute.xlu0 %1482
      %1485 = vset.pattern.permute.xlu0 22
      %1486 = vperm.xlu0 %1485, %v593
      %v1487 = vpop.permute.xlu0 %1486
      %v1489 = vmul.f32 %v630, %v1475
      %v1490 = vmul.f32 %v631, %v1475
      %v1491 = vmul.f32 %v632, %v1479
      %v1492 = vmul.f32 %v633, %v1479
      %v1493 = vmul.f32 %v634, %v1483
      %v1494 = vmul.f32 %v635, %v1483
      %v1495 = vmul.f32 %v636, %v1487
      %v1496 = vmul.f32 %v637, %v1487
      %v1497 = vadd.f32 %v1465, %v1489
      %v1498 = vadd.f32 %v1466, %v1490
      %v1499 = vadd.f32 %v1467, %v1491
      %v1500 = vadd.f32 %v1468, %v1492
      %v1501 = vadd.f32 %v1469, %v1493
      %v1502 = vadd.f32 %v1470, %v1494
      %v1503 = vadd.f32 %v1471, %v1495
      %v1504 = vadd.f32 %v1472, %v1496
      %1505 = vset.pattern.permute.xlu0 23
      %1506 = vperm.xlu0 %1505, %v590
      %v1507 = vpop.permute.xlu0 %1506
      %1509 = vset.pattern.permute.xlu0 23
      %1510 = vperm.xlu0 %1509, %v591
      %v1511 = vpop.permute.xlu0 %1510
      %1513 = vset.pattern.permute.xlu0 23
      %1514 = vperm.xlu0 %1513, %v592
      %v1515 = vpop.permute.xlu0 %1514
      %1517 = vset.pattern.permute.xlu0 23
      %1518 = vperm.xlu0 %1517, %v593
      %v1519 = vpop.permute.xlu0 %1518
      %v1521 = vmul.f32 %v670, %v1507
      %v1522 = vmul.f32 %v671, %v1507
      %v1523 = vmul.f32 %v672, %v1511
      %v1524 = vmul.f32 %v673, %v1511
      %v1525 = vmul.f32 %v674, %v1515
      %v1526 = vmul.f32 %v675, %v1515
      %v1527 = vmul.f32 %v676, %v1519
      %v1528 = vmul.f32 %v677, %v1519
      %v1529 = vadd.f32 %v1497, %v1521
      %v1530 = vadd.f32 %v1498, %v1522
      %v1531 = vadd.f32 %v1499, %v1523
      %v1532 = vadd.f32 %v1500, %v1524
      %v1533 = vadd.f32 %v1501, %v1525
      %v1534 = vadd.f32 %v1502, %v1526
      %v1535 = vadd.f32 %v1503, %v1527
      %v1536 = vadd.f32 %v1504, %v1528
      %1537 = vset.pattern.permute.xlu0 24
      %1538 = vperm.xlu0 %1537, %v590
      %v1539 = vpop.permute.xlu0 %1538
      %1541 = vset.pattern.permute.xlu0 24
      %1542 = vperm.xlu0 %1541, %v591
      %v1543 = vpop.permute.xlu0 %1542
      %1545 = vset.pattern.permute.xlu0 24
      %1546 = vperm.xlu0 %1545, %v592
      %v1547 = vpop.permute.xlu0 %1546
      %1549 = vset.pattern.permute.xlu0 24
      %1550 = vperm.xlu0 %1549, %v593
      %v1551 = vpop.permute.xlu0 %1550
      %v1553 = vmul.f32 %v710, %v1539
      %v1554 = vmul.f32 %v711, %v1539
      %v1555 = vmul.f32 %v712, %v1543
      %v1556 = vmul.f32 %v713, %v1543
      %v1557 = vmul.f32 %v714, %v1547
      %v1558 = vmul.f32 %v715, %v1547
      %v1559 = vmul.f32 %v716, %v1551
      %v1560 = vmul.f32 %v717, %v1551
      %v1561 = vadd.f32 %v1529, %v1553
      %v1562 = vadd.f32 %v1530, %v1554
      %v1563 = vadd.f32 %v1531, %v1555
      %v1564 = vadd.f32 %v1532, %v1556
      %v1565 = vadd.f32 %v1533, %v1557
      %v1566 = vadd.f32 %v1534, %v1558
      %v1567 = vadd.f32 %v1535, %v1559
      %v1568 = vadd.f32 %v1536, %v1560
      %1569 = vset.pattern.permute.xlu0 25
      %1570 = vperm.xlu0 %1569, %v590
      %v1571 = vpop.permute.xlu0 %1570
      %1573 = vset.pattern.permute.xlu0 25
      %1574 = vperm.xlu0 %1573, %v591
      %v1575 = vpop.permute.xlu0 %1574
      %1577 = vset.pattern.permute.xlu0 25
      %1578 = vperm.xlu0 %1577, %v592
      %v1579 = vpop.permute.xlu0 %1578
      %1581 = vset.pattern.permute.xlu0 25
      %1582 = vperm.xlu0 %1581, %v593
      %v1583 = vpop.permute.xlu0 %1582
      %v1585 = vmul.f32 %v750, %v1571
      %v1586 = vmul.f32 %v751, %v1571
      %v1587 = vmul.f32 %v752, %v1575
      %v1588 = vmul.f32 %v753, %v1575
      %v1589 = vmul.f32 %v754, %v1579
      %v1590 = vmul.f32 %v755, %v1579
      %v1591 = vmul.f32 %v756, %v1583
      %v1592 = vmul.f32 %v757, %v1583
      %v1593 = vadd.f32 %v1561, %v1585
      %v1594 = vadd.f32 %v1562, %v1586
      %v1595 = vadd.f32 %v1563, %v1587
      %v1596 = vadd.f32 %v1564, %v1588
      %v1597 = vadd.f32 %v1565, %v1589
      %v1598 = vadd.f32 %v1566, %v1590
      %v1599 = vadd.f32 %v1567, %v1591
      %v1600 = vadd.f32 %v1568, %v1592
      %1601 = vset.pattern.permute.xlu0 26
      %1602 = vperm.xlu0 %1601, %v590
      %v1603 = vpop.permute.xlu0 %1602
      %1605 = vset.pattern.permute.xlu0 26
      %1606 = vperm.xlu0 %1605, %v591
      %v1607 = vpop.permute.xlu0 %1606
      %1609 = vset.pattern.permute.xlu0 26
      %1610 = vperm.xlu0 %1609, %v592
      %v1611 = vpop.permute.xlu0 %1610
      %1613 = vset.pattern.permute.xlu0 26
      %1614 = vperm.xlu0 %1613, %v593
      %v1615 = vpop.permute.xlu0 %1614
      %v1617 = vmul.f32 %v790, %v1603
      %v1618 = vmul.f32 %v791, %v1603
      %v1619 = vmul.f32 %v792, %v1607
      %v1620 = vmul.f32 %v793, %v1607
      %v1621 = vmul.f32 %v794, %v1611
      %v1622 = vmul.f32 %v795, %v1611
      %v1623 = vmul.f32 %v796, %v1615
      %v1624 = vmul.f32 %v797, %v1615
      %v1625 = vadd.f32 %v1593, %v1617
      %v1626 = vadd.f32 %v1594, %v1618
      %v1627 = vadd.f32 %v1595, %v1619
      %v1628 = vadd.f32 %v1596, %v1620
      %v1629 = vadd.f32 %v1597, %v1621
      %v1630 = vadd.f32 %v1598, %v1622
      %v1631 = vadd.f32 %v1599, %v1623
      %v1632 = vadd.f32 %v1600, %v1624
      %1633 = vset.pattern.permute.xlu0 27
      %1634 = vperm.xlu0 %1633, %v590
      %v1635 = vpop.permute.xlu0 %1634
      %1637 = vset.pattern.permute.xlu0 27
      %1638 = vperm.xlu0 %1637, %v591
      %v1639 = vpop.permute.xlu0 %1638
      %1641 = vset.pattern.permute.xlu0 27
      %1642 = vperm.xlu0 %1641, %v592
      %v1643 = vpop.permute.xlu0 %1642
      %1645 = vset.pattern.permute.xlu0 27
      %1646 = vperm.xlu0 %1645, %v593
      %v1647 = vpop.permute.xlu0 %1646
      %v1649 = vmul.f32 %v830, %v1635
      %v1650 = vmul.f32 %v831, %v1635
      %v1651 = vmul.f32 %v832, %v1639
      %v1652 = vmul.f32 %v833, %v1639
      %v1653 = vmul.f32 %v834, %v1643
      %v1654 = vmul.f32 %v835, %v1643
      %v1655 = vmul.f32 %v836, %v1647
      %v1656 = vmul.f32 %v837, %v1647
      %v1657 = vadd.f32 %v1625, %v1649
      %v1658 = vadd.f32 %v1626, %v1650
      %v1659 = vadd.f32 %v1627, %v1651
      %v1660 = vadd.f32 %v1628, %v1652
      %v1661 = vadd.f32 %v1629, %v1653
      %v1662 = vadd.f32 %v1630, %v1654
      %v1663 = vadd.f32 %v1631, %v1655
      %v1664 = vadd.f32 %v1632, %v1656
      %v1665 = vadd.f32 %v1441, %v1657
      %v1666 = vadd.f32 %v1442, %v1658
      %v1667 = vadd.f32 %v1443, %v1659
      %v1668 = vadd.f32 %v1444, %v1660
      %v1669 = vadd.f32 %v1445, %v1661
      %v1670 = vadd.f32 %v1446, %v1662
      %v1671 = vadd.f32 %v1447, %v1663
      %v1672 = vadd.f32 %v1448, %v1664
      %1673 = vset.pattern.permute.xlu0 28
      %1674 = vperm.xlu0 %1673, %v590
      %v1675 = vpop.permute.xlu0 %1674
      %1677 = vset.pattern.permute.xlu0 28
      %1678 = vperm.xlu0 %1677, %v591
      %v1679 = vpop.permute.xlu0 %1678
      %1681 = vset.pattern.permute.xlu0 28
      %1682 = vperm.xlu0 %1681, %v592
      %v1683 = vpop.permute.xlu0 %1682
      %1685 = vset.pattern.permute.xlu0 28
      %1686 = vperm.xlu0 %1685, %v593
      %v1687 = vpop.permute.xlu0 %1686
      %v1689 = vmul.f32 %v594, %v1675
      %v1690 = vmul.f32 %v595, %v1675
      %v1691 = vmul.f32 %v596, %v1679
      %v1692 = vmul.f32 %v597, %v1679
      %v1693 = vmul.f32 %v598, %v1683
      %v1694 = vmul.f32 %v599, %v1683
      %v1695 = vmul.f32 %v600, %v1687
      %v1696 = vmul.f32 %v601, %v1687
      %1697 = vset.pattern.permute.xlu0 29
      %1698 = vperm.xlu0 %1697, %v590
      %v1699 = vpop.permute.xlu0 %1698
      %1701 = vset.pattern.permute.xlu0 29
      %1702 = vperm.xlu0 %1701, %v591
      %v1703 = vpop.permute.xlu0 %1702
      %1705 = vset.pattern.permute.xlu0 29
      %1706 = vperm.xlu0 %1705, %v592
      %v1707 = vpop.permute.xlu0 %1706
      %1709 = vset.pattern.permute.xlu0 29
      %1710 = vperm.xlu0 %1709, %v593
      %v1711 = vpop.permute.xlu0 %1710
      %v1713 = vmul.f32 %v630, %v1699
      %v1714 = vmul.f32 %v631, %v1699
      %v1715 = vmul.f32 %v632, %v1703
      %v1716 = vmul.f32 %v633, %v1703
      %v1717 = vmul.f32 %v634, %v1707
      %v1718 = vmul.f32 %v635, %v1707
      %v1719 = vmul.f32 %v636, %v1711
      %v1720 = vmul.f32 %v637, %v1711
      %v1721 = vadd.f32 %v1689, %v1713
      %v1722 = vadd.f32 %v1690, %v1714
      %v1723 = vadd.f32 %v1691, %v1715
      %v1724 = vadd.f32 %v1692, %v1716
      %v1725 = vadd.f32 %v1693, %v1717
      %v1726 = vadd.f32 %v1694, %v1718
      %v1727 = vadd.f32 %v1695, %v1719
      %v1728 = vadd.f32 %v1696, %v1720
      %1729 = vset.pattern.permute.xlu0 30
      %1730 = vperm.xlu0 %1729, %v590
      %v1731 = vpop.permute.xlu0 %1730
      %1733 = vset.pattern.permute.xlu0 30
      %1734 = vperm.xlu0 %1733, %v591
      %v1735 = vpop.permute.xlu0 %1734
      %1737 = vset.pattern.permute.xlu0 30
      %1738 = vperm.xlu0 %1737, %v592
      %v1739 = vpop.permute.xlu0 %1738
      %1741 = vset.pattern.permute.xlu0 30
      %1742 = vperm.xlu0 %1741, %v593
      %v1743 = vpop.permute.xlu0 %1742
      %v1745 = vmul.f32 %v670, %v1731
      %v1746 = vmul.f32 %v671, %v1731
      %v1747 = vmul.f32 %v672, %v1735
      %v1748 = vmul.f32 %v673, %v1735
      %v1749 = vmul.f32 %v674, %v1739
      %v1750 = vmul.f32 %v675, %v1739
      %v1751 = vmul.f32 %v676, %v1743
      %v1752 = vmul.f32 %v677, %v1743
      %v1753 = vadd.f32 %v1721, %v1745
      %v1754 = vadd.f32 %v1722, %v1746
      %v1755 = vadd.f32 %v1723, %v1747
      %v1756 = vadd.f32 %v1724, %v1748
      %v1757 = vadd.f32 %v1725, %v1749
      %v1758 = vadd.f32 %v1726, %v1750
      %v1759 = vadd.f32 %v1727, %v1751
      %v1760 = vadd.f32 %v1728, %v1752
      %1761 = vset.pattern.permute.xlu0 31
      %1762 = vperm.xlu0 %1761, %v590
      %v1763 = vpop.permute.xlu0 %1762
      %1765 = vset.pattern.permute.xlu0 31
      %1766 = vperm.xlu0 %1765, %v591
      %v1767 = vpop.permute.xlu0 %1766
      %1769 = vset.pattern.permute.xlu0 31
      %1770 = vperm.xlu0 %1769, %v592
      %v1771 = vpop.permute.xlu0 %1770
      %1773 = vset.pattern.permute.xlu0 31
      %1774 = vperm.xlu0 %1773, %v593
      %v1775 = vpop.permute.xlu0 %1774
      %v1777 = vmul.f32 %v710, %v1763
      %v1778 = vmul.f32 %v711, %v1763
      %v1779 = vmul.f32 %v712, %v1767
      %v1780 = vmul.f32 %v713, %v1767
      %v1781 = vmul.f32 %v714, %v1771
      %v1782 = vmul.f32 %v715, %v1771
      %v1783 = vmul.f32 %v716, %v1775
      %v1784 = vmul.f32 %v717, %v1775
      %v1785 = vadd.f32 %v1753, %v1777
      %v1786 = vadd.f32 %v1754, %v1778
      %v1787 = vadd.f32 %v1755, %v1779
      %v1788 = vadd.f32 %v1756, %v1780
      %v1789 = vadd.f32 %v1757, %v1781
      %v1790 = vadd.f32 %v1758, %v1782
      %v1791 = vadd.f32 %v1759, %v1783
      %v1792 = vadd.f32 %v1760, %v1784
      %1793 = vset.pattern.permute.xlu0 32
      %1794 = vperm.xlu0 %1793, %v590
      %v1795 = vpop.permute.xlu0 %1794
      %1797 = vset.pattern.permute.xlu0 32
      %1798 = vperm.xlu0 %1797, %v591
      %v1799 = vpop.permute.xlu0 %1798
      %1801 = vset.pattern.permute.xlu0 32
      %1802 = vperm.xlu0 %1801, %v592
      %v1803 = vpop.permute.xlu0 %1802
      %1805 = vset.pattern.permute.xlu0 32
      %1806 = vperm.xlu0 %1805, %v593
      %v1807 = vpop.permute.xlu0 %1806
      %v1809 = vmul.f32 %v750, %v1795
      %v1810 = vmul.f32 %v751, %v1795
      %v1811 = vmul.f32 %v752, %v1799
      %v1812 = vmul.f32 %v753, %v1799
      %v1813 = vmul.f32 %v754, %v1803
      %v1814 = vmul.f32 %v755, %v1803
      %v1815 = vmul.f32 %v756, %v1807
      %v1816 = vmul.f32 %v757, %v1807
      %v1817 = vadd.f32 %v1785, %v1809
      %v1818 = vadd.f32 %v1786, %v1810
      %v1819 = vadd.f32 %v1787, %v1811
      %v1820 = vadd.f32 %v1788, %v1812
      %v1821 = vadd.f32 %v1789, %v1813
      %v1822 = vadd.f32 %v1790, %v1814
      %v1823 = vadd.f32 %v1791, %v1815
      %v1824 = vadd.f32 %v1792, %v1816
      %1825 = vset.pattern.permute.xlu0 33
      %1826 = vperm.xlu0 %1825, %v590
      %v1827 = vpop.permute.xlu0 %1826
      %1829 = vset.pattern.permute.xlu0 33
      %1830 = vperm.xlu0 %1829, %v591
      %v1831 = vpop.permute.xlu0 %1830
      %1833 = vset.pattern.permute.xlu0 33
      %1834 = vperm.xlu0 %1833, %v592
      %v1835 = vpop.permute.xlu0 %1834
      %1837 = vset.pattern.permute.xlu0 33
      %1838 = vperm.xlu0 %1837, %v593
      %v1839 = vpop.permute.xlu0 %1838
      %v1841 = vmul.f32 %v790, %v1827
      %v1842 = vmul.f32 %v791, %v1827
      %v1843 = vmul.f32 %v792, %v1831
      %v1844 = vmul.f32 %v793, %v1831
      %v1845 = vmul.f32 %v794, %v1835
      %v1846 = vmul.f32 %v795, %v1835
      %v1847 = vmul.f32 %v796, %v1839
      %v1848 = vmul.f32 %v797, %v1839
      %v1849 = vadd.f32 %v1817, %v1841
      %v1850 = vadd.f32 %v1818, %v1842
      %v1851 = vadd.f32 %v1819, %v1843
      %v1852 = vadd.f32 %v1820, %v1844
      %v1853 = vadd.f32 %v1821, %v1845
      %v1854 = vadd.f32 %v1822, %v1846
      %v1855 = vadd.f32 %v1823, %v1847
      %v1856 = vadd.f32 %v1824, %v1848
      %1857 = vset.pattern.permute.xlu0 34
      %1858 = vperm.xlu0 %1857, %v590
      %v1859 = vpop.permute.xlu0 %1858
      %1861 = vset.pattern.permute.xlu0 34
      %1862 = vperm.xlu0 %1861, %v591
      %v1863 = vpop.permute.xlu0 %1862
      %1865 = vset.pattern.permute.xlu0 34
      %1866 = vperm.xlu0 %1865, %v592
      %v1867 = vpop.permute.xlu0 %1866
      %1869 = vset.pattern.permute.xlu0 34
      %1870 = vperm.xlu0 %1869, %v593
      %v1871 = vpop.permute.xlu0 %1870
      %v1873 = vmul.f32 %v830, %v1859
      %v1874 = vmul.f32 %v831, %v1859
      %v1875 = vmul.f32 %v832, %v1863
      %v1876 = vmul.f32 %v833, %v1863
      %v1877 = vmul.f32 %v834, %v1867
      %v1878 = vmul.f32 %v835, %v1867
      %v1879 = vmul.f32 %v836, %v1871
      %v1880 = vmul.f32 %v837, %v1871
      %v1881 = vadd.f32 %v1849, %v1873
      %v1882 = vadd.f32 %v1850, %v1874
      %v1883 = vadd.f32 %v1851, %v1875
      %v1884 = vadd.f32 %v1852, %v1876
      %v1885 = vadd.f32 %v1853, %v1877
      %v1886 = vadd.f32 %v1854, %v1878
      %v1887 = vadd.f32 %v1855, %v1879
      %v1888 = vadd.f32 %v1856, %v1880
      %1889 = vrot.lane.b32.xlu0 %v1881, 112
      %v1890 = vpop.permute.xlu0 %1889
      %1891 = vrot.lane.b32.xlu0 %v1883, 112
      %v1892 = vpop.permute.xlu0 %1891
      %1893 = vrot.lane.b32.xlu0 %v1885, 112
      %v1894 = vpop.permute.xlu0 %1893
      %1895 = vrot.lane.b32.xlu0 %v1887, 112
      %v1896 = vpop.permute.xlu0 %1895
      %1897 = vrot.lane.b32.xlu0 %v1882, 112
      %v1898 = vpop.permute.xlu0 %1897
      %1899 = vrot.lane.b32.xlu0 %v1884, 112
      %v1900 = vpop.permute.xlu0 %1899
      %1901 = vrot.lane.b32.xlu0 %v1886, 112
      %v1902 = vpop.permute.xlu0 %1901
      %1903 = vrot.lane.b32.xlu0 %v1888, 112
      %v1904 = vpop.permute.xlu0 %1903
      %vm1905 = vcmp.lt.s32.totalorder %v297, 112
      %v1906 = vsel %vm1905, %v1890, %v1898
      %v1907 = vsel %vm1905, %v1892, %v1900
      %v1908 = vsel %vm1905, %v1894, %v1902
      %v1909 = vsel %vm1905, %v1896, %v1904
      %v1910 = vsel %vm1905, %v1898, %v1890
      %v1911 = vsel %vm1905, %v1900, %v1892
      %v1912 = vsel %vm1905, %v1902, %v1894
      %v1913 = vsel %vm1905, %v1904, %v1896
      %v1914 = vlaneseq
      %v1915 = vshrl.u32 %v1914, 7
      %v1916 = vsub.s32 4, %v1915
      %v1917 = vrot.slane %v270, %v1916
      %v1918 = vlaneseq
      %v1919 = vshrl.u32 %v1918, 7
      %v1920 = vsub.s32 4, %v1919
      %v1921 = vrot.slane %v271, %v1920
      %v1922 = vmul.f32 %v1906, %v1917
      %v1923 = vmul.f32 %v1910, %v1921
      %v1924 = vmul.f32 %v1907, %v1917
      %v1925 = vmul.f32 %v1911, %v1921
      %v1926 = vmul.f32 %v1908, %v1917
      %v1927 = vmul.f32 %v1912, %v1921
      %v1928 = vmul.f32 %v1909, %v1917
      %v1929 = vmul.f32 %v1913, %v1921
      %v1930 = vadd.f32 %v1665, %v1922
      %v1931 = vadd.f32 %v1666, %v1923
      %v1932 = vadd.f32 %v1667, %v1924
      %v1933 = vadd.f32 %v1668, %v1925
      %v1934 = vadd.f32 %v1669, %v1926
      %v1935 = vadd.f32 %v1670, %v1927
      %v1936 = vadd.f32 %v1671, %v1928
      %v1937 = vadd.f32 %v1672, %v1929
      %1938 = vset.pattern.permute.xlu0 35
      %1939 = vperm.xlu0 %1938, %v590
      %v1940 = vpop.permute.xlu0 %1939
      %1942 = vset.pattern.permute.xlu0 35
      %1943 = vperm.xlu0 %1942, %v591
      %v1944 = vpop.permute.xlu0 %1943
      %1946 = vset.pattern.permute.xlu0 35
      %1947 = vperm.xlu0 %1946, %v592
      %v1948 = vpop.permute.xlu0 %1947
      %1950 = vset.pattern.permute.xlu0 35
      %1951 = vperm.xlu0 %1950, %v593
      %v1952 = vpop.permute.xlu0 %1951
      %v1954 = vmul.f32 %v594, %v1940
      %v1955 = vmul.f32 %v595, %v1940
      %v1956 = vmul.f32 %v596, %v1944
      %v1957 = vmul.f32 %v597, %v1944
      %v1958 = vmul.f32 %v598, %v1948
      %v1959 = vmul.f32 %v599, %v1948
      %v1960 = vmul.f32 %v600, %v1952
      %v1961 = vmul.f32 %v601, %v1952
      %1962 = vset.pattern.permute.xlu0 36
      %1963 = vperm.xlu0 %1962, %v590
      %v1964 = vpop.permute.xlu0 %1963
      %1966 = vset.pattern.permute.xlu0 36
      %1967 = vperm.xlu0 %1966, %v591
      %v1968 = vpop.permute.xlu0 %1967
      %1970 = vset.pattern.permute.xlu0 36
      %1971 = vperm.xlu0 %1970, %v592
      %v1972 = vpop.permute.xlu0 %1971
      %1974 = vset.pattern.permute.xlu0 36
      %1975 = vperm.xlu0 %1974, %v593
      %v1976 = vpop.permute.xlu0 %1975
      %v1978 = vmul.f32 %v630, %v1964
      %v1979 = vmul.f32 %v631, %v1964
      %v1980 = vmul.f32 %v632, %v1968
      %v1981 = vmul.f32 %v633, %v1968
      %v1982 = vmul.f32 %v634, %v1972
      %v1983 = vmul.f32 %v635, %v1972
      %v1984 = vmul.f32 %v636, %v1976
      %v1985 = vmul.f32 %v637, %v1976
      %v1986 = vadd.f32 %v1954, %v1978
      %v1987 = vadd.f32 %v1955, %v1979
      %v1988 = vadd.f32 %v1956, %v1980
      %v1989 = vadd.f32 %v1957, %v1981
      %v1990 = vadd.f32 %v1958, %v1982
      %v1991 = vadd.f32 %v1959, %v1983
      %v1992 = vadd.f32 %v1960, %v1984
      %v1993 = vadd.f32 %v1961, %v1985
      %1994 = vset.pattern.permute.xlu0 37
      %1995 = vperm.xlu0 %1994, %v590
      %v1996 = vpop.permute.xlu0 %1995
      %1998 = vset.pattern.permute.xlu0 37
      %1999 = vperm.xlu0 %1998, %v591
      %v2000 = vpop.permute.xlu0 %1999
      %2002 = vset.pattern.permute.xlu0 37
      %2003 = vperm.xlu0 %2002, %v592
      %v2004 = vpop.permute.xlu0 %2003
      %2006 = vset.pattern.permute.xlu0 37
      %2007 = vperm.xlu0 %2006, %v593
      %v2008 = vpop.permute.xlu0 %2007
      %v2010 = vmul.f32 %v670, %v1996
      %v2011 = vmul.f32 %v671, %v1996
      %v2012 = vmul.f32 %v672, %v2000
      %v2013 = vmul.f32 %v673, %v2000
      %v2014 = vmul.f32 %v674, %v2004
      %v2015 = vmul.f32 %v675, %v2004
      %v2016 = vmul.f32 %v676, %v2008
      %v2017 = vmul.f32 %v677, %v2008
      %v2018 = vadd.f32 %v1986, %v2010
      %v2019 = vadd.f32 %v1987, %v2011
      %v2020 = vadd.f32 %v1988, %v2012
      %v2021 = vadd.f32 %v1989, %v2013
      %v2022 = vadd.f32 %v1990, %v2014
      %v2023 = vadd.f32 %v1991, %v2015
      %v2024 = vadd.f32 %v1992, %v2016
      %v2025 = vadd.f32 %v1993, %v2017
      %2026 = vset.pattern.permute.xlu0 38
      %2027 = vperm.xlu0 %2026, %v590
      %v2028 = vpop.permute.xlu0 %2027
      %2030 = vset.pattern.permute.xlu0 38
      %2031 = vperm.xlu0 %2030, %v591
      %v2032 = vpop.permute.xlu0 %2031
      %2034 = vset.pattern.permute.xlu0 38
      %2035 = vperm.xlu0 %2034, %v592
      %v2036 = vpop.permute.xlu0 %2035
      %2038 = vset.pattern.permute.xlu0 38
      %2039 = vperm.xlu0 %2038, %v593
      %v2040 = vpop.permute.xlu0 %2039
      %v2042 = vmul.f32 %v710, %v2028
      %v2043 = vmul.f32 %v711, %v2028
      %v2044 = vmul.f32 %v712, %v2032
      %v2045 = vmul.f32 %v713, %v2032
      %v2046 = vmul.f32 %v714, %v2036
      %v2047 = vmul.f32 %v715, %v2036
      %v2048 = vmul.f32 %v716, %v2040
      %v2049 = vmul.f32 %v717, %v2040
      %v2050 = vadd.f32 %v2018, %v2042
      %v2051 = vadd.f32 %v2019, %v2043
      %v2052 = vadd.f32 %v2020, %v2044
      %v2053 = vadd.f32 %v2021, %v2045
      %v2054 = vadd.f32 %v2022, %v2046
      %v2055 = vadd.f32 %v2023, %v2047
      %v2056 = vadd.f32 %v2024, %v2048
      %v2057 = vadd.f32 %v2025, %v2049
      %2058 = vset.pattern.permute.xlu0 39
      %2059 = vperm.xlu0 %2058, %v590
      %v2060 = vpop.permute.xlu0 %2059
      %2062 = vset.pattern.permute.xlu0 39
      %2063 = vperm.xlu0 %2062, %v591
      %v2064 = vpop.permute.xlu0 %2063
      %2066 = vset.pattern.permute.xlu0 39
      %2067 = vperm.xlu0 %2066, %v592
      %v2068 = vpop.permute.xlu0 %2067
      %2070 = vset.pattern.permute.xlu0 39
      %2071 = vperm.xlu0 %2070, %v593
      %v2072 = vpop.permute.xlu0 %2071
      %v2074 = vmul.f32 %v750, %v2060
      %v2075 = vmul.f32 %v751, %v2060
      %v2076 = vmul.f32 %v752, %v2064
      %v2077 = vmul.f32 %v753, %v2064
      %v2078 = vmul.f32 %v754, %v2068
      %v2079 = vmul.f32 %v755, %v2068
      %v2080 = vmul.f32 %v756, %v2072
      %v2081 = vmul.f32 %v757, %v2072
      %v2082 = vadd.f32 %v2050, %v2074
      %v2083 = vadd.f32 %v2051, %v2075
      %v2084 = vadd.f32 %v2052, %v2076
      %v2085 = vadd.f32 %v2053, %v2077
      %v2086 = vadd.f32 %v2054, %v2078
      %v2087 = vadd.f32 %v2055, %v2079
      %v2088 = vadd.f32 %v2056, %v2080
      %v2089 = vadd.f32 %v2057, %v2081
      %2090 = vset.pattern.permute.xlu0 40
      %2091 = vperm.xlu0 %2090, %v590
      %v2092 = vpop.permute.xlu0 %2091
      %2094 = vset.pattern.permute.xlu0 40
      %2095 = vperm.xlu0 %2094, %v591
      %v2096 = vpop.permute.xlu0 %2095
      %2098 = vset.pattern.permute.xlu0 40
      %2099 = vperm.xlu0 %2098, %v592
      %v2100 = vpop.permute.xlu0 %2099
      %2102 = vset.pattern.permute.xlu0 40
      %2103 = vperm.xlu0 %2102, %v593
      %v2104 = vpop.permute.xlu0 %2103
      %v2106 = vmul.f32 %v790, %v2092
      %v2107 = vmul.f32 %v791, %v2092
      %v2108 = vmul.f32 %v792, %v2096
      %v2109 = vmul.f32 %v793, %v2096
      %v2110 = vmul.f32 %v794, %v2100
      %v2111 = vmul.f32 %v795, %v2100
      %v2112 = vmul.f32 %v796, %v2104
      %v2113 = vmul.f32 %v797, %v2104
      %v2114 = vadd.f32 %v2082, %v2106
      %v2115 = vadd.f32 %v2083, %v2107
      %v2116 = vadd.f32 %v2084, %v2108
      %v2117 = vadd.f32 %v2085, %v2109
      %v2118 = vadd.f32 %v2086, %v2110
      %v2119 = vadd.f32 %v2087, %v2111
      %v2120 = vadd.f32 %v2088, %v2112
      %v2121 = vadd.f32 %v2089, %v2113
      %2122 = vset.pattern.permute.xlu0 41
      %2123 = vperm.xlu0 %2122, %v590
      %v2124 = vpop.permute.xlu0 %2123
      %2126 = vset.pattern.permute.xlu0 41
      %2127 = vperm.xlu0 %2126, %v591
      %v2128 = vpop.permute.xlu0 %2127
      %2130 = vset.pattern.permute.xlu0 41
      %2131 = vperm.xlu0 %2130, %v592
      %v2132 = vpop.permute.xlu0 %2131
      %2134 = vset.pattern.permute.xlu0 41
      %2135 = vperm.xlu0 %2134, %v593
      %v2136 = vpop.permute.xlu0 %2135
      %v2138 = vmul.f32 %v830, %v2124
      %v2139 = vmul.f32 %v831, %v2124
      %v2140 = vmul.f32 %v832, %v2128
      %v2141 = vmul.f32 %v833, %v2128
      %v2142 = vmul.f32 %v834, %v2132
      %v2143 = vmul.f32 %v835, %v2132
      %v2144 = vmul.f32 %v836, %v2136
      %v2145 = vmul.f32 %v837, %v2136
      %v2146 = vadd.f32 %v2114, %v2138
      %v2147 = vadd.f32 %v2115, %v2139
      %v2148 = vadd.f32 %v2116, %v2140
      %v2149 = vadd.f32 %v2117, %v2141
      %v2150 = vadd.f32 %v2118, %v2142
      %v2151 = vadd.f32 %v2119, %v2143
      %v2152 = vadd.f32 %v2120, %v2144
      %v2153 = vadd.f32 %v2121, %v2145
      %2154 = vrot.lane.b32.xlu0 %v2146, 96
      %v2155 = vpop.permute.xlu0 %2154
      %2156 = vrot.lane.b32.xlu0 %v2148, 96
      %v2157 = vpop.permute.xlu0 %2156
      %2158 = vrot.lane.b32.xlu0 %v2150, 96
      %v2159 = vpop.permute.xlu0 %2158
      %2160 = vrot.lane.b32.xlu0 %v2152, 96
      %v2161 = vpop.permute.xlu0 %2160
      %2162 = vrot.lane.b32.xlu0 %v2147, 96
      %v2163 = vpop.permute.xlu0 %2162
      %2164 = vrot.lane.b32.xlu0 %v2149, 96
      %v2165 = vpop.permute.xlu0 %2164
      %2166 = vrot.lane.b32.xlu0 %v2151, 96
      %v2167 = vpop.permute.xlu0 %2166
      %2168 = vrot.lane.b32.xlu0 %v2153, 96
      %v2169 = vpop.permute.xlu0 %2168
      %vm2170 = vcmp.lt.s32.totalorder %v297, 96
      %v2171 = vsel %vm2170, %v2155, %v2163
      %v2172 = vsel %vm2170, %v2157, %v2165
      %v2173 = vsel %vm2170, %v2159, %v2167
      %v2174 = vsel %vm2170, %v2161, %v2169
      %v2175 = vsel %vm2170, %v2163, %v2155
      %v2176 = vsel %vm2170, %v2165, %v2157
      %v2177 = vsel %vm2170, %v2167, %v2159
      %v2178 = vsel %vm2170, %v2169, %v2161
      %v2179 = vlaneseq
      %v2180 = vshrl.u32 %v2179, 7
      %v2181 = vsub.s32 5, %v2180
      %v2182 = vrot.slane %v270, %v2181
      %v2183 = vlaneseq
      %v2184 = vshrl.u32 %v2183, 7
      %v2185 = vsub.s32 5, %v2184
      %v2186 = vrot.slane %v271, %v2185
      %v2187 = vmul.f32 %v2171, %v2182
      %v2188 = vmul.f32 %v2175, %v2186
      %v2189 = vmul.f32 %v2172, %v2182
      %v2190 = vmul.f32 %v2176, %v2186
      %v2191 = vmul.f32 %v2173, %v2182
      %v2192 = vmul.f32 %v2177, %v2186
      %v2193 = vmul.f32 %v2174, %v2182
      %v2194 = vmul.f32 %v2178, %v2186
      %v2195 = vadd.f32 %v1930, %v2187
      %v2196 = vadd.f32 %v1931, %v2188
      %v2197 = vadd.f32 %v1932, %v2189
      %v2198 = vadd.f32 %v1933, %v2190
      %v2199 = vadd.f32 %v1934, %v2191
      %v2200 = vadd.f32 %v1935, %v2192
      %v2201 = vadd.f32 %v1936, %v2193
      %v2202 = vadd.f32 %v1937, %v2194
      %2203 = vset.pattern.permute.xlu0 42
      %2204 = vperm.xlu0 %2203, %v590
      %v2205 = vpop.permute.xlu0 %2204
      %2207 = vset.pattern.permute.xlu0 42
      %2208 = vperm.xlu0 %2207, %v591
      %v2209 = vpop.permute.xlu0 %2208
      %2211 = vset.pattern.permute.xlu0 42
      %2212 = vperm.xlu0 %2211, %v592
      %v2213 = vpop.permute.xlu0 %2212
      %2215 = vset.pattern.permute.xlu0 42
      %2216 = vperm.xlu0 %2215, %v593
      %v2217 = vpop.permute.xlu0 %2216
      %v2219 = vmul.f32 %v594, %v2205
      %v2220 = vmul.f32 %v595, %v2205
      %v2221 = vmul.f32 %v596, %v2209
      %v2222 = vmul.f32 %v597, %v2209
      %v2223 = vmul.f32 %v598, %v2213
      %v2224 = vmul.f32 %v599, %v2213
      %v2225 = vmul.f32 %v600, %v2217
      %v2226 = vmul.f32 %v601, %v2217
      %2227 = vset.pattern.permute.xlu0 43
      %2228 = vperm.xlu0 %2227, %v590
      %v2229 = vpop.permute.xlu0 %2228
      %2231 = vset.pattern.permute.xlu0 43
      %2232 = vperm.xlu0 %2231, %v591
      %v2233 = vpop.permute.xlu0 %2232
      %2235 = vset.pattern.permute.xlu0 43
      %2236 = vperm.xlu0 %2235, %v592
      %v2237 = vpop.permute.xlu0 %2236
      %2239 = vset.pattern.permute.xlu0 43
      %2240 = vperm.xlu0 %2239, %v593
      %v2241 = vpop.permute.xlu0 %2240
      %v2243 = vmul.f32 %v630, %v2229
      %v2244 = vmul.f32 %v631, %v2229
      %v2245 = vmul.f32 %v632, %v2233
      %v2246 = vmul.f32 %v633, %v2233
      %v2247 = vmul.f32 %v634, %v2237
      %v2248 = vmul.f32 %v635, %v2237
      %v2249 = vmul.f32 %v636, %v2241
      %v2250 = vmul.f32 %v637, %v2241
      %v2251 = vadd.f32 %v2219, %v2243
      %v2252 = vadd.f32 %v2220, %v2244
      %v2253 = vadd.f32 %v2221, %v2245
      %v2254 = vadd.f32 %v2222, %v2246
      %v2255 = vadd.f32 %v2223, %v2247
      %v2256 = vadd.f32 %v2224, %v2248
      %v2257 = vadd.f32 %v2225, %v2249
      %v2258 = vadd.f32 %v2226, %v2250
      %2259 = vset.pattern.permute.xlu0 44
      %2260 = vperm.xlu0 %2259, %v590
      %v2261 = vpop.permute.xlu0 %2260
      %2263 = vset.pattern.permute.xlu0 44
      %2264 = vperm.xlu0 %2263, %v591
      %v2265 = vpop.permute.xlu0 %2264
      %2267 = vset.pattern.permute.xlu0 44
      %2268 = vperm.xlu0 %2267, %v592
      %v2269 = vpop.permute.xlu0 %2268
      %2271 = vset.pattern.permute.xlu0 44
      %2272 = vperm.xlu0 %2271, %v593
      %v2273 = vpop.permute.xlu0 %2272
      %v2275 = vmul.f32 %v670, %v2261
      %v2276 = vmul.f32 %v671, %v2261
      %v2277 = vmul.f32 %v672, %v2265
      %v2278 = vmul.f32 %v673, %v2265
      %v2279 = vmul.f32 %v674, %v2269
      %v2280 = vmul.f32 %v675, %v2269
      %v2281 = vmul.f32 %v676, %v2273
      %v2282 = vmul.f32 %v677, %v2273
      %v2283 = vadd.f32 %v2251, %v2275
      %v2284 = vadd.f32 %v2252, %v2276
      %v2285 = vadd.f32 %v2253, %v2277
      %v2286 = vadd.f32 %v2254, %v2278
      %v2287 = vadd.f32 %v2255, %v2279
      %v2288 = vadd.f32 %v2256, %v2280
      %v2289 = vadd.f32 %v2257, %v2281
      %v2290 = vadd.f32 %v2258, %v2282
      %2291 = vset.pattern.permute.xlu0 45
      %2292 = vperm.xlu0 %2291, %v590
      %v2293 = vpop.permute.xlu0 %2292
      %2295 = vset.pattern.permute.xlu0 45
      %2296 = vperm.xlu0 %2295, %v591
      %v2297 = vpop.permute.xlu0 %2296
      %2299 = vset.pattern.permute.xlu0 45
      %2300 = vperm.xlu0 %2299, %v592
      %v2301 = vpop.permute.xlu0 %2300
      %2303 = vset.pattern.permute.xlu0 45
      %2304 = vperm.xlu0 %2303, %v593
      %v2305 = vpop.permute.xlu0 %2304
      %v2307 = vmul.f32 %v710, %v2293
      %v2308 = vmul.f32 %v711, %v2293
      %v2309 = vmul.f32 %v712, %v2297
      %v2310 = vmul.f32 %v713, %v2297
      %v2311 = vmul.f32 %v714, %v2301
      %v2312 = vmul.f32 %v715, %v2301
      %v2313 = vmul.f32 %v716, %v2305
      %v2314 = vmul.f32 %v717, %v2305
      %v2315 = vadd.f32 %v2283, %v2307
      %v2316 = vadd.f32 %v2284, %v2308
      %v2317 = vadd.f32 %v2285, %v2309
      %v2318 = vadd.f32 %v2286, %v2310
      %v2319 = vadd.f32 %v2287, %v2311
      %v2320 = vadd.f32 %v2288, %v2312
      %v2321 = vadd.f32 %v2289, %v2313
      %v2322 = vadd.f32 %v2290, %v2314
      %2323 = vset.pattern.permute.xlu0 46
      %2324 = vperm.xlu0 %2323, %v590
      %v2325 = vpop.permute.xlu0 %2324
      %2327 = vset.pattern.permute.xlu0 46
      %2328 = vperm.xlu0 %2327, %v591
      %v2329 = vpop.permute.xlu0 %2328
      %2331 = vset.pattern.permute.xlu0 46
      %2332 = vperm.xlu0 %2331, %v592
      %v2333 = vpop.permute.xlu0 %2332
      %2335 = vset.pattern.permute.xlu0 46
      %2336 = vperm.xlu0 %2335, %v593
      %v2337 = vpop.permute.xlu0 %2336
      %v2339 = vmul.f32 %v750, %v2325
      %v2340 = vmul.f32 %v751, %v2325
      %v2341 = vmul.f32 %v752, %v2329
      %v2342 = vmul.f32 %v753, %v2329
      %v2343 = vmul.f32 %v754, %v2333
      %v2344 = vmul.f32 %v755, %v2333
      %v2345 = vmul.f32 %v756, %v2337
      %v2346 = vmul.f32 %v757, %v2337
      %v2347 = vadd.f32 %v2315, %v2339
      %v2348 = vadd.f32 %v2316, %v2340
      %v2349 = vadd.f32 %v2317, %v2341
      %v2350 = vadd.f32 %v2318, %v2342
      %v2351 = vadd.f32 %v2319, %v2343
      %v2352 = vadd.f32 %v2320, %v2344
      %v2353 = vadd.f32 %v2321, %v2345
      %v2354 = vadd.f32 %v2322, %v2346
      %2355 = vset.pattern.permute.xlu0 47
      %2356 = vperm.xlu0 %2355, %v590
      %v2357 = vpop.permute.xlu0 %2356
      %2359 = vset.pattern.permute.xlu0 47
      %2360 = vperm.xlu0 %2359, %v591
      %v2361 = vpop.permute.xlu0 %2360
      %2363 = vset.pattern.permute.xlu0 47
      %2364 = vperm.xlu0 %2363, %v592
      %v2365 = vpop.permute.xlu0 %2364
      %2367 = vset.pattern.permute.xlu0 47
      %2368 = vperm.xlu0 %2367, %v593
      %v2369 = vpop.permute.xlu0 %2368
      %v2371 = vmul.f32 %v790, %v2357
      %v2372 = vmul.f32 %v791, %v2357
      %v2373 = vmul.f32 %v792, %v2361
      %v2374 = vmul.f32 %v793, %v2361
      %v2375 = vmul.f32 %v794, %v2365
      %v2376 = vmul.f32 %v795, %v2365
      %v2377 = vmul.f32 %v796, %v2369
      %v2378 = vmul.f32 %v797, %v2369
      %v2379 = vadd.f32 %v2347, %v2371
      %v2380 = vadd.f32 %v2348, %v2372
      %v2381 = vadd.f32 %v2349, %v2373
      %v2382 = vadd.f32 %v2350, %v2374
      %v2383 = vadd.f32 %v2351, %v2375
      %v2384 = vadd.f32 %v2352, %v2376
      %v2385 = vadd.f32 %v2353, %v2377
      %v2386 = vadd.f32 %v2354, %v2378
      %2387 = vset.pattern.permute.xlu0 48
      %2388 = vperm.xlu0 %2387, %v590
      %v2389 = vpop.permute.xlu0 %2388
      %2391 = vset.pattern.permute.xlu0 48
      %2392 = vperm.xlu0 %2391, %v591
      %v2393 = vpop.permute.xlu0 %2392
      %2395 = vset.pattern.permute.xlu0 48
      %2396 = vperm.xlu0 %2395, %v592
      %v2397 = vpop.permute.xlu0 %2396
      %2399 = vset.pattern.permute.xlu0 48
      %2400 = vperm.xlu0 %2399, %v593
      %v2401 = vpop.permute.xlu0 %2400
      %v2403 = vmul.f32 %v830, %v2389
      %v2404 = vmul.f32 %v831, %v2389
      %v2405 = vmul.f32 %v832, %v2393
      %v2406 = vmul.f32 %v833, %v2393
      %v2407 = vmul.f32 %v834, %v2397
      %v2408 = vmul.f32 %v835, %v2397
      %v2409 = vmul.f32 %v836, %v2401
      %v2410 = vmul.f32 %v837, %v2401
      %v2411 = vadd.f32 %v2379, %v2403
      %v2412 = vadd.f32 %v2380, %v2404
      %v2413 = vadd.f32 %v2381, %v2405
      %v2414 = vadd.f32 %v2382, %v2406
      %v2415 = vadd.f32 %v2383, %v2407
      %v2416 = vadd.f32 %v2384, %v2408
      %v2417 = vadd.f32 %v2385, %v2409
      %v2418 = vadd.f32 %v2386, %v2410
      %2419 = vrot.lane.b32.xlu0 %v2411, 80
      %v2420 = vpop.permute.xlu0 %2419
      %2421 = vrot.lane.b32.xlu0 %v2413, 80
      %v2422 = vpop.permute.xlu0 %2421
      %2423 = vrot.lane.b32.xlu0 %v2415, 80
      %v2424 = vpop.permute.xlu0 %2423
      %2425 = vrot.lane.b32.xlu0 %v2417, 80
      %v2426 = vpop.permute.xlu0 %2425
      %2427 = vrot.lane.b32.xlu0 %v2412, 80
      %v2428 = vpop.permute.xlu0 %2427
      %2429 = vrot.lane.b32.xlu0 %v2414, 80
      %v2430 = vpop.permute.xlu0 %2429
      %2431 = vrot.lane.b32.xlu0 %v2416, 80
      %v2432 = vpop.permute.xlu0 %2431
      %2433 = vrot.lane.b32.xlu0 %v2418, 80
      %v2434 = vpop.permute.xlu0 %2433
      %vm2435 = vcmp.lt.s32.totalorder %v297, 80
      %v2436 = vsel %vm2435, %v2420, %v2428
      %v2437 = vsel %vm2435, %v2422, %v2430
      %v2438 = vsel %vm2435, %v2424, %v2432
      %v2439 = vsel %vm2435, %v2426, %v2434
      %v2440 = vsel %vm2435, %v2428, %v2420
      %v2441 = vsel %vm2435, %v2430, %v2422
      %v2442 = vsel %vm2435, %v2432, %v2424
      %v2443 = vsel %vm2435, %v2434, %v2426
      %v2444 = vlaneseq
      %v2445 = vshrl.u32 %v2444, 7
      %v2446 = vsub.s32 6, %v2445
      %v2447 = vrot.slane %v270, %v2446
      %v2448 = vlaneseq
      %v2449 = vshrl.u32 %v2448, 7
      %v2450 = vsub.s32 6, %v2449
      %v2451 = vrot.slane %v271, %v2450
      %v2452 = vmul.f32 %v2436, %v2447
      %v2453 = vmul.f32 %v2440, %v2451
      %v2454 = vmul.f32 %v2437, %v2447
      %v2455 = vmul.f32 %v2441, %v2451
      %v2456 = vmul.f32 %v2438, %v2447
      %v2457 = vmul.f32 %v2442, %v2451
      %v2458 = vmul.f32 %v2439, %v2447
      %v2459 = vmul.f32 %v2443, %v2451
      %v2460 = vadd.f32 %v2195, %v2452
      %v2461 = vadd.f32 %v2196, %v2453
      %v2462 = vadd.f32 %v2197, %v2454
      %v2463 = vadd.f32 %v2198, %v2455
      %v2464 = vadd.f32 %v2199, %v2456
      %v2465 = vadd.f32 %v2200, %v2457
      %v2466 = vadd.f32 %v2201, %v2458
      %v2467 = vadd.f32 %v2202, %v2459
      %2469 = vset.pattern.permute.xlu0 0
      %2470 = vperm.xlu0 %2469, %v252
      %v2471 = vpop.permute.xlu0 %2470
      %2474 = vset.pattern.permute.xlu0 0
      %2475 = vperm.xlu0 %2474, %v253
      %v2476 = vpop.permute.xlu0 %2475
      %2479 = vset.pattern.permute.xlu0 0
      %2480 = vperm.xlu0 %2479, %v254
      %v2481 = vpop.permute.xlu0 %2480
      %2484 = vset.pattern.permute.xlu0 0
      %2485 = vperm.xlu0 %2484, %v255
      %v2486 = vpop.permute.xlu0 %2485
      %v2488 = vadd.f32 %v2460, %v2471
      %v2489 = vadd.f32 %v2461, %v2471
      %v2490 = vadd.f32 %v2462, %v2476
      %v2491 = vadd.f32 %v2463, %v2476
      %v2492 = vadd.f32 %v2464, %v2481
      %v2493 = vadd.f32 %v2465, %v2481
      %v2494 = vadd.f32 %v2466, %v2486
      %v2495 = vadd.f32 %v2467, %v2486
      %v2496 = vadd.f32 %v2488, %v2490
      %v2497 = vadd.f32 %v2496, %v2492
      %v2498 = vadd.f32 %v2497, %v2494
      %v2499 = vrot.slane %v2498, 4
      %v2500 = vadd.f32 %v2498, %v2499
      %v2501 = vrot.slane %v2500, 2
      %v2502 = vadd.f32 %v2500, %v2501
      %v2503 = vrot.slane %v2502, 1
      %v2504 = vadd.f32 %v2502, %v2503
      %v2505 = vadd.f32 %v2489, %v2491
      %v2506 = vadd.f32 %v2505, %v2493
      %v2507 = vadd.f32 %v2506, %v2495
      %v2508 = vrot.slane %v2507, 4
      %v2509 = vadd.f32 %v2507, %v2508
      %v2510 = vrot.slane %v2509, 2
      %v2511 = vadd.f32 %v2509, %v2510
      %v2512 = vrot.slane %v2511, 1
      %v2513 = vadd.f32 %v2511, %v2512
      %v2514 = vrcp.pop 32.0
      %v2515 = vmul.f32 %v2504, %v2514
      %v2516 = vmul.f32 %v2513, %v2514
      %v2517 = vsub.f32 %v2488, %v2515
      %v2518 = vsub.f32 %v2489, %v2516
      %v2519 = vsub.f32 %v2490, %v2515
      %v2520 = vsub.f32 %v2491, %v2516
      %v2521 = vsub.f32 %v2492, %v2515
      %v2522 = vsub.f32 %v2493, %v2516
      %v2523 = vsub.f32 %v2494, %v2515
      %v2524 = vsub.f32 %v2495, %v2516
      %v2525 = vmul.f32 %v2517, %v2517
      %v2526 = vmul.f32 %v2518, %v2518
      %v2527 = vmul.f32 %v2519, %v2519
      %v2528 = vmul.f32 %v2520, %v2520
      %v2529 = vmul.f32 %v2521, %v2521
      %v2530 = vmul.f32 %v2522, %v2522
      %v2531 = vmul.f32 %v2523, %v2523
      %v2532 = vmul.f32 %v2524, %v2524
      %v2533 = vadd.f32 %v2525, %v2527
      %v2534 = vadd.f32 %v2533, %v2529
      %v2535 = vadd.f32 %v2534, %v2531
      %v2536 = vrot.slane %v2535, 4
      %v2537 = vadd.f32 %v2535, %v2536
      %v2538 = vrot.slane %v2537, 2
      %v2539 = vadd.f32 %v2537, %v2538
      %v2540 = vrot.slane %v2539, 1
      %v2541 = vadd.f32 %v2539, %v2540
      %v2542 = vadd.f32 %v2526, %v2528
      %v2543 = vadd.f32 %v2542, %v2530
      %v2544 = vadd.f32 %v2543, %v2532
      %v2545 = vrot.slane %v2544, 4
      %v2546 = vadd.f32 %v2544, %v2545
      %v2547 = vrot.slane %v2546, 2
      %v2548 = vadd.f32 %v2546, %v2547
      %v2549 = vrot.slane %v2548, 1
      %v2550 = vadd.f32 %v2548, %v2549
      %v2551 = vmul.f32 %v2541, %v2514
      %v2552 = vmul.f32 %v2550, %v2514
      %v2553 = vadd.f32 %v2551, 1e-06
      %v2554 = vadd.f32 %v2552, 1e-06
      %v2555 = vrsqrt.pop %v2553
      %v2556 = vrsqrt.pop %v2554
      %v2557 = vmul.f32 %v2517, %v2555
      %v2558 = vmul.f32 %v2518, %v2556
      %v2559 = vmul.f32 %v2519, %v2555
      %v2560 = vmul.f32 %v2520, %v2556
      %v2561 = vmul.f32 %v2521, %v2555
      %v2562 = vmul.f32 %v2522, %v2556
      %v2563 = vmul.f32 %v2523, %v2555
      %v2564 = vmul.f32 %v2524, %v2556
      %2565 = vset.pattern.permute.xlu0 1
      %2566 = vperm.xlu0 %2565, %v252
      %v2567 = vpop.permute.xlu0 %2566
      %2569 = vset.pattern.permute.xlu0 1
      %2570 = vperm.xlu0 %2569, %v253
      %v2571 = vpop.permute.xlu0 %2570
      %2573 = vset.pattern.permute.xlu0 1
      %2574 = vperm.xlu0 %2573, %v254
      %v2575 = vpop.permute.xlu0 %2574
      %2577 = vset.pattern.permute.xlu0 1
      %2578 = vperm.xlu0 %2577, %v255
      %v2579 = vpop.permute.xlu0 %2578
      %v2581 = vmul.f32 %v2557, %v2567
      %v2582 = vmul.f32 %v2558, %v2567
      %v2583 = vmul.f32 %v2559, %v2571
      %v2584 = vmul.f32 %v2560, %v2571
      %v2585 = vmul.f32 %v2561, %v2575
      %v2586 = vmul.f32 %v2562, %v2575
      %v2587 = vmul.f32 %v2563, %v2579
      %v2588 = vmul.f32 %v2564, %v2579
      %2589 = vset.pattern.permute.xlu0 2
      %2590 = vperm.xlu0 %2589, %v252
      %v2591 = vpop.permute.xlu0 %2590
      %2593 = vset.pattern.permute.xlu0 2
      %2594 = vperm.xlu0 %2593, %v253
      %v2595 = vpop.permute.xlu0 %2594
      %2597 = vset.pattern.permute.xlu0 2
      %2598 = vperm.xlu0 %2597, %v254
      %v2599 = vpop.permute.xlu0 %2598
      %2601 = vset.pattern.permute.xlu0 2
      %2602 = vperm.xlu0 %2601, %v255
      %v2603 = vpop.permute.xlu0 %2602
      %v2605 = vadd.f32 %v2581, %v2591
      %v2606 = vadd.f32 %v2582, %v2591
      %v2607 = vadd.f32 %v2583, %v2595
      %v2608 = vadd.f32 %v2584, %v2595
      %v2609 = vadd.f32 %v2585, %v2599
      %v2610 = vadd.f32 %v2586, %v2599
      %v2611 = vadd.f32 %v2587, %v2603
      %v2612 = vadd.f32 %v2588, %v2603
      %v2613 = vld [vmem:[%s4] sm:$0xff]
      %v2614 = vld [vmem:[%s4 + $0x8] sm:$0xff]
      %v2615 = vld [vmem:[%s4 + $0x10] sm:$0xff]
      %v2616 = vld [vmem:[%s4 + $0x18] sm:$0xff]
      %v2617 = vld [vmem:[%s4 + $0x20] sm:$0xff]
      %v2618 = vld [vmem:[%s4 + $0x28] sm:$0xff]
      %v2619 = vld [vmem:[%s4 + $0x30] sm:$0xff]
      %v2620 = vld [vmem:[%s4 + $0x38] sm:$0xff]
      %v2621 = vld [vmem:[%s4 + $0x40] sm:$0xff]
      %v2622 = vld [vmem:[%s4 + $0x48] sm:$0xff]
      %v2623 = vld [vmem:[%s4 + $0x50] sm:$0xff]
      %v2624 = vld [vmem:[%s4 + $0x58] sm:$0xff]
      %v2625 = vld [vmem:[%s4 + $0x60] sm:$0xff]
      %v2626 = vld [vmem:[%s4 + $0x68] sm:$0xff]
      %v2627 = vld [vmem:[%s4 + $0x70] sm:$0xff]
      %v2628 = vld [vmem:[%s4 + $0x78] sm:$0xff]
      %2629 = vset.pattern.permute.xlu0 3
      %2630 = vperm.xlu0 %2629, %v252
      %v2631 = vpop.permute.xlu0 %2630
      %2633 = vset.pattern.permute.xlu0 3
      %2634 = vperm.xlu0 %2633, %v253
      %v2635 = vpop.permute.xlu0 %2634
      %2637 = vset.pattern.permute.xlu0 3
      %2638 = vperm.xlu0 %2637, %v254
      %v2639 = vpop.permute.xlu0 %2638
      %2641 = vset.pattern.permute.xlu0 3
      %2642 = vperm.xlu0 %2641, %v255
      %v2643 = vpop.permute.xlu0 %2642
      %2646 = vset.pattern.permute.xlu0 3
      %2647 = vperm.xlu0 %2646, %v256
      %v2648 = vpop.permute.xlu0 %2647
      %2651 = vset.pattern.permute.xlu0 3
      %2652 = vperm.xlu0 %2651, %v257
      %v2653 = vpop.permute.xlu0 %2652
      %2656 = vset.pattern.permute.xlu0 3
      %2657 = vperm.xlu0 %2656, %v258
      %v2658 = vpop.permute.xlu0 %2657
      %2661 = vset.pattern.permute.xlu0 3
      %2662 = vperm.xlu0 %2661, %v259
      %v2663 = vpop.permute.xlu0 %2662
      %2666 = vset.pattern.permute.xlu0 3
      %2667 = vperm.xlu0 %2666, %v260
      %v2668 = vpop.permute.xlu0 %2667
      %2671 = vset.pattern.permute.xlu0 3
      %2672 = vperm.xlu0 %2671, %v261
      %v2673 = vpop.permute.xlu0 %2672
      %2676 = vset.pattern.permute.xlu0 3
      %2677 = vperm.xlu0 %2676, %v262
      %v2678 = vpop.permute.xlu0 %2677
      %2681 = vset.pattern.permute.xlu0 3
      %2682 = vperm.xlu0 %2681, %v263
      %v2683 = vpop.permute.xlu0 %2682
      %2686 = vset.pattern.permute.xlu0 3
      %2687 = vperm.xlu0 %2686, %v264
      %v2688 = vpop.permute.xlu0 %2687
      %2691 = vset.pattern.permute.xlu0 3
      %2692 = vperm.xlu0 %2691, %v265
      %v2693 = vpop.permute.xlu0 %2692
      %2696 = vset.pattern.permute.xlu0 3
      %2697 = vperm.xlu0 %2696, %v266
      %v2698 = vpop.permute.xlu0 %2697
      %2701 = vset.pattern.permute.xlu0 3
      %2702 = vperm.xlu0 %2701, %v267
      %v2703 = vpop.permute.xlu0 %2702
      %vm2705 = vcmask 261120
      %v2707 = vsel %vm2705, %v2613, 0
      %v2710 = vsel %vm2705, %v2614, 0
      %v2713 = vsel %vm2705, %v2615, 0
      %v2716 = vsel %vm2705, %v2616, 0
      %v2719 = vsel %vm2705, %v2617, 0
      %v2722 = vsel %vm2705, %v2618, 0
      %v2725 = vsel %vm2705, %v2619, 0
      %v2728 = vsel %vm2705, %v2620, 0
      %v2731 = vsel %vm2705, %v2621, 0
      %v2734 = vsel %vm2705, %v2622, 0
      %v2737 = vsel %vm2705, %v2623, 0
      %v2740 = vsel %vm2705, %v2624, 0
      %v2743 = vsel %vm2705, %v2625, 0
      %v2746 = vsel %vm2705, %v2626, 0
      %v2749 = vsel %vm2705, %v2627, 0
      %v2752 = vsel %vm2705, %v2628, 0
      %2754 = vmatprep.subr.mxu0 %v2606
      %2755 = vmatpush1.msra.mxu0 %v2605
      %2756 = vmatprep.subr.mxu0 %v2608
      %2757 = vmatpush1.msra.mxu0 %v2607
      %2758 = vmatprep.subr.mxu0 %v2610
      %2759 = vmatpush1.msra.mxu0 %v2609
      %2760 = vmatprep.subr.mxu0 %v2612
      %2761 = vmatpush1.msra.mxu0 %v2611
      %2762 = vmatprep.subr.mxu0 0.0
      %2763 = vmatpush1.msra.mxu0 0.0
      %2764 = vmatprep.subr.mxu0 0.0
      %2765 = vmatpush1.msra.mxu0 0.0
      %2766 = vmatprep.subr.mxu0 0.0
      %2767 = vmatpush1.msra.mxu0 0.0
      %2768 = vmatprep.subr.mxu0 0.0
      %2769 = vmatpush1.msra.mxu0 0.0
      %2770 = vmatprep.subr.mxu0 0.0
      %2771 = vmatpush1.msra.mxu0 0.0
      %2772 = vmatprep.subr.mxu0 0.0
      %2773 = vmatpush1.msra.mxu0 0.0
      %2774 = vmatprep.subr.mxu0 0.0
      %2775 = vmatpush1.msra.mxu0 0.0
      %2776 = vmatprep.subr.mxu0 0.0
      %2777 = vmatpush1.msra.mxu0 0.0
      %2778 = vmatprep.subr.mxu0 0.0
      %2779 = vmatpush1.msra.mxu0 0.0
      %2780 = vmatprep.subr.mxu0 0.0
      %2781 = vmatpush1.msra.mxu0 0.0
      %2782 = vmatprep.subr.mxu0 0.0
      %2783 = vmatpush1.msra.mxu0 0.0
      %2784 = vmatprep.subr.mxu0 0.0
      %2785 = vmatpush1.msra.mxu0 0.0
      %2786 = vmatprep.subr.mxu0 0.0
      %2787 = vmatpush1.msra.mxu0 0.0
      %2788 = vmatprep.subr.mxu0 0.0
      %2789 = vmatpush1.msra.mxu0 0.0
      %2790 = vmatprep.subr.mxu0 0.0
      %2791 = vmatpush1.msra.mxu0 0.0
      %2792 = vmatprep.subr.mxu0 0.0
      %2793 = vmatpush1.msra.mxu0 0.0
      %2794 = vmatprep.subr.mxu0 0.0
      %2795 = vmatpush1.msra.mxu0 0.0
      %2796 = vmatprep.subr.mxu0 0.0
      %2797 = vmatpush1.msra.mxu0 0.0
      %2798 = vmatprep.subr.mxu0 0.0
      %2799 = vmatpush1.msra.mxu0 0.0
      %2800 = vmatprep.subr.mxu0 0.0
      %2801 = vmatpush1.msra.mxu0 0.0
      %2802 = vmatprep.subr.mxu0 0.0
      %2803 = vmatpush1.msra.mxu0 0.0
      %2804 = vmatprep.subr.mxu0 0.0
      %2805 = vmatpush1.msra.mxu0 0.0
      %2806 = vmatprep.subr.mxu0 0.0
      %2807 = vmatpush1.msra.mxu0 0.0
      %2808 = vmatprep.subr.mxu0 0.0
      %2809 = vmatpush1.msra.mxu0 0.0
      %2810 = vmatprep.subr.mxu0 0.0
      %2811 = vmatpush1.msra.mxu0 0.0
      %2812 = vmatprep.subr.mxu0 0.0
      %2813 = vmatpush1.msra.mxu0 0.0
      %2814 = vmatprep.subr.mxu0 0.0
      %2815 = vmatpush1.msra.mxu0 0.0
      %2816 = vmatprep.subr.mxu0 0.0
      %2817 = vmatpush1.msra.mxu0 0.0
      %2818 = vmatprep.mubr.f32.mxu0 0.0
      %2819 = vmatmul.mubr.f32.gmra.mrb[0].mxu0 %v2707
      %v2820 = vpop.f32.mrb[0].mxu0
      %v2821 = vadd.f32 %v2631, %v2820
      %v2822 = vpop.f32.mrb[0].mxu0
      %v2823 = vadd.f32 %v2631, %v2822
      %2824 = vmatprep.mubr.f32.mxu0 0.0
      %2825 = vmatmul.mubr.f32.gmra.mrb[0].mxu0 %v2710
      %v2826 = vpop.f32.mrb[0].mxu0
      %v2827 = vadd.f32 %v2635, %v2826
      %v2828 = vpop.f32.mrb[0].mxu0
      %v2829 = vadd.f32 %v2635, %v2828
      %2830 = vmatprep.mubr.f32.mxu0 0.0
      %2831 = vmatmul.mubr.f32.gmra.mrb[0].mxu0 %v2713
      %v2832 = vpop.f32.mrb[0].mxu0
      %v2833 = vadd.f32 %v2639, %v2832
      %v2834 = vpop.f32.mrb[0].mxu0
      %v2835 = vadd.f32 %v2639, %v2834
      %2836 = vmatprep.mubr.f32.mxu0 0.0
      %2837 = vmatmul.mubr.f32.gmra.mrb[0].mxu0 %v2716
      %v2838 = vpop.f32.mrb[0].mxu0
      %v2839 = vadd.f32 %v2643, %v2838
      %v2840 = vpop.f32.mrb[0].mxu0
      %v2841 = vadd.f32 %v2643, %v2840
      %2842 = vmatprep.mubr.f32.mxu0 0.0
      %2843 = vmatmul.mubr.f32.gmra.mrb[0].mxu0 %v2719
      %v2844 = vpop.f32.mrb[0].mxu0
      %v2845 = vadd.f32 %v2648, %v2844
      %v2846 = vpop.f32.mrb[0].mxu0
      %v2847 = vadd.f32 %v2648, %v2846
      %2848 = vmatprep.mubr.f32.mxu0 0.0
      %2849 = vmatmul.mubr.f32.gmra.mrb[0].mxu0 %v2722
      %v2850 = vpop.f32.mrb[0].mxu0
      %v2851 = vadd.f32 %v2653, %v2850
      %v2852 = vpop.f32.mrb[0].mxu0
      %v2853 = vadd.f32 %v2653, %v2852
      %2854 = vmatprep.mubr.f32.mxu0 0.0
      %2855 = vmatmul.mubr.f32.gmra.mrb[0].mxu0 %v2725
      %v2856 = vpop.f32.mrb[0].mxu0
      %v2857 = vadd.f32 %v2658, %v2856
      %v2858 = vpop.f32.mrb[0].mxu0
      %v2859 = vadd.f32 %v2658, %v2858
      %2860 = vmatprep.mubr.f32.mxu0 0.0
      %2861 = vmatmul.mubr.f32.gmra.mrb[0].mxu0 %v2728
      %v2862 = vpop.f32.mrb[0].mxu0
      %v2863 = vadd.f32 %v2663, %v2862
      %v2864 = vpop.f32.mrb[0].mxu0
      %v2865 = vadd.f32 %v2663, %v2864
      %2866 = vmatprep.mubr.f32.mxu0 0.0
      %2867 = vmatmul.mubr.f32.gmra.mrb[0].mxu0 %v2731
      %v2868 = vpop.f32.mrb[0].mxu0
      %v2869 = vadd.f32 %v2668, %v2868
      %v2870 = vpop.f32.mrb[0].mxu0
      %v2871 = vadd.f32 %v2668, %v2870
      %2872 = vmatprep.mubr.f32.mxu0 0.0
      %2873 = vmatmul.mubr.f32.gmra.mrb[0].mxu0 %v2734
      %v2874 = vpop.f32.mrb[0].mxu0
      %v2875 = vadd.f32 %v2673, %v2874
      %v2876 = vpop.f32.mrb[0].mxu0
      %v2877 = vadd.f32 %v2673, %v2876
      %2878 = vmatprep.mubr.f32.mxu0 0.0
      %2879 = vmatmul.mubr.f32.gmra.mrb[0].mxu0 %v2737
      %v2880 = vpop.f32.mrb[0].mxu0
      %v2881 = vadd.f32 %v2678, %v2880
      %v2882 = vpop.f32.mrb[0].mxu0
      %v2883 = vadd.f32 %v2678, %v2882
      %2884 = vmatprep.mubr.f32.mxu0 0.0
      %2885 = vmatmul.mubr.f32.gmra.mrb[0].mxu0 %v2740
      %v2886 = vpop.f32.mrb[0].mxu0
      %v2887 = vadd.f32 %v2683, %v2886
      %v2888 = vpop.f32.mrb[0].mxu0
      %v2889 = vadd.f32 %v2683, %v2888
      %2890 = vmatprep.mubr.f32.mxu0 0.0
      %2891 = vmatmul.mubr.f32.gmra.mrb[0].mxu0 %v2743
      %v2892 = vpop.f32.mrb[0].mxu0
      %v2893 = vadd.f32 %v2688, %v2892
      %v2894 = vpop.f32.mrb[0].mxu0
      %v2895 = vadd.f32 %v2688, %v2894
      %2896 = vmatprep.mubr.f32.mxu0 0.0
      %2897 = vmatmul.mubr.f32.gmra.mrb[0].mxu0 %v2746
      %v2898 = vpop.f32.mrb[0].mxu0
      %v2899 = vadd.f32 %v2693, %v2898
      %v2900 = vpop.f32.mrb[0].mxu0
      %v2901 = vadd.f32 %v2693, %v2900
      %2902 = vmatprep.mubr.f32.mxu0 0.0
      %2903 = vmatmul.mubr.f32.gmra.mrb[0].mxu0 %v2749
      %v2904 = vpop.f32.mrb[0].mxu0
      %v2905 = vadd.f32 %v2698, %v2904
      %v2906 = vpop.f32.mrb[0].mxu0
      %v2907 = vadd.f32 %v2698, %v2906
      %2908 = vmatprep.mubr.f32.mxu0 0.0
      %2909 = vmatmul.mubr.f32.gmra.mrb[0].mxu0 %v2752
      %v2910 = vpop.f32.mrb[0].mxu0
      %v2911 = vadd.f32 %v2703, %v2910
      %v2912 = vpop.f32.mrb[0].mxu0
      %v2913 = vadd.f32 %v2703, %v2912
      %2914 = vdwg.mxu0
      %v2915 = vmul.f32 %v2821, 0.5
      %v2916 = vmul.f32 %v2823, 0.5
      %v2917 = vmul.f32 %v2827, 0.5
      %v2918 = vmul.f32 %v2829, 0.5
      %v2919 = vmul.f32 %v2833, 0.5
      %v2920 = vmul.f32 %v2835, 0.5
      %v2921 = vmul.f32 %v2839, 0.5
      %v2922 = vmul.f32 %v2841, 0.5
      %v2923 = vmul.f32 %v2845, 0.5
      %v2924 = vmul.f32 %v2847, 0.5
      %v2925 = vmul.f32 %v2851, 0.5
      %v2926 = vmul.f32 %v2853, 0.5
      %v2927 = vmul.f32 %v2857, 0.5
      %v2928 = vmul.f32 %v2859, 0.5
      %v2929 = vmul.f32 %v2863, 0.5
      %v2930 = vmul.f32 %v2865, 0.5
      %v2931 = vmul.f32 %v2869, 0.5
      %v2932 = vmul.f32 %v2871, 0.5
      %v2933 = vmul.f32 %v2875, 0.5
      %v2934 = vmul.f32 %v2877, 0.5
      %v2935 = vmul.f32 %v2881, 0.5
      %v2936 = vmul.f32 %v2883, 0.5
      %v2937 = vmul.f32 %v2887, 0.5
      %v2938 = vmul.f32 %v2889, 0.5
      %v2939 = vmul.f32 %v2893, 0.5
      %v2940 = vmul.f32 %v2895, 0.5
      %v2941 = vmul.f32 %v2899, 0.5
      %v2942 = vmul.f32 %v2901, 0.5
      %v2943 = vmul.f32 %v2905, 0.5
      %v2944 = vmul.f32 %v2907, 0.5
      %v2945 = vmul.f32 %v2911, 0.5
      %v2946 = vmul.f32 %v2913, 0.5
      %v2947 = vmul.f32 %v2821, %v2821
      %v2948 = vmul.f32 %v2823, %v2823
      %v2949 = vmul.f32 %v2827, %v2827
      %v2950 = vmul.f32 %v2829, %v2829
      %v2951 = vmul.f32 %v2833, %v2833
      %v2952 = vmul.f32 %v2835, %v2835
      %v2953 = vmul.f32 %v2839, %v2839
      %v2954 = vmul.f32 %v2841, %v2841
      %v2955 = vmul.f32 %v2845, %v2845
      %v2956 = vmul.f32 %v2847, %v2847
      %v2957 = vmul.f32 %v2851, %v2851
      %v2958 = vmul.f32 %v2853, %v2853
      %v2959 = vmul.f32 %v2857, %v2857
      %v2960 = vmul.f32 %v2859, %v2859
      %v2961 = vmul.f32 %v2863, %v2863
      %v2962 = vmul.f32 %v2865, %v2865
      %v2963 = vmul.f32 %v2869, %v2869
      %v2964 = vmul.f32 %v2871, %v2871
      %v2965 = vmul.f32 %v2875, %v2875
      %v2966 = vmul.f32 %v2877, %v2877
      %v2967 = vmul.f32 %v2881, %v2881
      %v2968 = vmul.f32 %v2883, %v2883
      %v2969 = vmul.f32 %v2887, %v2887
      %v2970 = vmul.f32 %v2889, %v2889
      %v2971 = vmul.f32 %v2893, %v2893
      %v2972 = vmul.f32 %v2895, %v2895
      %v2973 = vmul.f32 %v2899, %v2899
      %v2974 = vmul.f32 %v2901, %v2901
      %v2975 = vmul.f32 %v2905, %v2905
      %v2976 = vmul.f32 %v2907, %v2907
      %v2977 = vmul.f32 %v2911, %v2911
      %v2978 = vmul.f32 %v2913, %v2913
      %v2979 = vmul.f32 %v2947, %v2821
      %v2980 = vmul.f32 %v2948, %v2823
      %v2981 = vmul.f32 %v2949, %v2827
      %v2982 = vmul.f32 %v2950, %v2829
      %v2983 = vmul.f32 %v2951, %v2833
      %v2984 = vmul.f32 %v2952, %v2835
      %v2985 = vmul.f32 %v2953, %v2839
      %v2986 = vmul.f32 %v2954, %v2841
      %v2987 = vmul.f32 %v2955, %v2845
      %v2988 = vmul.f32 %v2956, %v2847
      %v2989 = vmul.f32 %v2957, %v2851
      %v2990 = vmul.f32 %v2958, %v2853
      %v2991 = vmul.f32 %v2959, %v2857
      %v2992 = vmul.f32 %v2960, %v2859
      %v2993 = vmul.f32 %v2961, %v2863
      %v2994 = vmul.f32 %v2962, %v2865
      %v2995 = vmul.f32 %v2963, %v2869
      %v2996 = vmul.f32 %v2964, %v2871
      %v2997 = vmul.f32 %v2965, %v2875
      %v2998 = vmul.f32 %v2966, %v2877
      %v2999 = vmul.f32 %v2967, %v2881
      %v3000 = vmul.f32 %v2968, %v2883
      %v3001 = vmul.f32 %v2969, %v2887
      %v3002 = vmul.f32 %v2970, %v2889
      %v3003 = vmul.f32 %v2971, %v2893
      %v3004 = vmul.f32 %v2972, %v2895
      %v3005 = vmul.f32 %v2973, %v2899
      %v3006 = vmul.f32 %v2974, %v2901
      %v3007 = vmul.f32 %v2975, %v2905
      %v3008 = vmul.f32 %v2976, %v2907
      %v3009 = vmul.f32 %v2977, %v2911
      %v3010 = vmul.f32 %v2978, %v2913
      %v3011 = vmul.f32 %v2979, 0.044715
      %v3012 = vmul.f32 %v2980, 0.044715
      %v3013 = vmul.f32 %v2981, 0.044715
      %v3014 = vmul.f32 %v2982, 0.044715
      %v3015 = vmul.f32 %v2983, 0.044715
      %v3016 = vmul.f32 %v2984, 0.044715
      %v3017 = vmul.f32 %v2985, 0.044715
      %v3018 = vmul.f32 %v2986, 0.044715
      %v3019 = vmul.f32 %v2987, 0.044715
      %v3020 = vmul.f32 %v2988, 0.044715
      %v3021 = vmul.f32 %v2989, 0.044715
      %v3022 = vmul.f32 %v2990, 0.044715
      %v3023 = vmul.f32 %v2991, 0.044715
      %v3024 = vmul.f32 %v2992, 0.044715
      %v3025 = vmul.f32 %v2993, 0.044715
      %v3026 = vmul.f32 %v2994, 0.044715
      %v3027 = vmul.f32 %v2995, 0.044715
      %v3028 = vmul.f32 %v2996, 0.044715
      %v3029 = vmul.f32 %v2997, 0.044715
      %v3030 = vmul.f32 %v2998, 0.044715
      %v3031 = vmul.f32 %v2999, 0.044715
      %v3032 = vmul.f32 %v3000, 0.044715
      %v3033 = vmul.f32 %v3001, 0.044715
      %v3034 = vmul.f32 %v3002, 0.044715
      %v3035 = vmul.f32 %v3003, 0.044715
      %v3036 = vmul.f32 %v3004, 0.044715
      %v3037 = vmul.f32 %v3005, 0.044715
      %v3038 = vmul.f32 %v3006, 0.044715
      %v3039 = vmul.f32 %v3007, 0.044715
      %v3040 = vmul.f32 %v3008, 0.044715
      %v3041 = vmul.f32 %v3009, 0.044715
      %v3042 = vmul.f32 %v3010, 0.044715
      %v3043 = vadd.f32 %v2821, %v3011
      %v3044 = vadd.f32 %v2823, %v3012
      %v3045 = vadd.f32 %v2827, %v3013
      %v3046 = vadd.f32 %v2829, %v3014
      %v3047 = vadd.f32 %v2833, %v3015
      %v3048 = vadd.f32 %v2835, %v3016
      %v3049 = vadd.f32 %v2839, %v3017
      %v3050 = vadd.f32 %v2841, %v3018
      %v3051 = vadd.f32 %v2845, %v3019
      %v3052 = vadd.f32 %v2847, %v3020
      %v3053 = vadd.f32 %v2851, %v3021
      %v3054 = vadd.f32 %v2853, %v3022
      %v3055 = vadd.f32 %v2857, %v3023
      %v3056 = vadd.f32 %v2859, %v3024
      %v3057 = vadd.f32 %v2863, %v3025
      %v3058 = vadd.f32 %v2865, %v3026
      %v3059 = vadd.f32 %v2869, %v3027
      %v3060 = vadd.f32 %v2871, %v3028
      %v3061 = vadd.f32 %v2875, %v3029
      %v3062 = vadd.f32 %v2877, %v3030
      %v3063 = vadd.f32 %v2881, %v3031
      %v3064 = vadd.f32 %v2883, %v3032
      %v3065 = vadd.f32 %v2887, %v3033
      %v3066 = vadd.f32 %v2889, %v3034
      %v3067 = vadd.f32 %v2893, %v3035
      %v3068 = vadd.f32 %v2895, %v3036
      %v3069 = vadd.f32 %v2899, %v3037
      %v3070 = vadd.f32 %v2901, %v3038
      %v3071 = vadd.f32 %v2905, %v3039
      %v3072 = vadd.f32 %v2907, %v3040
      %v3073 = vadd.f32 %v2911, %v3041
      %v3074 = vadd.f32 %v2913, %v3042
      %v3075 = vmul.f32 %v3043, 0.7978846
      %v3076 = vmul.f32 %v3044, 0.7978846
      %v3077 = vmul.f32 %v3045, 0.7978846
      %v3078 = vmul.f32 %v3046, 0.7978846
      %v3079 = vmul.f32 %v3047, 0.7978846
      %v3080 = vmul.f32 %v3048, 0.7978846
      %v3081 = vmul.f32 %v3049, 0.7978846
      %v3082 = vmul.f32 %v3050, 0.7978846
      %v3083 = vmul.f32 %v3051, 0.7978846
      %v3084 = vmul.f32 %v3052, 0.7978846
      %v3085 = vmul.f32 %v3053, 0.7978846
      %v3086 = vmul.f32 %v3054, 0.7978846
      %v3087 = vmul.f32 %v3055, 0.7978846
      %v3088 = vmul.f32 %v3056, 0.7978846
      %v3089 = vmul.f32 %v3057, 0.7978846
      %v3090 = vmul.f32 %v3058, 0.7978846
      %v3091 = vmul.f32 %v3059, 0.7978846
      %v3092 = vmul.f32 %v3060, 0.7978846
      %v3093 = vmul.f32 %v3061, 0.7978846
      %v3094 = vmul.f32 %v3062, 0.7978846
      %v3095 = vmul.f32 %v3063, 0.7978846
      %v3096 = vmul.f32 %v3064, 0.7978846
      %v3097 = vmul.f32 %v3065, 0.7978846
      %v3098 = vmul.f32 %v3066, 0.7978846
      %v3099 = vmul.f32 %v3067, 0.7978846
      %v3100 = vmul.f32 %v3068, 0.7978846
      %v3101 = vmul.f32 %v3069, 0.7978846
      %v3102 = vmul.f32 %v3070, 0.7978846
      %v3103 = vmul.f32 %v3071, 0.7978846
      %v3104 = vmul.f32 %v3072, 0.7978846
      %v3105 = vmul.f32 %v3073, 0.7978846
      %v3106 = vmul.f32 %v3074, 0.7978846
      %v3107 = vtanh.pop %v3075
      %v3108 = vtanh.pop %v3076
      %v3109 = vtanh.pop %v3077
      %v3110 = vtanh.pop %v3078
      %v3111 = vtanh.pop %v3079
      %v3112 = vtanh.pop %v3080
      %v3113 = vtanh.pop %v3081
      %v3114 = vtanh.pop %v3082
      %v3115 = vtanh.pop %v3083
      %v3116 = vtanh.pop %v3084
      %v3117 = vtanh.pop %v3085
      %v3118 = vtanh.pop %v3086
      %v3119 = vtanh.pop %v3087
      %v3120 = vtanh.pop %v3088
      %v3121 = vtanh.pop %v3089
      %v3122 = vtanh.pop %v3090
      %v3123 = vtanh.pop %v3091
      %v3124 = vtanh.pop %v3092
      %v3125 = vtanh.pop %v3093
      %v3126 = vtanh.pop %v3094
      %v3127 = vtanh.pop %v3095
      %v3128 = vtanh.pop %v3096
      %v3129 = vtanh.pop %v3097
      %v3130 = vtanh.pop %v3098
      %v3131 = vtanh.pop %v3099
      %v3132 = vtanh.pop %v3100
      %v3133 = vtanh.pop %v3101
      %v3134 = vtanh.pop %v3102
      %v3135 = vtanh.pop %v3103
      %v3136 = vtanh.pop %v3104
      %v3137 = vtanh.pop %v3105
      %v3138 = vtanh.pop %v3106
      %v3139 = vadd.f32 %v3107, 1.0
      %v3140 = vadd.f32 %v3108, 1.0
      %v3141 = vadd.f32 %v3109, 1.0
      %v3142 = vadd.f32 %v3110, 1.0
      %v3143 = vadd.f32 %v3111, 1.0
      %v3144 = vadd.f32 %v3112, 1.0
      %v3145 = vadd.f32 %v3113, 1.0
      %v3146 = vadd.f32 %v3114, 1.0
      %v3147 = vadd.f32 %v3115, 1.0
      %v3148 = vadd.f32 %v3116, 1.0
      %v3149 = vadd.f32 %v3117, 1.0
      %v3150 = vadd.f32 %v3118, 1.0
      %v3151 = vadd.f32 %v3119, 1.0
      %v3152 = vadd.f32 %v3120, 1.0
      %v3153 = vadd.f32 %v3121, 1.0
      %v3154 = vadd.f32 %v3122, 1.0
      %v3155 = vadd.f32 %v3123, 1.0
      %v3156 = vadd.f32 %v3124, 1.0
      %v3157 = vadd.f32 %v3125, 1.0
      %v3158 = vadd.f32 %v3126, 1.0
      %v3159 = vadd.f32 %v3127, 1.0
      %v3160 = vadd.f32 %v3128, 1.0
      %v3161 = vadd.f32 %v3129, 1.0
      %v3162 = vadd.f32 %v3130, 1.0
      %v3163 = vadd.f32 %v3131, 1.0
      %v3164 = vadd.f32 %v3132, 1.0
      %v3165 = vadd.f32 %v3133, 1.0
      %v3166 = vadd.f32 %v3134, 1.0
      %v3167 = vadd.f32 %v3135, 1.0
      %v3168 = vadd.f32 %v3136, 1.0
      %v3169 = vadd.f32 %v3137, 1.0
      %v3170 = vadd.f32 %v3138, 1.0
      %v3171 = vmul.f32 %v2915, %v3139
      %v3172 = vmul.f32 %v2916, %v3140
      %v3173 = vmul.f32 %v2917, %v3141
      %v3174 = vmul.f32 %v2918, %v3142
      %v3175 = vmul.f32 %v2919, %v3143
      %v3176 = vmul.f32 %v2920, %v3144
      %v3177 = vmul.f32 %v2921, %v3145
      %v3178 = vmul.f32 %v2922, %v3146
      %v3179 = vmul.f32 %v2923, %v3147
      %v3180 = vmul.f32 %v2924, %v3148
      %v3181 = vmul.f32 %v2925, %v3149
      %v3182 = vmul.f32 %v2926, %v3150
      %v3183 = vmul.f32 %v2927, %v3151
      %v3184 = vmul.f32 %v2928, %v3152
      %v3185 = vmul.f32 %v2929, %v3153
      %v3186 = vmul.f32 %v2930, %v3154
      %v3187 = vmul.f32 %v2931, %v3155
      %v3188 = vmul.f32 %v2932, %v3156
      %v3189 = vmul.f32 %v2933, %v3157
      %v3190 = vmul.f32 %v2934, %v3158
      %v3191 = vmul.f32 %v2935, %v3159
      %v3192 = vmul.f32 %v2936, %v3160
      %v3193 = vmul.f32 %v2937, %v3161
      %v3194 = vmul.f32 %v2938, %v3162
      %v3195 = vmul.f32 %v2939, %v3163
      %v3196 = vmul.f32 %v2940, %v3164
      %v3197 = vmul.f32 %v2941, %v3165
      %v3198 = vmul.f32 %v2942, %v3166
      %v3199 = vmul.f32 %v2943, %v3167
      %v3200 = vmul.f32 %v2944, %v3168
      %v3201 = vmul.f32 %v2945, %v3169
      %v3202 = vmul.f32 %v2946, %v3170
      %v3203 = vmul.f32 %v3171, %v3171
      %v3204 = vmul.f32 %v3172, %v3172
      %v3205 = vmul.f32 %v3173, %v3173
      %v3206 = vmul.f32 %v3174, %v3174
      %v3207 = vmul.f32 %v3175, %v3175
      %v3208 = vmul.f32 %v3176, %v3176
      %v3209 = vmul.f32 %v3177, %v3177
      %v3210 = vmul.f32 %v3178, %v3178
      %v3211 = vmul.f32 %v3179, %v3179
      %v3212 = vmul.f32 %v3180, %v3180
      %v3213 = vmul.f32 %v3181, %v3181
      %v3214 = vmul.f32 %v3182, %v3182
      %v3215 = vmul.f32 %v3183, %v3183
      %v3216 = vmul.f32 %v3184, %v3184
      %v3217 = vmul.f32 %v3185, %v3185
      %v3218 = vmul.f32 %v3186, %v3186
      %v3219 = vmul.f32 %v3187, %v3187
      %v3220 = vmul.f32 %v3188, %v3188
      %v3221 = vmul.f32 %v3189, %v3189
      %v3222 = vmul.f32 %v3190, %v3190
      %v3223 = vmul.f32 %v3191, %v3191
      %v3224 = vmul.f32 %v3192, %v3192
      %v3225 = vmul.f32 %v3193, %v3193
      %v3226 = vmul.f32 %v3194, %v3194
      %v3227 = vmul.f32 %v3195, %v3195
      %v3228 = vmul.f32 %v3196, %v3196
      %v3229 = vmul.f32 %v3197, %v3197
      %v3230 = vmul.f32 %v3198, %v3198
      %v3231 = vmul.f32 %v3199, %v3199
      %v3232 = vmul.f32 %v3200, %v3200
      %v3233 = vmul.f32 %v3201, %v3201
      %v3234 = vmul.f32 %v3202, %v3202
      %v3235 = vadd.f32 %v3203, %v3204
      %3236 = vadd.xlane.f32.xlu0 %v3235
      %v3237 = vpop.xlane.xlu0 %3236
      %v3238 = vadd.f32 %v3205, %v3206
      %3239 = vadd.xlane.f32.xlu0 %v3238
      %v3240 = vpop.xlane.xlu0 %3239
      %v3241 = vadd.f32 %v3207, %v3208
      %3242 = vadd.xlane.f32.xlu0 %v3241
      %v3243 = vpop.xlane.xlu0 %3242
      %v3244 = vadd.f32 %v3209, %v3210
      %3245 = vadd.xlane.f32.xlu0 %v3244
      %v3246 = vpop.xlane.xlu0 %3245
      %v3247 = vadd.f32 %v3211, %v3212
      %3248 = vadd.xlane.f32.xlu0 %v3247
      %v3249 = vpop.xlane.xlu0 %3248
      %v3250 = vadd.f32 %v3213, %v3214
      %3251 = vadd.xlane.f32.xlu0 %v3250
      %v3252 = vpop.xlane.xlu0 %3251
      %v3253 = vadd.f32 %v3215, %v3216
      %3254 = vadd.xlane.f32.xlu0 %v3253
      %v3255 = vpop.xlane.xlu0 %3254
      %v3256 = vadd.f32 %v3217, %v3218
      %3257 = vadd.xlane.f32.xlu0 %v3256
      %v3258 = vpop.xlane.xlu0 %3257
      %v3259 = vadd.f32 %v3219, %v3220
      %3260 = vadd.xlane.f32.xlu0 %v3259
      %v3261 = vpop.xlane.xlu0 %3260
      %v3262 = vadd.f32 %v3221, %v3222
      %3263 = vadd.xlane.f32.xlu0 %v3262
      %v3264 = vpop.xlane.xlu0 %3263
      %v3265 = vadd.f32 %v3223, %v3224
      %3266 = vadd.xlane.f32.xlu0 %v3265
      %v3267 = vpop.xlane.xlu0 %3266
      %v3268 = vadd.f32 %v3225, %v3226
      %3269 = vadd.xlane.f32.xlu0 %v3268
      %v3270 = vpop.xlane.xlu0 %3269
      %v3271 = vadd.f32 %v3227, %v3228
      %3272 = vadd.xlane.f32.xlu0 %v3271
      %v3273 = vpop.xlane.xlu0 %3272
      %v3274 = vadd.f32 %v3229, %v3230
      %3275 = vadd.xlane.f32.xlu0 %v3274
      %v3276 = vpop.xlane.xlu0 %3275
      %v3277 = vadd.f32 %v3231, %v3232
      %3278 = vadd.xlane.f32.xlu0 %v3277
      %v3279 = vpop.xlane.xlu0 %3278
      %v3280 = vadd.f32 %v3233, %v3234
      %3281 = vadd.xlane.f32.xlu0 %v3280
      %v3282 = vpop.xlane.xlu0 %3281
      %v3283 = vrsqrt.pop %v3237
      %v3284 = vmul.f32 %v3237, %v3283
      %vm3285 = vcmp.eq.f32.partialorder %v3237, inf
      %v3286 = vsel %vm3285, %v3237, %v3284
      %vm3287 = vcmp.eq.f32.partialorder %v3237, 0.0
      %v3288 = vand.u32 %v3237, 2147483648
      %v3289 = vsel %vm3287, %v3288, %v3286
      %v3290 = vrsqrt.pop %v3240
      %v3291 = vmul.f32 %v3240, %v3290
      %vm3292 = vcmp.eq.f32.partialorder %v3240, inf
      %v3293 = vsel %vm3292, %v3240, %v3291
      %vm3294 = vcmp.eq.f32.partialorder %v3240, 0.0
      %v3295 = vand.u32 %v3240, 2147483648
      %v3296 = vsel %vm3294, %v3295, %v3293
      %v3297 = vrsqrt.pop %v3243
      %v3298 = vmul.f32 %v3243, %v3297
      %vm3299 = vcmp.eq.f32.partialorder %v3243, inf
      %v3300 = vsel %vm3299, %v3243, %v3298
      %vm3301 = vcmp.eq.f32.partialorder %v3243, 0.0
      %v3302 = vand.u32 %v3243, 2147483648
      %v3303 = vsel %vm3301, %v3302, %v3300
      %v3304 = vrsqrt.pop %v3246
      %v3305 = vmul.f32 %v3246, %v3304
      %vm3306 = vcmp.eq.f32.partialorder %v3246, inf
      %v3307 = vsel %vm3306, %v3246, %v3305
      %vm3308 = vcmp.eq.f32.partialorder %v3246, 0.0
      %v3309 = vand.u32 %v3246, 2147483648
      %v3310 = vsel %vm3308, %v3309, %v3307
      %v3311 = vrsqrt.pop %v3249
      %v3312 = vmul.f32 %v3249, %v3311
      %vm3313 = vcmp.eq.f32.partialorder %v3249, inf
      %v3314 = vsel %vm3313, %v3249, %v3312
      %vm3315 = vcmp.eq.f32.partialorder %v3249, 0.0
      %v3316 = vand.u32 %v3249, 2147483648
      %v3317 = vsel %vm3315, %v3316, %v3314
      %v3318 = vrsqrt.pop %v3252
      %v3319 = vmul.f32 %v3252, %v3318
      %vm3320 = vcmp.eq.f32.partialorder %v3252, inf
      %v3321 = vsel %vm3320, %v3252, %v3319
      %vm3322 = vcmp.eq.f32.partialorder %v3252, 0.0
      %v3323 = vand.u32 %v3252, 2147483648
      %v3324 = vsel %vm3322, %v3323, %v3321
      %v3325 = vrsqrt.pop %v3255
      %v3326 = vmul.f32 %v3255, %v3325
      %vm3327 = vcmp.eq.f32.partialorder %v3255, inf
      %v3328 = vsel %vm3327, %v3255, %v3326
      %vm3329 = vcmp.eq.f32.partialorder %v3255, 0.0
      %v3330 = vand.u32 %v3255, 2147483648
      %v3331 = vsel %vm3329, %v3330, %v3328
      %v3332 = vrsqrt.pop %v3258
      %v3333 = vmul.f32 %v3258, %v3332
      %vm3334 = vcmp.eq.f32.partialorder %v3258, inf
      %v3335 = vsel %vm3334, %v3258, %v3333
      %vm3336 = vcmp.eq.f32.partialorder %v3258, 0.0
      %v3337 = vand.u32 %v3258, 2147483648
      %v3338 = vsel %vm3336, %v3337, %v3335
      %v3339 = vrsqrt.pop %v3261
      %v3340 = vmul.f32 %v3261, %v3339
      %vm3341 = vcmp.eq.f32.partialorder %v3261, inf
      %v3342 = vsel %vm3341, %v3261, %v3340
      %vm3343 = vcmp.eq.f32.partialorder %v3261, 0.0
      %v3344 = vand.u32 %v3261, 2147483648
      %v3345 = vsel %vm3343, %v3344, %v3342
      %v3346 = vrsqrt.pop %v3264
      %v3347 = vmul.f32 %v3264, %v3346
      %vm3348 = vcmp.eq.f32.partialorder %v3264, inf
      %v3349 = vsel %vm3348, %v3264, %v3347
      %vm3350 = vcmp.eq.f32.partialorder %v3264, 0.0
      %v3351 = vand.u32 %v3264, 2147483648
      %v3352 = vsel %vm3350, %v3351, %v3349
      %v3353 = vrsqrt.pop %v3267
      %v3354 = vmul.f32 %v3267, %v3353
      %vm3355 = vcmp.eq.f32.partialorder %v3267, inf
      %v3356 = vsel %vm3355, %v3267, %v3354
      %vm3357 = vcmp.eq.f32.partialorder %v3267, 0.0
      %v3358 = vand.u32 %v3267, 2147483648
      %v3359 = vsel %vm3357, %v3358, %v3356
      %v3360 = vrsqrt.pop %v3270
      %v3361 = vmul.f32 %v3270, %v3360
      %vm3362 = vcmp.eq.f32.partialorder %v3270, inf
      %v3363 = vsel %vm3362, %v3270, %v3361
      %vm3364 = vcmp.eq.f32.partialorder %v3270, 0.0
      %v3365 = vand.u32 %v3270, 2147483648
      %v3366 = vsel %vm3364, %v3365, %v3363
      %v3367 = vrsqrt.pop %v3273
      %v3368 = vmul.f32 %v3273, %v3367
      %vm3369 = vcmp.eq.f32.partialorder %v3273, inf
      %v3370 = vsel %vm3369, %v3273, %v3368
      %vm3371 = vcmp.eq.f32.partialorder %v3273, 0.0
      %v3372 = vand.u32 %v3273, 2147483648
      %v3373 = vsel %vm3371, %v3372, %v3370
      %v3374 = vrsqrt.pop %v3276
      %v3375 = vmul.f32 %v3276, %v3374
      %vm3376 = vcmp.eq.f32.partialorder %v3276, inf
      %v3377 = vsel %vm3376, %v3276, %v3375
      %vm3378 = vcmp.eq.f32.partialorder %v3276, 0.0
      %v3379 = vand.u32 %v3276, 2147483648
      %v3380 = vsel %vm3378, %v3379, %v3377
      %v3381 = vrsqrt.pop %v3279
      %v3382 = vmul.f32 %v3279, %v3381
      %vm3383 = vcmp.eq.f32.partialorder %v3279, inf
      %v3384 = vsel %vm3383, %v3279, %v3382
      %vm3385 = vcmp.eq.f32.partialorder %v3279, 0.0
      %v3386 = vand.u32 %v3279, 2147483648
      %v3387 = vsel %vm3385, %v3386, %v3384
      %v3388 = vrsqrt.pop %v3282
      %v3389 = vmul.f32 %v3282, %v3388
      %vm3390 = vcmp.eq.f32.partialorder %v3282, inf
      %v3391 = vsel %vm3390, %v3282, %v3389
      %vm3392 = vcmp.eq.f32.partialorder %v3282, 0.0
      %v3393 = vand.u32 %v3282, 2147483648
      %v3394 = vsel %vm3392, %v3393, %v3391
      %v3395 = vadd.f32 %v3289, %v3296
      %v3396 = vadd.f32 %v3395, %v3303
      %v3397 = vadd.f32 %v3396, %v3310
      %v3398 = vadd.f32 %v3397, %v3317
      %v3399 = vadd.f32 %v3398, %v3324
      %v3400 = vadd.f32 %v3399, %v3331
      %v3401 = vadd.f32 %v3400, %v3338
      %v3402 = vadd.f32 %v3401, %v3345
      %v3403 = vadd.f32 %v3402, %v3352
      %v3404 = vadd.f32 %v3403, %v3359
      %v3405 = vadd.f32 %v3404, %v3366
      %v3406 = vadd.f32 %v3405, %v3373
      %v3407 = vadd.f32 %v3406, %v3380
      %v3408 = vadd.f32 %v3407, %v3387
      %v3409 = vadd.f32 %v3408, %v3394
      %v3410 = vrot.slane %v3409, 4
      %v3411 = vadd.f32 %v3409, %v3410
      %v3412 = vrot.slane %v3411, 2
      %v3413 = vadd.f32 %v3411, %v3412
      %v3414 = vrot.slane %v3413, 1
      %v3415 = vadd.f32 %v3413, %v3414
      %v3416 = vrcp.pop 128.0
      %v3417 = vmul.f32 %v3415, %v3416
      %v3418 = vadd.f32 %v3417, 1e-06
      %v3419 = vrcp.pop %v3418
      %v3420 = vmul.f32 %v3289, %v3419
      %v3421 = vmul.f32 %v3296, %v3419
      %v3422 = vmul.f32 %v3303, %v3419
      %v3423 = vmul.f32 %v3310, %v3419
      %v3424 = vmul.f32 %v3317, %v3419
      %v3425 = vmul.f32 %v3324, %v3419
      %v3426 = vmul.f32 %v3331, %v3419
      %v3427 = vmul.f32 %v3338, %v3419
      %v3428 = vmul.f32 %v3345, %v3419
      %v3429 = vmul.f32 %v3352, %v3419
      %v3430 = vmul.f32 %v3359, %v3419
      %v3431 = vmul.f32 %v3366, %v3419
      %v3432 = vmul.f32 %v3373, %v3419
      %v3433 = vmul.f32 %v3380, %v3419
      %v3434 = vmul.f32 %v3387, %v3419
      %v3435 = vmul.f32 %v3394, %v3419
      %v3436 = vmul.f32 %v3171, %v3420
      %v3437 = vmul.f32 %v3172, %v3420
      %v3438 = vmul.f32 %v3173, %v3421
      %v3439 = vmul.f32 %v3174, %v3421
      %v3440 = vmul.f32 %v3175, %v3422
      %v3441 = vmul.f32 %v3176, %v3422
      %v3442 = vmul.f32 %v3177, %v3423
      %v3443 = vmul.f32 %v3178, %v3423
      %v3444 = vmul.f32 %v3179, %v3424
      %v3445 = vmul.f32 %v3180, %v3424
      %v3446 = vmul.f32 %v3181, %v3425
      %v3447 = vmul.f32 %v3182, %v3425
      %v3448 = vmul.f32 %v3183, %v3426
      %v3449 = vmul.f32 %v3184, %v3426
      %v3450 = vmul.f32 %v3185, %v3427
      %v3451 = vmul.f32 %v3186, %v3427
      %v3452 = vmul.f32 %v3187, %v3428
      %v3453 = vmul.f32 %v3188, %v3428
      %v3454 = vmul.f32 %v3189, %v3429
      %v3455 = vmul.f32 %v3190, %v3429
      %v3456 = vmul.f32 %v3191, %v3430
      %v3457 = vmul.f32 %v3192, %v3430
      %v3458 = vmul.f32 %v3193, %v3431
      %v3459 = vmul.f32 %v3194, %v3431
      %v3460 = vmul.f32 %v3195, %v3432
      %v3461 = vmul.f32 %v3196, %v3432
      %v3462 = vmul.f32 %v3197, %v3433
      %v3463 = vmul.f32 %v3198, %v3433
      %v3464 = vmul.f32 %v3199, %v3434
      %v3465 = vmul.f32 %v3200, %v3434
      %v3466 = vmul.f32 %v3201, %v3435
      %v3467 = vmul.f32 %v3202, %v3435
      %3468 = vset.pattern.permute.xlu0 4
      %3469 = vperm.xlu0 %3468, %v252
      %v3470 = vpop.permute.xlu0 %3469
      %3472 = vset.pattern.permute.xlu0 4
      %3473 = vperm.xlu0 %3472, %v253
      %v3474 = vpop.permute.xlu0 %3473
      %3476 = vset.pattern.permute.xlu0 4
      %3477 = vperm.xlu0 %3476, %v254
      %v3478 = vpop.permute.xlu0 %3477
      %3480 = vset.pattern.permute.xlu0 4
      %3481 = vperm.xlu0 %3480, %v255
      %v3482 = vpop.permute.xlu0 %3481
      %3484 = vset.pattern.permute.xlu0 4
      %3485 = vperm.xlu0 %3484, %v256
      %v3486 = vpop.permute.xlu0 %3485
      %3488 = vset.pattern.permute.xlu0 4
      %3489 = vperm.xlu0 %3488, %v257
      %v3490 = vpop.permute.xlu0 %3489
      %3492 = vset.pattern.permute.xlu0 4
      %3493 = vperm.xlu0 %3492, %v258
      %v3494 = vpop.permute.xlu0 %3493
      %3496 = vset.pattern.permute.xlu0 4
      %3497 = vperm.xlu0 %3496, %v259
      %v3498 = vpop.permute.xlu0 %3497
      %3500 = vset.pattern.permute.xlu0 4
      %3501 = vperm.xlu0 %3500, %v260
      %v3502 = vpop.permute.xlu0 %3501
      %3504 = vset.pattern.permute.xlu0 4
      %3505 = vperm.xlu0 %3504, %v261
      %v3506 = vpop.permute.xlu0 %3505
      %3508 = vset.pattern.permute.xlu0 4
      %3509 = vperm.xlu0 %3508, %v262
      %v3510 = vpop.permute.xlu0 %3509
      %3512 = vset.pattern.permute.xlu0 4
      %3513 = vperm.xlu0 %3512, %v263
      %v3514 = vpop.permute.xlu0 %3513
      %3516 = vset.pattern.permute.xlu0 4
      %3517 = vperm.xlu0 %3516, %v264
      %v3518 = vpop.permute.xlu0 %3517
      %3520 = vset.pattern.permute.xlu0 4
      %3521 = vperm.xlu0 %3520, %v265
      %v3522 = vpop.permute.xlu0 %3521
      %3524 = vset.pattern.permute.xlu0 4
      %3525 = vperm.xlu0 %3524, %v266
      %v3526 = vpop.permute.xlu0 %3525
      %3528 = vset.pattern.permute.xlu0 4
      %3529 = vperm.xlu0 %3528, %v267
      %v3530 = vpop.permute.xlu0 %3529
      %v3532 = vmul.f32 %v3470, %v3436
      %v3533 = vmul.f32 %v3470, %v3437
      %v3534 = vmul.f32 %v3474, %v3438
      %v3535 = vmul.f32 %v3474, %v3439
      %v3536 = vmul.f32 %v3478, %v3440
      %v3537 = vmul.f32 %v3478, %v3441
      %v3538 = vmul.f32 %v3482, %v3442
      %v3539 = vmul.f32 %v3482, %v3443
      %v3540 = vmul.f32 %v3486, %v3444
      %v3541 = vmul.f32 %v3486, %v3445
      %v3542 = vmul.f32 %v3490, %v3446
      %v3543 = vmul.f32 %v3490, %v3447
      %v3544 = vmul.f32 %v3494, %v3448
      %v3545 = vmul.f32 %v3494, %v3449
      %v3546 = vmul.f32 %v3498, %v3450
      %v3547 = vmul.f32 %v3498, %v3451
      %v3548 = vmul.f32 %v3502, %v3452
      %v3549 = vmul.f32 %v3502, %v3453
      %v3550 = vmul.f32 %v3506, %v3454
      %v3551 = vmul.f32 %v3506, %v3455
      %v3552 = vmul.f32 %v3510, %v3456
      %v3553 = vmul.f32 %v3510, %v3457
      %v3554 = vmul.f32 %v3514, %v3458
      %v3555 = vmul.f32 %v3514, %v3459
      %v3556 = vmul.f32 %v3518, %v3460
      %v3557 = vmul.f32 %v3518, %v3461
      %v3558 = vmul.f32 %v3522, %v3462
      %v3559 = vmul.f32 %v3522, %v3463
      %v3560 = vmul.f32 %v3526, %v3464
      %v3561 = vmul.f32 %v3526, %v3465
      %v3562 = vmul.f32 %v3530, %v3466
      %v3563 = vmul.f32 %v3530, %v3467
      %3564 = vset.pattern.permute.xlu0 5
      %3565 = vperm.xlu0 %3564, %v252
      %v3566 = vpop.permute.xlu0 %3565
      %3568 = vset.pattern.permute.xlu0 5
      %3569 = vperm.xlu0 %3568, %v253
      %v3570 = vpop.permute.xlu0 %3569
      %3572 = vset.pattern.permute.xlu0 5
      %3573 = vperm.xlu0 %3572, %v254
      %v3574 = vpop.permute.xlu0 %3573
      %3576 = vset.pattern.permute.xlu0 5
      %3577 = vperm.xlu0 %3576, %v255
      %v3578 = vpop.permute.xlu0 %3577
      %3580 = vset.pattern.permute.xlu0 5
      %3581 = vperm.xlu0 %3580, %v256
      %v3582 = vpop.permute.xlu0 %3581
      %3584 = vset.pattern.permute.xlu0 5
      %3585 = vperm.xlu0 %3584, %v257
      %v3586 = vpop.permute.xlu0 %3585
      %3588 = vset.pattern.permute.xlu0 5
      %3589 = vperm.xlu0 %3588, %v258
      %v3590 = vpop.permute.xlu0 %3589
      %3592 = vset.pattern.permute.xlu0 5
      %3593 = vperm.xlu0 %3592, %v259
      %v3594 = vpop.permute.xlu0 %3593
      %3596 = vset.pattern.permute.xlu0 5
      %3597 = vperm.xlu0 %3596, %v260
      %v3598 = vpop.permute.xlu0 %3597
      %3600 = vset.pattern.permute.xlu0 5
      %3601 = vperm.xlu0 %3600, %v261
      %v3602 = vpop.permute.xlu0 %3601
      %3604 = vset.pattern.permute.xlu0 5
      %3605 = vperm.xlu0 %3604, %v262
      %v3606 = vpop.permute.xlu0 %3605
      %3608 = vset.pattern.permute.xlu0 5
      %3609 = vperm.xlu0 %3608, %v263
      %v3610 = vpop.permute.xlu0 %3609
      %3612 = vset.pattern.permute.xlu0 5
      %3613 = vperm.xlu0 %3612, %v264
      %v3614 = vpop.permute.xlu0 %3613
      %3616 = vset.pattern.permute.xlu0 5
      %3617 = vperm.xlu0 %3616, %v265
      %v3618 = vpop.permute.xlu0 %3617
      %3620 = vset.pattern.permute.xlu0 5
      %3621 = vperm.xlu0 %3620, %v266
      %v3622 = vpop.permute.xlu0 %3621
      %3624 = vset.pattern.permute.xlu0 5
      %3625 = vperm.xlu0 %3624, %v267
      %v3626 = vpop.permute.xlu0 %3625
      %v3628 = vadd.f32 %v3532, %v3566
      %v3629 = vadd.f32 %v3533, %v3566
      %v3630 = vadd.f32 %v3534, %v3570
      %v3631 = vadd.f32 %v3535, %v3570
      %v3632 = vadd.f32 %v3536, %v3574
      %v3633 = vadd.f32 %v3537, %v3574
      %v3634 = vadd.f32 %v3538, %v3578
      %v3635 = vadd.f32 %v3539, %v3578
      %v3636 = vadd.f32 %v3540, %v3582
      %v3637 = vadd.f32 %v3541, %v3582
      %v3638 = vadd.f32 %v3542, %v3586
      %v3639 = vadd.f32 %v3543, %v3586
      %v3640 = vadd.f32 %v3544, %v3590
      %v3641 = vadd.f32 %v3545, %v3590
      %v3642 = vadd.f32 %v3546, %v3594
      %v3643 = vadd.f32 %v3547, %v3594
      %v3644 = vadd.f32 %v3548, %v3598
      %v3645 = vadd.f32 %v3549, %v3598
      %v3646 = vadd.f32 %v3550, %v3602
      %v3647 = vadd.f32 %v3551, %v3602
      %v3648 = vadd.f32 %v3552, %v3606
      %v3649 = vadd.f32 %v3553, %v3606
      %v3650 = vadd.f32 %v3554, %v3610
      %v3651 = vadd.f32 %v3555, %v3610
      %v3652 = vadd.f32 %v3556, %v3614
      %v3653 = vadd.f32 %v3557, %v3614
      %v3654 = vadd.f32 %v3558, %v3618
      %v3655 = vadd.f32 %v3559, %v3618
      %v3656 = vadd.f32 %v3560, %v3622
      %v3657 = vadd.f32 %v3561, %v3622
      %v3658 = vadd.f32 %v3562, %v3626
      %v3659 = vadd.f32 %v3563, %v3626
      %v3660 = vadd.f32 %v3628, %v3171
      %v3661 = vadd.f32 %v3629, %v3172
      %v3662 = vadd.f32 %v3630, %v3173
      %v3663 = vadd.f32 %v3631, %v3174
      %v3664 = vadd.f32 %v3632, %v3175
      %v3665 = vadd.f32 %v3633, %v3176
      %v3666 = vadd.f32 %v3634, %v3177
      %v3667 = vadd.f32 %v3635, %v3178
      %v3668 = vadd.f32 %v3636, %v3179
      %v3669 = vadd.f32 %v3637, %v3180
      %v3670 = vadd.f32 %v3638, %v3181
      %v3671 = vadd.f32 %v3639, %v3182
      %v3672 = vadd.f32 %v3640, %v3183
      %v3673 = vadd.f32 %v3641, %v3184
      %v3674 = vadd.f32 %v3642, %v3185
      %v3675 = vadd.f32 %v3643, %v3186
      %v3676 = vadd.f32 %v3644, %v3187
      %v3677 = vadd.f32 %v3645, %v3188
      %v3678 = vadd.f32 %v3646, %v3189
      %v3679 = vadd.f32 %v3647, %v3190
      %v3680 = vadd.f32 %v3648, %v3191
      %v3681 = vadd.f32 %v3649, %v3192
      %v3682 = vadd.f32 %v3650, %v3193
      %v3683 = vadd.f32 %v3651, %v3194
      %v3684 = vadd.f32 %v3652, %v3195
      %v3685 = vadd.f32 %v3653, %v3196
      %v3686 = vadd.f32 %v3654, %v3197
      %v3687 = vadd.f32 %v3655, %v3198
      %v3688 = vadd.f32 %v3656, %v3199
      %v3689 = vadd.f32 %v3657, %v3200
      %v3690 = vadd.f32 %v3658, %v3201
      %v3691 = vadd.f32 %v3659, %v3202
      %v3692 = vld [vmem:[%s5] sm:$0xff]
      %v3693 = vld [vmem:[%s5 + $0x8] sm:$0xff]
      %v3694 = vld [vmem:[%s5 + $0x10] sm:$0xff]
      %v3695 = vld [vmem:[%s5 + $0x18] sm:$0xff]
      %3696 = vset.pattern.permute.xlu0 6
      %3697 = vperm.xlu0 %3696, %v252
      %v3698 = vpop.permute.xlu0 %3697
      %3700 = vset.pattern.permute.xlu0 6
      %3701 = vperm.xlu0 %3700, %v253
      %v3702 = vpop.permute.xlu0 %3701
      %3704 = vset.pattern.permute.xlu0 6
      %3705 = vperm.xlu0 %3704, %v254
      %v3706 = vpop.permute.xlu0 %3705
      %3708 = vset.pattern.permute.xlu0 6
      %3709 = vperm.xlu0 %3708, %v255
      %v3710 = vpop.permute.xlu0 %3709
      %3712 = vmatprep.subr.mxu0 %v3661
      %3713 = vmatpush1.msra.mxu0 %v3660
      %3714 = vmatprep.subr.mxu0 %v3663
      %3715 = vmatpush1.msra.mxu0 %v3662
      %3716 = vmatprep.subr.mxu0 %v3665
      %3717 = vmatpush1.msra.mxu0 %v3664
      %3718 = vmatprep.subr.mxu0 %v3667
      %3719 = vmatpush1.msra.mxu0 %v3666
      %3720 = vmatprep.subr.mxu0 %v3669
      %3721 = vmatpush1.msra.mxu0 %v3668
      %3722 = vmatprep.subr.mxu0 %v3671
      %3723 = vmatpush1.msra.mxu0 %v3670
      %3724 = vmatprep.subr.mxu0 %v3673
      %3725 = vmatpush1.msra.mxu0 %v3672
      %3726 = vmatprep.subr.mxu0 %v3675
      %3727 = vmatpush1.msra.mxu0 %v3674
      %3728 = vmatprep.subr.mxu0 %v3677
      %3729 = vmatpush1.msra.mxu0 %v3676
      %3730 = vmatprep.subr.mxu0 %v3679
      %3731 = vmatpush1.msra.mxu0 %v3678
      %3732 = vmatprep.subr.mxu0 %v3681
      %3733 = vmatpush1.msra.mxu0 %v3680
      %3734 = vmatprep.subr.mxu0 %v3683
      %3735 = vmatpush1.msra.mxu0 %v3682
      %3736 = vmatprep.subr.mxu0 %v3685
      %3737 = vmatpush1.msra.mxu0 %v3684
      %3738 = vmatprep.subr.mxu0 %v3687
      %3739 = vmatpush1.msra.mxu0 %v3686
      %3740 = vmatprep.subr.mxu0 %v3689
      %3741 = vmatpush1.msra.mxu0 %v3688
      %3742 = vmatprep.subr.mxu0 %v3691
      %3743 = vmatpush1.msra.mxu0 %v3690
      %3744 = vmatprep.subr.mxu0 0.0
      %3745 = vmatpush1.msra.mxu0 0.0
      %3746 = vmatprep.subr.mxu0 0.0
      %3747 = vmatpush1.msra.mxu0 0.0
      %3748 = vmatprep.subr.mxu0 0.0
      %3749 = vmatpush1.msra.mxu0 0.0
      %3750 = vmatprep.subr.mxu0 0.0
      %3751 = vmatpush1.msra.mxu0 0.0
      %3752 = vmatprep.subr.mxu0 0.0
      %3753 = vmatpush1.msra.mxu0 0.0
      %3754 = vmatprep.subr.mxu0 0.0
      %3755 = vmatpush1.msra.mxu0 0.0
      %3756 = vmatprep.subr.mxu0 0.0
      %3757 = vmatpush1.msra.mxu0 0.0
      %3758 = vmatprep.subr.mxu0 0.0
      %3759 = vmatpush1.msra.mxu0 0.0
      %3760 = vmatprep.subr.mxu0 0.0
      %3761 = vmatpush1.msra.mxu0 0.0
      %3762 = vmatprep.subr.mxu0 0.0
      %3763 = vmatpush1.msra.mxu0 0.0
      %3764 = vmatprep.subr.mxu0 0.0
      %3765 = vmatpush1.msra.mxu0 0.0
      %3766 = vmatprep.subr.mxu0 0.0
      %3767 = vmatpush1.msra.mxu0 0.0
      %3768 = vmatprep.subr.mxu0 0.0
      %3769 = vmatpush1.msra.mxu0 0.0
      %3770 = vmatprep.subr.mxu0 0.0
      %3771 = vmatpush1.msra.mxu0 0.0
      %3772 = vmatprep.subr.mxu0 0.0
      %3773 = vmatpush1.msra.mxu0 0.0
      %3774 = vmatprep.subr.mxu0 0.0
      %3775 = vmatpush1.msra.mxu0 0.0
      %3776 = vmatprep.mubr.f32.mxu0 0.0
      %3777 = vmatmul.mubr.f32.gmra.mrb[0].mxu0 %v3692
      %v3778 = vpop.f32.mrb[0].mxu0
      %v3779 = vadd.f32 %v3698, %v3778
      %v3780 = vpop.f32.mrb[0].mxu0
      %v3781 = vadd.f32 %v3698, %v3780
      %3782 = vmatprep.mubr.f32.mxu0 0.0
      %3783 = vmatmul.mubr.f32.gmra.mrb[0].mxu0 %v3693
      %v3784 = vpop.f32.mrb[0].mxu0
      %v3785 = vadd.f32 %v3702, %v3784
      %v3786 = vpop.f32.mrb[0].mxu0
      %v3787 = vadd.f32 %v3702, %v3786
      %3788 = vmatprep.mubr.f32.mxu0 0.0
      %3789 = vmatmul.mubr.f32.gmra.mrb[0].mxu0 %v3694
      %v3790 = vpop.f32.mrb[0].mxu0
      %v3791 = vadd.f32 %v3706, %v3790
      %v3792 = vpop.f32.mrb[0].mxu0
      %v3793 = vadd.f32 %v3706, %v3792
      %3794 = vmatprep.mubr.f32.mxu0 0.0
      %3795 = vmatmul.mubr.f32.gmra.mrb[0].mxu0 %v3695
      %v3796 = vpop.f32.mrb[0].mxu0
      %v3797 = vadd.f32 %v3710, %v3796
      %v3798 = vpop.f32.mrb[0].mxu0
      %v3799 = vadd.f32 %v3710, %v3798
      %3800 = vdwg.mxu0
      %v3801 = vld [vmem:[%s246] sm:$0xff]
      %v3802 = vld [vmem:[%s246 + $0x8] sm:$0xff]
      %v3803 = vld [vmem:[%s246 + $0x10] sm:$0xff]
      %v3804 = vld [vmem:[%s246 + $0x18] sm:$0xff]
      %v3805 = vld [vmem:[%s246 + $0x20] sm:$0xff]
      %v3806 = vld [vmem:[%s246 + $0x28] sm:$0xff]
      %v3807 = vld [vmem:[%s246 + $0x30] sm:$0xff]
      %v3808 = vld [vmem:[%s246 + $0x38] sm:$0xff]
      %v3809 = vadd.f32 %v3801, %v3779
      %v3810 = vadd.f32 %v3802, %v3781
      %v3811 = vadd.f32 %v3803, %v3785
      %v3812 = vadd.f32 %v3804, %v3787
      %v3813 = vadd.f32 %v3805, %v3791
      %v3814 = vadd.f32 %v3806, %v3793
      %v3815 = vadd.f32 %v3807, %v3797
      %v3816 = vadd.f32 %v3808, %v3799
      %3817 = vst [vmem:[%s251] sm:$0xff] %v3809
      %3818 = vst [vmem:[%s251 + $0x8] sm:$0xff] %v3810
      %3819 = vst [vmem:[%s251 + $0x10] sm:$0xff] %v3811
      %3820 = vst [vmem:[%s251 + $0x18] sm:$0xff] %v3812
      %3821 = vst [vmem:[%s251 + $0x20] sm:$0xff] %v3813
      %3822 = vst [vmem:[%s251 + $0x28] sm:$0xff] %v3814
      %3823 = vst [vmem:[%s251 + $0x30] sm:$0xff] %v3815
      %3824 = vst [vmem:[%s251 + $0x38] sm:$0xff] %v3816
      %p3825 = scmp.lt.s32.totalorder %s17, 1
      %s3826 = scalar_select %p3825, %s17, 1
      %s3827 = smul.addr %s3826, 8
      %s3828 = smul.addr %s3827, 8
      %s3829 = scalar_lea.vmem %s6, %s3828
      // Predicated region
      $region45: #{block_forward.1} parent=43 // pred_check
        %p3830 = pneg %p166
      $region46: #{block_forward.1} parent=43 // pred_check_branch
        %3832 = sbr.rel (%p3830) target = $region48
      $region47: #{block_forward.1} parent=43 // pred_region
        _
      $region48: #{block_forward.1} parent=43 // pred_fallthru
        _
    $region44: #{block_forward.1} parent=5 // pred_fallthru
      _
    %p3833 = scmp.le.s32.totalorder 2, %s12
    // Predicated region
    $region49: #{block_forward.1} parent=5 // pred_check
      %p3834 = pneg %p3833
    $region50: #{block_forward.1} parent=5 // pred_check_branch
      %3836 = sbr.rel (%p3834) target = $region52
    $region51: #{block_forward.1} parent=5 // pred_region
      %s3837 = ssub.s32 %s12, 2
      // Predicated region
      $region53: #{block_forward.1} parent=51 // pred_check
        %p3838 = pneg %p172
      $region54: #{block_forward.1} parent=51 // pred_check_branch
        %3840 = sbr.rel (%p3838) target = $region56
      $region55: #{block_forward.1} parent=51 // pred_region
        %p3841 = scmp.lt.s32.totalorder %s18, 1
        %s3842 = scalar_select %p3841, %s18, 1
        %s3843 = smul.addr %s3842, 8
        %s3844 = smul.addr %s3843, 8
        %s3845 = scalar_lea.vmem %s6, %s3844
      $region56: #{block_forward.1} parent=51 // pred_fallthru
        _
    $region52: #{block_forward.1} parent=5 // pred_fallthru
      _
  $region6: #{block_forward.1} parent=0 // loop_footer
    %s16 = sadd.s32 1, %s12
  $region7: #{block_forward.1} parent=0 // loop_footer_branch
    %11 = sbr.rel target = $region3
  $region8: #{block_forward.1} parent=0 // loop_exit
    _

</llo_original>
